<compile_context>
chip_gen: v5e
topology: v5e:2x2
jax: 0.10.0
libtpu: 0.0.40
codegen_flags: <defaults>
</compile_context>

<pallas_src>
import functools

import jax
import jax.numpy as jnp
from jax.experimental import pallas as pl
from jax.experimental.pallas import tpu as pltpu

_LANES = 128


def _gelu_tanh(x):
    # TODO(synk): PyTorch nn.GELU() default is the exact erf form; the tanh
    # approximation is used here for a Mosaic-safe (EUP tanh) lowering.
    c = jnp.float32(0.7978845608028654)  # sqrt(2/pi)
    return 0.5 * x * (1.0 + jnp.tanh(c * (x + 0.044715 * x * x * x)))


def _strip_rows(w, tc):
    """Rows per strip so the f32 strip accumulator stays within ~32 vregs."""
    row_vregs = max(1, (-(-w // 8)) * max(tc // _LANES, 1))
    return max(1, min(8, 32 // row_vregs))


def _residual_kernel(x_ref, w_ref, b_ref, scale_ref, shift_ref, o_ref, *,
                     compute_dtype):
    # x_ref:     (1, H, W, TC)  one batch element x one channel tile (NHWC)
    # w_ref:     (K, K, TC)     depthwise conv weights
    # b_ref:     (1, TC)        conv bias
    # scale_ref: (1, TC)        folded BN scale = gamma * rsqrt(var + eps)
    # shift_ref: (1, TC)        folded BN shift = beta - mean * scale
    # o_ref:     (1, H, W, TC)
    _, H, W, TC = x_ref.shape
    K = w_ref.shape[0]
    pad = K // 2
    SH = _strip_rows(W, TC)

    f32 = jnp.float32
    wts = w_ref[...].astype(compute_dtype)        # (K, K, TC)
    bias = b_ref[0, :].astype(f32)                # (TC,)
    scale = scale_ref[0, :].astype(f32)
    shift = shift_ref[0, :].astype(f32)

    # Per-tap weights with the W-boundary ("same" padding) mask folded in.  Built once
    # per kernel invocation and hoisted out of all strip/row loops; wrapped columns of
    # the rolled activation are zeroed by the zero weight, so the rolled row itself is
    # never select-masked (saves K-1 full-size VALU selects per row).
    col = jax.lax.broadcasted_iota(jnp.int32, (W, TC), 0)
    zero = jnp.zeros((), compute_dtype)
    wmask = []
    for i in range(K):
        for j in range(K):
            dj = j - pad
            wrow = wts[i, j, :]                                  # (TC,)
            if dj != 0:
                valid = jnp.logical_and(col + dj >= 0, col + dj < W)
                wrow = jnp.where(valid, jnp.broadcast_to(wrow, (W, TC)), zero)
            wmask.append(wrow)

    # Strip-mined MAC: partial sums for one strip of output rows stay in vregs; each
    # output row is written exactly once.
    for h0 in range(0, H, SH):
        sh = min(SH, H - h0)
        acc = [None] * sh
        for r in range(sh + 2 * pad):
            src = h0 + r - pad                    # absolute input row for this slab row
            if src < 0 or src >= H:
                continue                          # zero "same" padding along H: skip
            row = x_ref[0, src].astype(compute_dtype)            # (W, TC)
            for j in range(K):
                dj = j - pad
                if dj == 0:
                    rr = row
                else:
                    # rr[w, :] = row[(w + dj) % W, :]  (XLU sublane rotate)
                    rr = pltpu.roll(row, shift=(-dj) % W, axis=0)
                for i in range(K):
                    s = r - i                     # output row (within strip) fed by tap
                    if 0 <= s < sh:
                        contrib = (rr * wmask[i * K + j]).astype(f32)
                        acc[s] = contrib if acc[s] is None else acc[s] + contrib

        # Epilogue: conv bias -> GELU -> folded BN -> residual add -> single store.
        for s in range(sh):
            a = acc[s] if acc[s] is not None else jnp.zeros((W, TC), f32)
            y = _gelu_tanh(a + bias)
            y = y * scale + shift
            y = y + x_ref[0, h0 + s].astype(f32)   # re-read x at point of use
            o_ref[0, h0 + s] = y.astype(o_ref.dtype)


def _vmem_limit_bytes():
    """Generation-aware scoped-VMEM limit (leave headroom on v7x's 64 MiB)."""
    cap = 64 * 1024 * 1024
    try:
        cap = int(pltpu.get_tpu_info().vmem_capacity_bytes)
    except Exception:
        pass
    return int(min(cap // 2, 64 * 1024 * 1024))


def _choose_channel_tile(cp, w, n):
    """Largest multiple-of-128 channel tile whose accumulator row fits in <=4 vregs,
    preferring tiles that leave >= 4 grid steps (feeds both v7x TensorCores and the
    BlockSpec pipeline; per-step overhead is only ~0.35 us, so extra steps are cheap)."""
    cands = [c for c in (512, 384, 256, 128) if c <= cp and cp % c == 0]
    if not cands:
        return cp
    ok = [c for c in cands if (-(-w // 8)) * (c // _LANES) <= 4]
    if not ok:
        return _LANES
    for c in ok:                       # descending: first hit is the largest
        if n * (cp // c) >= 4:
            return c
    return ok[-1]                      # no tile gives >=4 steps: maximize steps


def residual_forward_nhwc(x, params, channel_tile=None, compute_dtype=None):
    """Fused Residual(depthwise conv -> GELU -> BN)(x) for NHWC activations."""
    w, b, gamma, beta, mean, var = params
    N, H, W, C = x.shape
    K = w.shape[0]
    assert K % 2 == 1, "ConvMixer depthwise conv uses odd kernel sizes"

    # Fold BatchNorm (inference, running stats) into a per-channel affine.
    scale = gamma.astype(jnp.float32) * jax.lax.rsqrt(var.astype(jnp.float32) + 1e-5)
    shift = beta.astype(jnp.float32) - mean.astype(jnp.float32) * scale
    bias = b.astype(jnp.float32)

    # Pad channels up to a multiple of 128 lanes so stores are lane-dense (unmasked vst).
    c_pad = (-C) % _LANES
    cp = C + c_pad
    if c_pad:
        x = jnp.pad(x, ((0, 0), (0, 0), (0, 0), (0, c_pad)))
        w = jnp.pad(w, ((0, 0), (0, 0), (0, c_pad)))
        bias = jnp.pad(bias, (0, c_pad))
        scale = jnp.pad(scale, (0, c_pad))
        shift = jnp.pad(shift, (0, c_pad))

    tc = channel_tile if channel_tile is not None else _choose_channel_tile(cp, W, N)
    assert cp % tc == 0 and (tc % _LANES == 0 or tc == cp)

    if compute_dtype is None:
        # bf16 activations -> bf16 tap multiplies (2x VALU throughput on v6e/v7x);
        # accumulation, GELU, BN and the residual add stay f32 either way.
        # TODO(synk): pass compute_dtype=jnp.float32 on v5e (no bf16 VPU there).
        compute_dtype = jnp.bfloat16 if x.dtype == jnp.bfloat16 else jnp.float32

    per_c = lambda p: p.reshape(1, cp)
    kernel = functools.partial(_residual_kernel, compute_dtype=compute_dtype)

    out = pl.pallas_call(
        kernel,
        out_shape=jax.ShapeDtypeStruct((N, H, W, cp), x.dtype),
        grid_spec=pltpu.PrefetchScalarGridSpec(
            num_scalar_prefetch=0,
            grid=(N, cp // tc),
            in_specs=[
                pl.BlockSpec((1, H, W, tc), lambda n, c: (n, 0, 0, c)),
                pl.BlockSpec((K, K, tc), lambda n, c: (0, 0, c)),
                pl.BlockSpec((1, tc), lambda n, c: (0, c)),
                pl.BlockSpec((1, tc), lambda n, c: (0, c)),
                pl.BlockSpec((1, tc), lambda n, c: (0, c)),
            ],
            out_specs=pl.BlockSpec((1, H, W, tc), lambda n, c: (n, 0, 0, c)),
        ),
        compiler_params=pltpu.CompilerParams(
            dimension_semantics=("parallel", "parallel"),
            vmem_limit_bytes=_vmem_limit_bytes()),
    )(x, w, per_c(bias), per_c(scale), per_c(shift))

    if c_pad:
        out = out[..., :C]
    return out


def residual_forward(x_nchw, params, channel_tile=None, compute_dtype=None):
    """PyTorch-layout (NCHW) wrapper around the NHWC kernel.

    TODO(synk): in an NHWC end-to-end model call residual_forward_nhwc directly; these
    two transposes are separate full-tensor HBM passes around a VALU-bound kernel.
    """
    x = jnp.transpose(x_nchw, (0, 2, 3, 1))
    out = residual_forward_nhwc(x, params, channel_tile=channel_tile,
                                compute_dtype=compute_dtype)
    return jnp.transpose(out, (0, 3, 1, 2))


def residual_ref(x_nchw, params):
    """Pure-JAX reference (independent conv implementation) for validation."""
    w, b, gamma, beta, mean, var = params
    C = x_nchw.shape[1]
    x = jnp.transpose(x_nchw, (0, 2, 3, 1))
    rhs = w.reshape(w.shape[0], w.shape[1], 1, C)  # HWIO, depthwise
    y = jax.lax.conv_general_dilated(
        x, rhs, window_strides=(1, 1), padding="SAME",
        dimension_numbers=("NHWC", "HWIO", "NHWC"), feature_group_count=C)
    y = y + b
    y = _gelu_tanh(y)
    y = (y - mean) * jax.lax.rsqrt(var + 1e-5) * gamma + beta
    y = y + x
    return jnp.transpose(y, (0, 3, 1, 2))


def _make_case(key, N, C, H, W, K):
    ks = jax.random.split(key, 7)
    x = jax.random.normal(ks[0], (N, C, H, W), jnp.float32)
    w = 0.1 * jax.random.normal(ks[1], (K, K, C), jnp.float32)         # depthwise weights
    b = 0.1 * jax.random.normal(ks[2], (C,), jnp.float32)              # conv bias
    gamma = 1.0 + 0.1 * jax.random.normal(ks[3], (C,), jnp.float32)    # BN weight
    beta = 0.1 * jax.random.normal(ks[4], (C,), jnp.float32)           # BN bias
    mean = 0.1 * jax.random.normal(ks[5], (C,), jnp.float32)           # BN running mean
    var = jnp.abs(jax.random.normal(ks[6], (C,), jnp.float32)) + 0.5   # BN running var
    return x, (w, b, gamma, beta, mean, var)


if __name__ == "__main__":
    key = jax.random.PRNGKey(0)
    k1, k2 = jax.random.split(key)

    # Case 1: small channel count (C % 128 != 0) -> exercises the lane-padding path.
    x1, p1 = _make_case(k1, 2, 32, 16, 16, 3)
    out1 = jax.block_until_ready(residual_forward(x1, p1))
    ref1 = jax.block_until_ready(residual_ref(x1, p1))
    assert out1.shape == x1.shape and out1.dtype == x1.dtype
    assert jnp.allclose(out1, ref1, rtol=1e-4, atol=2e-4), "case 1 mismatch vs reference"

    # Case 2: lane-dense channels with an explicit 2-tile channel grid.
    x2, p2 = _make_case(k2, 2, 256, 8, 8, 3)
    out2 = jax.block_until_ready(residual_forward(x2, p2, channel_tile=128))
    ref2 = jax.block_until_ready(residual_ref(x2, p2))
    assert out2.shape == x2.shape and out2.dtype == x2.dtype
    assert jnp.allclose(out2, ref2, rtol=1e-4, atol=2e-4), "case 2 mismatch vs reference"

    print("KERNEL_OK")
</pallas_src>

<mosaic_0001>
module attributes {stable_mosaic.version = 11 : i64} {
  func.func @_residual_kernel(%arg0: i32, %arg1: i32, %arg2: memref<1x16x16x128xf32, #tpu.memory_space<vmem>>, %arg3: memref<3x3x128xf32, #tpu.memory_space<vmem>>, %arg4: memref<1x128xf32, #tpu.memory_space<vmem>>, %arg5: memref<1x128xf32, #tpu.memory_space<vmem>>, %arg6: memref<1x128xf32, #tpu.memory_space<vmem>>, %arg7: memref<1x16x16x128xf32, #tpu.memory_space<vmem>>) attributes {dimension_semantics = [#tpu.dimension_semantics<parallel>, #tpu.dimension_semantics<parallel>], iteration_bounds = array<i64: 2, 1>, scalar_prefetch = 0 : i64, scratch_operands = 0 : i64, tpu.core_type = #tpu.core_type<tc>, window_params = [{transform_indices = @transform_0, window_bounds = array<i64: 1, 16, 16, 128>}, {transform_indices = @transform_1, window_bounds = array<i64: 3, 3, 128>}, {transform_indices = @transform_2, window_bounds = array<i64: 1, 128>}, {transform_indices = @transform_3, window_bounds = array<i64: 1, 128>}, {transform_indices = @transform_4, window_bounds = array<i64: 1, 128>}, {transform_indices = @transform_5, window_bounds = array<i64: 1, 16, 16, 128>}]} {
    %c0 = arith.constant 0 : index
    %c0_0 = arith.constant 0 : index
    %c0_1 = arith.constant 0 : index
    %0 = vector.load %arg3[%c0, %c0_0, %c0_1] : memref<3x3x128xf32, #tpu.memory_space<vmem>>, vector<3x3x128xf32>
    %c0_2 = arith.constant 0 : index
    %c0_3 = arith.constant 0 : index
    %1 = vector.load %arg4[%c0_2, %c0_3] : memref<1x128xf32, #tpu.memory_space<vmem>>, vector<1x128xf32>
    %2 = vector.shape_cast %1 : vector<1x128xf32> to vector<128xf32>
    %c0_4 = arith.constant 0 : index
    %c0_5 = arith.constant 0 : index
    %3 = vector.load %arg5[%c0_4, %c0_5] : memref<1x128xf32, #tpu.memory_space<vmem>>, vector<1x128xf32>
    %4 = vector.shape_cast %3 : vector<1x128xf32> to vector<128xf32>
    %c0_6 = arith.constant 0 : index
    %c0_7 = arith.constant 0 : index
    %5 = vector.load %arg6[%c0_6, %c0_7] : memref<1x128xf32, #tpu.memory_space<vmem>>, vector<1x128xf32>
    %6 = vector.shape_cast %5 : vector<1x128xf32> to vector<128xf32>
    %7 = tpu.iota {dimensions = array<i32: 0>} : vector<16x128xi32>
    %8 = vector.extract_strided_slice %0 {offsets = [0, 0, 0], sizes = [1, 1, 128], strides = [1, 1, 1]} : vector<3x3x128xf32> to vector<1x1x128xf32>
    %9 = vector.shape_cast %8 : vector<1x1x128xf32> to vector<128xf32>
    %c-1_i32 = arith.constant -1 : i32
    %10 = vector.broadcast %c-1_i32 : i32 to vector<16x128xi32>
    %11 = arith.addi %7, %10 : vector<16x128xi32>
    %c0_i32 = arith.constant 0 : i32
    %12 = vector.broadcast %c0_i32 : i32 to vector<16x128xi32>
    %13 = arith.cmpi sge, %11, %12 : vector<16x128xi32>
    %c-1_i32_8 = arith.constant -1 : i32
    %14 = vector.broadcast %c-1_i32_8 : i32 to vector<16x128xi32>
    %15 = arith.addi %7, %14 : vector<16x128xi32>
    %c16_i32 = arith.constant 16 : i32
    %16 = vector.broadcast %c16_i32 : i32 to vector<16x128xi32>
    %17 = arith.cmpi slt, %15, %16 : vector<16x128xi32>
    %18 = arith.andi %13, %17 : vector<16x128xi1>
    %19 = vector.shape_cast %9 : vector<128xf32> to vector<1x128xf32>
    %20 = vector.broadcast %19 : vector<1x128xf32> to vector<16x128xf32>
    %cst = arith.constant 0.000000e+00 : f32
    %21 = vector.broadcast %cst : f32 to vector<16x128xf32>
    %22 = arith.select %18, %20, %21 : vector<16x128xi1>, vector<16x128xf32>
    %23 = vector.extract_strided_slice %0 {offsets = [0, 1, 0], sizes = [1, 1, 128], strides = [1, 1, 1]} : vector<3x3x128xf32> to vector<1x1x128xf32>
    %24 = vector.shape_cast %23 : vector<1x1x128xf32> to vector<128xf32>
    %25 = vector.extract_strided_slice %0 {offsets = [0, 2, 0], sizes = [1, 1, 128], strides = [1, 1, 1]} : vector<3x3x128xf32> to vector<1x1x128xf32>
    %26 = vector.shape_cast %25 : vector<1x1x128xf32> to vector<128xf32>
    %c1_i32 = arith.constant 1 : i32
    %27 = vector.broadcast %c1_i32 : i32 to vector<16x128xi32>
    %28 = arith.addi %7, %27 : vector<16x128xi32>
    %c0_i32_9 = arith.constant 0 : i32
    %29 = vector.broadcast %c0_i32_9 : i32 to vector<16x128xi32>
    %30 = arith.cmpi sge, %28, %29 : vector<16x128xi32>
    %c1_i32_10 = arith.constant 1 : i32
    %31 = vector.broadcast %c1_i32_10 : i32 to vector<16x128xi32>
    %32 = arith.addi %7, %31 : vector<16x128xi32>
    %c16_i32_11 = arith.constant 16 : i32
    %33 = vector.broadcast %c16_i32_11 : i32 to vector<16x128xi32>
    %34 = arith.cmpi slt, %32, %33 : vector<16x128xi32>
    %35 = arith.andi %30, %34 : vector<16x128xi1>
    %36 = vector.shape_cast %26 : vector<128xf32> to vector<1x128xf32>
    %37 = vector.broadcast %36 : vector<1x128xf32> to vector<16x128xf32>
    %cst_12 = arith.constant 0.000000e+00 : f32
    %38 = vector.broadcast %cst_12 : f32 to vector<16x128xf32>
    %39 = arith.select %35, %37, %38 : vector<16x128xi1>, vector<16x128xf32>
    %40 = vector.extract_strided_slice %0 {offsets = [1, 0, 0], sizes = [1, 1, 128], strides = [1, 1, 1]} : vector<3x3x128xf32> to vector<1x1x128xf32>
    %41 = vector.shape_cast %40 : vector<1x1x128xf32> to vector<128xf32>
    %c-1_i32_13 = arith.constant -1 : i32
    %42 = vector.broadcast %c-1_i32_13 : i32 to vector<16x128xi32>
    %43 = arith.addi %7, %42 : vector<16x128xi32>
    %c0_i32_14 = arith.constant 0 : i32
    %44 = vector.broadcast %c0_i32_14 : i32 to vector<16x128xi32>
    %45 = arith.cmpi sge, %43, %44 : vector<16x128xi32>
    %c-1_i32_15 = arith.constant -1 : i32
    %46 = vector.broadcast %c-1_i32_15 : i32 to vector<16x128xi32>
    %47 = arith.addi %7, %46 : vector<16x128xi32>
    %c16_i32_16 = arith.constant 16 : i32
    %48 = vector.broadcast %c16_i32_16 : i32 to vector<16x128xi32>
    %49 = arith.cmpi slt, %47, %48 : vector<16x128xi32>
    %50 = arith.andi %45, %49 : vector<16x128xi1>
    %51 = vector.shape_cast %41 : vector<128xf32> to vector<1x128xf32>
    %52 = vector.broadcast %51 : vector<1x128xf32> to vector<16x128xf32>
    %cst_17 = arith.constant 0.000000e+00 : f32
    %53 = vector.broadcast %cst_17 : f32 to vector<16x128xf32>
    %54 = arith.select %50, %52, %53 : vector<16x128xi1>, vector<16x128xf32>
    %55 = vector.extract_strided_slice %0 {offsets = [1, 1, 0], sizes = [1, 1, 128], strides = [1, 1, 1]} : vector<3x3x128xf32> to vector<1x1x128xf32>
    %56 = vector.shape_cast %55 : vector<1x1x128xf32> to vector<128xf32>
    %57 = vector.extract_strided_slice %0 {offsets = [1, 2, 0], sizes = [1, 1, 128], strides = [1, 1, 1]} : vector<3x3x128xf32> to vector<1x1x128xf32>
    %58 = vector.shape_cast %57 : vector<1x1x128xf32> to vector<128xf32>
    %c1_i32_18 = arith.constant 1 : i32
    %59 = vector.broadcast %c1_i32_18 : i32 to vector<16x128xi32>
    %60 = arith.addi %7, %59 : vector<16x128xi32>
    %c0_i32_19 = arith.constant 0 : i32
    %61 = vector.broadcast %c0_i32_19 : i32 to vector<16x128xi32>
    %62 = arith.cmpi sge, %60, %61 : vector<16x128xi32>
    %c1_i32_20 = arith.constant 1 : i32
    %63 = vector.broadcast %c1_i32_20 : i32 to vector<16x128xi32>
    %64 = arith.addi %7, %63 : vector<16x128xi32>
    %c16_i32_21 = arith.constant 16 : i32
    %65 = vector.broadcast %c16_i32_21 : i32 to vector<16x128xi32>
    %66 = arith.cmpi slt, %64, %65 : vector<16x128xi32>
    %67 = arith.andi %62, %66 : vector<16x128xi1>
    %68 = vector.shape_cast %58 : vector<128xf32> to vector<1x128xf32>
    %69 = vector.broadcast %68 : vector<1x128xf32> to vector<16x128xf32>
    %cst_22 = arith.constant 0.000000e+00 : f32
    %70 = vector.broadcast %cst_22 : f32 to vector<16x128xf32>
    %71 = arith.select %67, %69, %70 : vector<16x128xi1>, vector<16x128xf32>
    %72 = vector.extract_strided_slice %0 {offsets = [2, 0, 0], sizes = [1, 1, 128], strides = [1, 1, 1]} : vector<3x3x128xf32> to vector<1x1x128xf32>
    %73 = vector.shape_cast %72 : vector<1x1x128xf32> to vector<128xf32>
    %c-1_i32_23 = arith.constant -1 : i32
    %74 = vector.broadcast %c-1_i32_23 : i32 to vector<16x128xi32>
    %75 = arith.addi %7, %74 : vector<16x128xi32>
    %c0_i32_24 = arith.constant 0 : i32
    %76 = vector.broadcast %c0_i32_24 : i32 to vector<16x128xi32>
    %77 = arith.cmpi sge, %75, %76 : vector<16x128xi32>
    %c-1_i32_25 = arith.constant -1 : i32
    %78 = vector.broadcast %c-1_i32_25 : i32 to vector<16x128xi32>
    %79 = arith.addi %7, %78 : vector<16x128xi32>
    %c16_i32_26 = arith.constant 16 : i32
    %80 = vector.broadcast %c16_i32_26 : i32 to vector<16x128xi32>
    %81 = arith.cmpi slt, %79, %80 : vector<16x128xi32>
    %82 = arith.andi %77, %81 : vector<16x128xi1>
    %83 = vector.shape_cast %73 : vector<128xf32> to vector<1x128xf32>
    %84 = vector.broadcast %83 : vector<1x128xf32> to vector<16x128xf32>
    %cst_27 = arith.constant 0.000000e+00 : f32
    %85 = vector.broadcast %cst_27 : f32 to vector<16x128xf32>
    %86 = arith.select %82, %84, %85 : vector<16x128xi1>, vector<16x128xf32>
    %87 = vector.extract_strided_slice %0 {offsets = [2, 1, 0], sizes = [1, 1, 128], strides = [1, 1, 1]} : vector<3x3x128xf32> to vector<1x1x128xf32>
    %88 = vector.shape_cast %87 : vector<1x1x128xf32> to vector<128xf32>
    %89 = vector.extract_strided_slice %0 {offsets = [2, 2, 0], sizes = [1, 1, 128], strides = [1, 1, 1]} : vector<3x3x128xf32> to vector<1x1x128xf32>
    %90 = vector.shape_cast %89 : vector<1x1x128xf32> to vector<128xf32>
    %c1_i32_28 = arith.constant 1 : i32
    %91 = vector.broadcast %c1_i32_28 : i32 to vector<16x128xi32>
    %92 = arith.addi %7, %91 : vector<16x128xi32>
    %c0_i32_29 = arith.constant 0 : i32
    %93 = vector.broadcast %c0_i32_29 : i32 to vector<16x128xi32>
    %94 = arith.cmpi sge, %92, %93 : vector<16x128xi32>
    %c1_i32_30 = arith.constant 1 : i32
    %95 = vector.broadcast %c1_i32_30 : i32 to vector<16x128xi32>
    %96 = arith.addi %7, %95 : vector<16x128xi32>
    %c16_i32_31 = arith.constant 16 : i32
    %97 = vector.broadcast %c16_i32_31 : i32 to vector<16x128xi32>
    %98 = arith.cmpi slt, %96, %97 : vector<16x128xi32>
    %99 = arith.andi %94, %98 : vector<16x128xi1>
    %100 = vector.shape_cast %90 : vector<128xf32> to vector<1x128xf32>
    %101 = vector.broadcast %100 : vector<1x128xf32> to vector<16x128xf32>
    %cst_32 = arith.constant 0.000000e+00 : f32
    %102 = vector.broadcast %cst_32 : f32 to vector<16x128xf32>
    %103 = arith.select %99, %101, %102 : vector<16x128xi1>, vector<16x128xf32>
    %c0_33 = arith.constant 0 : index
    %c0_34 = arith.constant 0 : index
    %c0_35 = arith.constant 0 : index
    %c0_36 = arith.constant 0 : index
    %104 = vector.load %arg2[%c0_33, %c0_34, %c0_35, %c0_36] : memref<1x16x16x128xf32, #tpu.memory_space<vmem>>, vector<1x1x16x128xf32>
    %105 = vector.shape_cast %104 : vector<1x1x16x128xf32> to vector<16x128xf32>
    %c1_i32_37 = arith.constant 1 : i32
    %106 = tpu.dynamic_rotate %105 by %c1_i32_37 dim 0 : vector<16x128xf32>, i32 -> vector<16x128xf32>
    %107 = arith.mulf %106, %22 : vector<16x128xf32>
    %108 = arith.mulf %106, %54 : vector<16x128xf32>
    %109 = vector.shape_cast %24 : vector<128xf32> to vector<1x128xf32>
    %110 = vector.broadcast %109 : vector<1x128xf32> to vector<16x128xf32>
    %111 = arith.mulf %105, %110 : vector<16x128xf32>
    %112 = arith.addf %107, %111 : vector<16x128xf32>
    %113 = vector.shape_cast %56 : vector<128xf32> to vector<1x128xf32>
    %114 = vector.broadcast %113 : vector<1x128xf32> to vector<16x128xf32>
    %115 = arith.mulf %105, %114 : vector<16x128xf32>
    %116 = arith.addf %108, %115 : vector<16x128xf32>
    %c15_i32 = arith.constant 15 : i32
    %117 = tpu.dynamic_rotate %105 by %c15_i32 dim 0 : vector<16x128xf32>, i32 -> vector<16x128xf32>
    %118 = arith.mulf %117, %39 : vector<16x128xf32>
    %119 = arith.addf %112, %118 : vector<16x128xf32>
    %120 = arith.mulf %117, %71 : vector<16x128xf32>
    %121 = arith.addf %116, %120 : vector<16x128xf32>
    %c0_38 = arith.constant 0 : index
    %c1 = arith.constant 1 : index
    %c0_39 = arith.constant 0 : index
    %c0_40 = arith.constant 0 : index
    %122 = vector.load %arg2[%c0_38, %c1, %c0_39, %c0_40] : memref<1x16x16x128xf32, #tpu.memory_space<vmem>>, vector<1x1x16x128xf32>
    %123 = vector.shape_cast %122 : vector<1x1x16x128xf32> to vector<16x128xf32>
    %c1_i32_41 = arith.constant 1 : i32
    %124 = tpu.dynamic_rotate %123 by %c1_i32_41 dim 0 : vector<16x128xf32>, i32 -> vector<16x128xf32>
    %125 = arith.mulf %124, %22 : vector<16x128xf32>
    %126 = arith.mulf %124, %54 : vector<16x128xf32>
    %127 = arith.addf %119, %126 : vector<16x128xf32>
    %128 = arith.mulf %124, %86 : vector<16x128xf32>
    %129 = arith.addf %121, %128 : vector<16x128xf32>
    %130 = vector.shape_cast %24 : vector<128xf32> to vector<1x128xf32>
    %131 = vector.broadcast %130 : vector<1x128xf32> to vector<16x128xf32>
    %132 = arith.mulf %123, %131 : vector<16x128xf32>
    %133 = arith.addf %125, %132 : vector<16x128xf32>
    %134 = vector.shape_cast %56 : vector<128xf32> to vector<1x128xf32>
    %135 = vector.broadcast %134 : vector<1x128xf32> to vector<16x128xf32>
    %136 = arith.mulf %123, %135 : vector<16x128xf32>
    %137 = arith.addf %127, %136 : vector<16x128xf32>
    %138 = vector.shape_cast %88 : vector<128xf32> to vector<1x128xf32>
    %139 = vector.broadcast %138 : vector<1x128xf32> to vector<16x128xf32>
    %140 = arith.mulf %123, %139 : vector<16x128xf32>
    %141 = arith.addf %129, %140 : vector<16x128xf32>
    %c15_i32_42 = arith.constant 15 : i32
    %142 = tpu.dynamic_rotate %123 by %c15_i32_42 dim 0 : vector<16x128xf32>, i32 -> vector<16x128xf32>
    %143 = arith.mulf %142, %39 : vector<16x128xf32>
    %144 = arith.addf %133, %143 : vector<16x128xf32>
    %145 = arith.mulf %142, %71 : vector<16x128xf32>
    %146 = arith.addf %137, %145 : vector<16x128xf32>
    %147 = arith.mulf %142, %103 : vector<16x128xf32>
    %148 = arith.addf %141, %147 : vector<16x128xf32>
    %c0_43 = arith.constant 0 : index
    %c2 = arith.constant 2 : index
    %c0_44 = arith.constant 0 : index
    %c0_45 = arith.constant 0 : index
    %149 = vector.load %arg2[%c0_43, %c2, %c0_44, %c0_45] : memref<1x16x16x128xf32, #tpu.memory_space<vmem>>, vector<1x1x16x128xf32>
    %150 = vector.shape_cast %149 : vector<1x1x16x128xf32> to vector<16x128xf32>
    %c1_i32_46 = arith.constant 1 : i32
    %151 = tpu.dynamic_rotate %150 by %c1_i32_46 dim 0 : vector<16x128xf32>, i32 -> vector<16x128xf32>
    %152 = arith.mulf %151, %22 : vector<16x128xf32>
    %153 = arith.mulf %151, %54 : vector<16x128xf32>
    %154 = arith.addf %144, %153 : vector<16x128xf32>
    %155 = arith.mulf %151, %86 : vector<16x128xf32>
    %156 = arith.addf %146, %155 : vector<16x128xf32>
    %157 = vector.shape_cast %24 : vector<128xf32> to vector<1x128xf32>
    %158 = vector.broadcast %157 : vector<1x128xf32> to vector<16x128xf32>
    %159 = arith.mulf %150, %158 : vector<16x128xf32>
    %160 = arith.addf %152, %159 : vector<16x128xf32>
    %161 = vector.shape_cast %56 : vector<128xf32> to vector<1x128xf32>
    %162 = vector.broadcast %161 : vector<1x128xf32> to vector<16x128xf32>
    %163 = arith.mulf %150, %162 : vector<16x128xf32>
    %164 = arith.addf %154, %163 : vector<16x128xf32>
    %165 = vector.shape_cast %88 : vector<128xf32> to vector<1x128xf32>
    %166 = vector.broadcast %165 : vector<1x128xf32> to vector<16x128xf32>
    %167 = arith.mulf %150, %166 : vector<16x128xf32>
    %168 = arith.addf %156, %167 : vector<16x128xf32>
    %c15_i32_47 = arith.constant 15 : i32
    %169 = tpu.dynamic_rotate %150 by %c15_i32_47 dim 0 : vector<16x128xf32>, i32 -> vector<16x128xf32>
    %170 = arith.mulf %169, %39 : vector<16x128xf32>
    %171 = arith.addf %160, %170 : vector<16x128xf32>
    %172 = arith.mulf %169, %71 : vector<16x128xf32>
    %173 = arith.addf %164, %172 : vector<16x128xf32>
    %174 = arith.mulf %169, %103 : vector<16x128xf32>
    %175 = arith.addf %168, %174 : vector<16x128xf32>
    %c0_48 = arith.constant 0 : index
    %c3 = arith.constant 3 : index
    %c0_49 = arith.constant 0 : index
    %c0_50 = arith.constant 0 : index
    %176 = vector.load %arg2[%c0_48, %c3, %c0_49, %c0_50] : memref<1x16x16x128xf32, #tpu.memory_space<vmem>>, vector<1x1x16x128xf32>
    %177 = vector.shape_cast %176 : vector<1x1x16x128xf32> to vector<16x128xf32>
    %c1_i32_51 = arith.constant 1 : i32
    %178 = tpu.dynamic_rotate %177 by %c1_i32_51 dim 0 : vector<16x128xf32>, i32 -> vector<16x128xf32>
    %179 = arith.mulf %178, %22 : vector<16x128xf32>
    %180 = arith.mulf %178, %54 : vector<16x128xf32>
    %181 = arith.addf %171, %180 : vector<16x128xf32>
    %182 = arith.mulf %178, %86 : vector<16x128xf32>
    %183 = arith.addf %173, %182 : vector<16x128xf32>
    %184 = vector.shape_cast %24 : vector<128xf32> to vector<1x128xf32>
    %185 = vector.broadcast %184 : vector<1x128xf32> to vector<16x128xf32>
    %186 = arith.mulf %177, %185 : vector<16x128xf32>
    %187 = arith.addf %179, %186 : vector<16x128xf32>
    %188 = vector.shape_cast %56 : vector<128xf32> to vector<1x128xf32>
    %189 = vector.broadcast %188 : vector<1x128xf32> to vector<16x128xf32>
    %190 = arith.mulf %177, %189 : vector<16x128xf32>
    %191 = arith.addf %181, %190 : vector<16x128xf32>
    %192 = vector.shape_cast %88 : vector<128xf32> to vector<1x128xf32>
    %193 = vector.broadcast %192 : vector<1x128xf32> to vector<16x128xf32>
    %194 = arith.mulf %177, %193 : vector<16x128xf32>
    %195 = arith.addf %183, %194 : vector<16x128xf32>
    %c15_i32_52 = arith.constant 15 : i32
    %196 = tpu.dynamic_rotate %177 by %c15_i32_52 dim 0 : vector<16x128xf32>, i32 -> vector<16x128xf32>
    %197 = arith.mulf %196, %39 : vector<16x128xf32>
    %198 = arith.addf %187, %197 : vector<16x128xf32>
    %199 = arith.mulf %196, %71 : vector<16x128xf32>
    %200 = arith.addf %191, %199 : vector<16x128xf32>
    %201 = arith.mulf %196, %103 : vector<16x128xf32>
    %202 = arith.addf %195, %201 : vector<16x128xf32>
    %c0_53 = arith.constant 0 : index
    %c4 = arith.constant 4 : index
    %c0_54 = arith.constant 0 : index
    %c0_55 = arith.constant 0 : index
    %203 = vector.load %arg2[%c0_53, %c4, %c0_54, %c0_55] : memref<1x16x16x128xf32, #tpu.memory_space<vmem>>, vector<1x1x16x128xf32>
    %204 = vector.shape_cast %203 : vector<1x1x16x128xf32> to vector<16x128xf32>
    %c1_i32_56 = arith.constant 1 : i32
    %205 = tpu.dynamic_rotate %204 by %c1_i32_56 dim 0 : vector<16x128xf32>, i32 -> vector<16x128xf32>
    %206 = arith.mulf %205, %22 : vector<16x128xf32>
    %207 = arith.mulf %205, %54 : vector<16x128xf32>
    %208 = arith.addf %198, %207 : vector<16x128xf32>
    %209 = arith.mulf %205, %86 : vector<16x128xf32>
    %210 = arith.addf %200, %209 : vector<16x128xf32>
    %211 = vector.shape_cast %24 : vector<128xf32> to vector<1x128xf32>
    %212 = vector.broadcast %211 : vector<1x128xf32> to vector<16x128xf32>
    %213 = arith.mulf %204, %212 : vector<16x128xf32>
    %214 = arith.addf %206, %213 : vector<16x128xf32>
    %215 = vector.shape_cast %56 : vector<128xf32> to vector<1x128xf32>
    %216 = vector.broadcast %215 : vector<1x128xf32> to vector<16x128xf32>
    %217 = arith.mulf %204, %216 : vector<16x128xf32>
    %218 = arith.addf %208, %217 : vector<16x128xf32>
    %219 = vector.shape_cast %88 : vector<128xf32> to vector<1x128xf32>
    %220 = vector.broadcast %219 : vector<1x128xf32> to vector<16x128xf32>
    %221 = arith.mulf %204, %220 : vector<16x128xf32>
    %222 = arith.addf %210, %221 : vector<16x128xf32>
    %c15_i32_57 = arith.constant 15 : i32
    %223 = tpu.dynamic_rotate %204 by %c15_i32_57 dim 0 : vector<16x128xf32>, i32 -> vector<16x128xf32>
    %224 = arith.mulf %223, %39 : vector<16x128xf32>
    %225 = arith.addf %214, %224 : vector<16x128xf32>
    %226 = arith.mulf %223, %71 : vector<16x128xf32>
    %227 = arith.addf %218, %226 : vector<16x128xf32>
    %228 = arith.mulf %223, %103 : vector<16x128xf32>
    %229 = arith.addf %222, %228 : vector<16x128xf32>
    %c0_58 = arith.constant 0 : index
    %c5 = arith.constant 5 : index
    %c0_59 = arith.constant 0 : index
    %c0_60 = arith.constant 0 : index
    %230 = vector.load %arg2[%c0_58, %c5, %c0_59, %c0_60] : memref<1x16x16x128xf32, #tpu.memory_space<vmem>>, vector<1x1x16x128xf32>
    %231 = vector.shape_cast %230 : vector<1x1x16x128xf32> to vector<16x128xf32>
    %c1_i32_61 = arith.constant 1 : i32
    %232 = tpu.dynamic_rotate %231 by %c1_i32_61 dim 0 : vector<16x128xf32>, i32 -> vector<16x128xf32>
    %233 = arith.mulf %232, %22 : vector<16x128xf32>
    %234 = arith.mulf %232, %54 : vector<16x128xf32>
    %235 = arith.addf %225, %234 : vector<16x128xf32>
    %236 = arith.mulf %232, %86 : vector<16x128xf32>
    %237 = arith.addf %227, %236 : vector<16x128xf32>
    %238 = vector.shape_cast %24 : vector<128xf32> to vector<1x128xf32>
    %239 = vector.broadcast %238 : vector<1x128xf32> to vector<16x128xf32>
    %240 = arith.mulf %231, %239 : vector<16x128xf32>
    %241 = arith.addf %233, %240 : vector<16x128xf32>
    %242 = vector.shape_cast %56 : vector<128xf32> to vector<1x128xf32>
    %243 = vector.broadcast %242 : vector<1x128xf32> to vector<16x128xf32>
    %244 = arith.mulf %231, %243 : vector<16x128xf32>
    %245 = arith.addf %235, %244 : vector<16x128xf32>
    %246 = vector.shape_cast %88 : vector<128xf32> to vector<1x128xf32>
    %247 = vector.broadcast %246 : vector<1x128xf32> to vector<16x128xf32>
    %248 = arith.mulf %231, %247 : vector<16x128xf32>
    %249 = arith.addf %237, %248 : vector<16x128xf32>
    %c15_i32_62 = arith.constant 15 : i32
    %250 = tpu.dynamic_rotate %231 by %c15_i32_62 dim 0 : vector<16x128xf32>, i32 -> vector<16x128xf32>
    %251 = arith.mulf %250, %39 : vector<16x128xf32>
    %252 = arith.addf %241, %251 : vector<16x128xf32>
    %253 = arith.mulf %250, %71 : vector<16x128xf32>
    %254 = arith.addf %245, %253 : vector<16x128xf32>
    %255 = arith.mulf %250, %103 : vector<16x128xf32>
    %256 = arith.addf %249, %255 : vector<16x128xf32>
    %c0_63 = arith.constant 0 : index
    %c6 = arith.constant 6 : index
    %c0_64 = arith.constant 0 : index
    %c0_65 = arith.constant 0 : index
    %257 = vector.load %arg2[%c0_63, %c6, %c0_64, %c0_65] : memref<1x16x16x128xf32, #tpu.memory_space<vmem>>, vector<1x1x16x128xf32>
    %258 = vector.shape_cast %257 : vector<1x1x16x128xf32> to vector<16x128xf32>
    %c1_i32_66 = arith.constant 1 : i32
    %259 = tpu.dynamic_rotate %258 by %c1_i32_66 dim 0 : vector<16x128xf32>, i32 -> vector<16x128xf32>
    %260 = arith.mulf %259, %22 : vector<16x128xf32>
    %261 = arith.mulf %259, %54 : vector<16x128xf32>
    %262 = arith.addf %252, %261 : vector<16x128xf32>
    %263 = arith.mulf %259, %86 : vector<16x128xf32>
    %264 = arith.addf %254, %263 : vector<16x128xf32>
    %265 = vector.shape_cast %24 : vector<128xf32> to vector<1x128xf32>
    %266 = vector.broadcast %265 : vector<1x128xf32> to vector<16x128xf32>
    %267 = arith.mulf %258, %266 : vector<16x128xf32>
    %268 = arith.addf %260, %267 : vector<16x128xf32>
    %269 = vector.shape_cast %56 : vector<128xf32> to vector<1x128xf32>
    %270 = vector.broadcast %269 : vector<1x128xf32> to vector<16x128xf32>
    %271 = arith.mulf %258, %270 : vector<16x128xf32>
    %272 = arith.addf %262, %271 : vector<16x128xf32>
    %273 = vector.shape_cast %88 : vector<128xf32> to vector<1x128xf32>
    %274 = vector.broadcast %273 : vector<1x128xf32> to vector<16x128xf32>
    %275 = arith.mulf %258, %274 : vector<16x128xf32>
    %276 = arith.addf %264, %275 : vector<16x128xf32>
    %c15_i32_67 = arith.constant 15 : i32
    %277 = tpu.dynamic_rotate %258 by %c15_i32_67 dim 0 : vector<16x128xf32>, i32 -> vector<16x128xf32>
    %278 = arith.mulf %277, %39 : vector<16x128xf32>
    %279 = arith.addf %268, %278 : vector<16x128xf32>
    %280 = arith.mulf %277, %71 : vector<16x128xf32>
    %281 = arith.addf %272, %280 : vector<16x128xf32>
    %282 = arith.mulf %277, %103 : vector<16x128xf32>
    %283 = arith.addf %276, %282 : vector<16x128xf32>
    %c0_68 = arith.constant 0 : index
    %c7 = arith.constant 7 : index
    %c0_69 = arith.constant 0 : index
    %c0_70 = arith.constant 0 : index
    %284 = vector.load %arg2[%c0_68, %c7, %c0_69, %c0_70] : memref<1x16x16x128xf32, #tpu.memory_space<vmem>>, vector<1x1x16x128xf32>
    %285 = vector.shape_cast %284 : vector<1x1x16x128xf32> to vector<16x128xf32>
    %c1_i32_71 = arith.constant 1 : i32
    %286 = tpu.dynamic_rotate %285 by %c1_i32_71 dim 0 : vector<16x128xf32>, i32 -> vector<16x128xf32>
    %287 = arith.mulf %286, %54 : vector<16x128xf32>
    %288 = arith.addf %279, %287 : vector<16x128xf32>
    %289 = arith.mulf %286, %86 : vector<16x128xf32>
    %290 = arith.addf %281, %289 : vector<16x128xf32>
    %291 = vector.shape_cast %56 : vector<128xf32> to vector<1x128xf32>
    %292 = vector.broadcast %291 : vector<1x128xf32> to vector<16x128xf32>
    %293 = arith.mulf %285, %292 : vector<16x128xf32>
    %294 = arith.addf %288, %293 : vector<16x128xf32>
    %295 = vector.shape_cast %88 : vector<128xf32> to vector<1x128xf32>
    %296 = vector.broadcast %295 : vector<1x128xf32> to vector<16x128xf32>
    %297 = arith.mulf %285, %296 : vector<16x128xf32>
    %298 = arith.addf %290, %297 : vector<16x128xf32>
    %c15_i32_72 = arith.constant 15 : i32
    %299 = tpu.dynamic_rotate %285 by %c15_i32_72 dim 0 : vector<16x128xf32>, i32 -> vector<16x128xf32>
    %300 = arith.mulf %299, %71 : vector<16x128xf32>
    %301 = arith.addf %294, %300 : vector<16x128xf32>
    %302 = arith.mulf %299, %103 : vector<16x128xf32>
    %303 = arith.addf %298, %302 : vector<16x128xf32>
    %c0_73 = arith.constant 0 : index
    %c8 = arith.constant 8 : index
    %c0_74 = arith.constant 0 : index
    %c0_75 = arith.constant 0 : index
    %304 = vector.load %arg2[%c0_73, %c8, %c0_74, %c0_75] : memref<1x16x16x128xf32, #tpu.memory_space<vmem>>, vector<1x1x16x128xf32>
    %305 = vector.shape_cast %304 : vector<1x1x16x128xf32> to vector<16x128xf32>
    %c1_i32_76 = arith.constant 1 : i32
    %306 = tpu.dynamic_rotate %305 by %c1_i32_76 dim 0 : vector<16x128xf32>, i32 -> vector<16x128xf32>
    %307 = arith.mulf %306, %86 : vector<16x128xf32>
    %308 = arith.addf %301, %307 : vector<16x128xf32>
    %309 = vector.shape_cast %88 : vector<128xf32> to vector<1x128xf32>
    %310 = vector.broadcast %309 : vector<1x128xf32> to vector<16x128xf32>
    %311 = arith.mulf %305, %310 : vector<16x128xf32>
    %312 = arith.addf %308, %311 : vector<16x128xf32>
    %c15_i32_77 = arith.constant 15 : i32
    %313 = tpu.dynamic_rotate %305 by %c15_i32_77 dim 0 : vector<16x128xf32>, i32 -> vector<16x128xf32>
    %314 = arith.mulf %313, %103 : vector<16x128xf32>
    %315 = arith.addf %312, %314 : vector<16x128xf32>
    %316 = vector.shape_cast %2 : vector<128xf32> to vector<1x128xf32>
    %317 = vector.broadcast %316 : vector<1x128xf32> to vector<16x128xf32>
    %318 = arith.addf %148, %317 : vector<16x128xf32>
    %cst_78 = arith.constant 5.000000e-01 : f32
    %319 = vector.broadcast %cst_78 : f32 to vector<16x128xf32>
    %320 = arith.mulf %319, %318 : vector<16x128xf32>
    %cst_79 = arith.constant 4.471500e-02 : f32
    %321 = vector.broadcast %cst_79 : f32 to vector<16x128xf32>
    %322 = arith.mulf %321, %318 : vector<16x128xf32>
    %323 = arith.mulf %322, %318 : vector<16x128xf32>
    %324 = arith.mulf %323, %318 : vector<16x128xf32>
    %325 = arith.addf %318, %324 : vector<16x128xf32>
    %cst_80 = arith.constant 0.797884583 : f32
    %326 = vector.broadcast %cst_80 : f32 to vector<16x128xf32>
    %327 = arith.mulf %326, %325 : vector<16x128xf32>
    %328 = math.tanh %327 : vector<16x128xf32>
    %cst_81 = arith.constant 1.000000e+00 : f32
    %329 = vector.broadcast %cst_81 : f32 to vector<16x128xf32>
    %330 = arith.addf %329, %328 : vector<16x128xf32>
    %331 = arith.mulf %320, %330 : vector<16x128xf32>
    %332 = vector.shape_cast %4 : vector<128xf32> to vector<1x128xf32>
    %333 = vector.broadcast %332 : vector<1x128xf32> to vector<16x128xf32>
    %334 = arith.mulf %331, %333 : vector<16x128xf32>
    %335 = vector.shape_cast %6 : vector<128xf32> to vector<1x128xf32>
    %336 = vector.broadcast %335 : vector<1x128xf32> to vector<16x128xf32>
    %337 = arith.addf %334, %336 : vector<16x128xf32>
    %c0_82 = arith.constant 0 : index
    %c0_83 = arith.constant 0 : index
    %c0_84 = arith.constant 0 : index
    %c0_85 = arith.constant 0 : index
    %338 = vector.load %arg2[%c0_82, %c0_83, %c0_84, %c0_85] : memref<1x16x16x128xf32, #tpu.memory_space<vmem>>, vector<1x1x16x128xf32>
    %339 = vector.shape_cast %338 : vector<1x1x16x128xf32> to vector<16x128xf32>
    %340 = arith.addf %337, %339 : vector<16x128xf32>
    %c0_86 = arith.constant 0 : index
    %c0_87 = arith.constant 0 : index
    %c0_88 = arith.constant 0 : index
    %c0_89 = arith.constant 0 : index
    %341 = vector.load %arg7[%c0_86, %c0_87, %c0_88, %c0_89] : memref<1x16x16x128xf32, #tpu.memory_space<vmem>>, vector<1x1x16x128xf32>
    %342 = vector.shape_cast %341 : vector<1x1x16x128xf32> to vector<16x128xf32>
    %343 = vector.shape_cast %340 : vector<16x128xf32> to vector<1x1x16x128xf32>
    tpu.vector_store %arg7[%c0_86, %c0_87, %c0_88, %c0_89], %343 {strides = array<i32>} : memref<1x16x16x128xf32, #tpu.memory_space<vmem>>, vector<1x1x16x128xf32>,
    %344 = vector.shape_cast %2 : vector<128xf32> to vector<1x128xf32>
    %345 = vector.broadcast %344 : vector<1x128xf32> to vector<16x128xf32>
    %346 = arith.addf %175, %345 : vector<16x128xf32>
    %cst_90 = arith.constant 5.000000e-01 : f32
    %347 = vector.broadcast %cst_90 : f32 to vector<16x128xf32>
    %348 = arith.mulf %347, %346 : vector<16x128xf32>
    %cst_91 = arith.constant 4.471500e-02 : f32
    %349 = vector.broadcast %cst_91 : f32 to vector<16x128xf32>
    %350 = arith.mulf %349, %346 : vector<16x128xf32>
    %351 = arith.mulf %350, %346 : vector<16x128xf32>
    %352 = arith.mulf %351, %346 : vector<16x128xf32>
    %353 = arith.addf %346, %352 : vector<16x128xf32>
    %cst_92 = arith.constant 0.797884583 : f32
    %354 = vector.broadcast %cst_92 : f32 to vector<16x128xf32>
    %355 = arith.mulf %354, %353 : vector<16x128xf32>
    %356 = math.tanh %355 : vector<16x128xf32>
    %cst_93 = arith.constant 1.000000e+00 : f32
    %357 = vector.broadcast %cst_93 : f32 to vector<16x128xf32>
    %358 = arith.addf %357, %356 : vector<16x128xf32>
    %359 = arith.mulf %348, %358 : vector<16x128xf32>
    %360 = vector.shape_cast %4 : vector<128xf32> to vector<1x128xf32>
    %361 = vector.broadcast %360 : vector<1x128xf32> to vector<16x128xf32>
    %362 = arith.mulf %359, %361 : vector<16x128xf32>
    %363 = vector.shape_cast %6 : vector<128xf32> to vector<1x128xf32>
    %364 = vector.broadcast %363 : vector<1x128xf32> to vector<16x128xf32>
    %365 = arith.addf %362, %364 : vector<16x128xf32>
    %c0_94 = arith.constant 0 : index
    %c1_95 = arith.constant 1 : index
    %c0_96 = arith.constant 0 : index
    %c0_97 = arith.constant 0 : index
    %366 = vector.load %arg2[%c0_94, %c1_95, %c0_96, %c0_97] : memref<1x16x16x128xf32, #tpu.memory_space<vmem>>, vector<1x1x16x128xf32>
    %367 = vector.shape_cast %366 : vector<1x1x16x128xf32> to vector<16x128xf32>
    %368 = arith.addf %365, %367 : vector<16x128xf32>
    %c0_98 = arith.constant 0 : index
    %c1_99 = arith.constant 1 : index
    %c0_100 = arith.constant 0 : index
    %c0_101 = arith.constant 0 : index
    %369 = vector.load %arg7[%c0_98, %c1_99, %c0_100, %c0_101] : memref<1x16x16x128xf32, #tpu.memory_space<vmem>>, vector<1x1x16x128xf32>
    %370 = vector.shape_cast %369 : vector<1x1x16x128xf32> to vector<16x128xf32>
    %371 = vector.shape_cast %368 : vector<16x128xf32> to vector<1x1x16x128xf32>
    tpu.vector_store %arg7[%c0_98, %c1_99, %c0_100, %c0_101], %371 {strides = array<i32>} : memref<1x16x16x128xf32, #tpu.memory_space<vmem>>, vector<1x1x16x128xf32>,
    %372 = vector.shape_cast %2 : vector<128xf32> to vector<1x128xf32>
    %373 = vector.broadcast %372 : vector<1x128xf32> to vector<16x128xf32>
    %374 = arith.addf %202, %373 : vector<16x128xf32>
    %cst_102 = arith.constant 5.000000e-01 : f32
    %375 = vector.broadcast %cst_102 : f32 to vector<16x128xf32>
    %376 = arith.mulf %375, %374 : vector<16x128xf32>
    %cst_103 = arith.constant 4.471500e-02 : f32
    %377 = vector.broadcast %cst_103 : f32 to vector<16x128xf32>
    %378 = arith.mulf %377, %374 : vector<16x128xf32>
    %379 = arith.mulf %378, %374 : vector<16x128xf32>
    %380 = arith.mulf %379, %374 : vector<16x128xf32>
    %381 = arith.addf %374, %380 : vector<16x128xf32>
    %cst_104 = arith.constant 0.797884583 : f32
    %382 = vector.broadcast %cst_104 : f32 to vector<16x128xf32>
    %383 = arith.mulf %382, %381 : vector<16x128xf32>
    %384 = math.tanh %383 : vector<16x128xf32>
    %cst_105 = arith.constant 1.000000e+00 : f32
    %385 = vector.broadcast %cst_105 : f32 to vector<16x128xf32>
    %386 = arith.addf %385, %384 : vector<16x128xf32>
    %387 = arith.mulf %376, %386 : vector<16x128xf32>
    %388 = vector.shape_cast %4 : vector<128xf32> to vector<1x128xf32>
    %389 = vector.broadcast %388 : vector<1x128xf32> to vector<16x128xf32>
    %390 = arith.mulf %387, %389 : vector<16x128xf32>
    %391 = vector.shape_cast %6 : vector<128xf32> to vector<1x128xf32>
    %392 = vector.broadcast %391 : vector<1x128xf32> to vector<16x128xf32>
    %393 = arith.addf %390, %392 : vector<16x128xf32>
    %c0_106 = arith.constant 0 : index
    %c2_107 = arith.constant 2 : index
    %c0_108 = arith.constant 0 : index
    %c0_109 = arith.constant 0 : index
    %394 = vector.load %arg2[%c0_106, %c2_107, %c0_108, %c0_109] : memref<1x16x16x128xf32, #tpu.memory_space<vmem>>, vector<1x1x16x128xf32>
    %395 = vector.shape_cast %394 : vector<1x1x16x128xf32> to vector<16x128xf32>
    %396 = arith.addf %393, %395 : vector<16x128xf32>
    %c0_110 = arith.constant 0 : index
    %c2_111 = arith.constant 2 : index
    %c0_112 = arith.constant 0 : index
    %c0_113 = arith.constant 0 : index
    %397 = vector.load %arg7[%c0_110, %c2_111, %c0_112, %c0_113] : memref<1x16x16x128xf32, #tpu.memory_space<vmem>>, vector<1x1x16x128xf32>
    %398 = vector.shape_cast %397 : vector<1x1x16x128xf32> to vector<16x128xf32>
    %399 = vector.shape_cast %396 : vector<16x128xf32> to vector<1x1x16x128xf32>
    tpu.vector_store %arg7[%c0_110, %c2_111, %c0_112, %c0_113], %399 {strides = array<i32>} : memref<1x16x16x128xf32, #tpu.memory_space<vmem>>, vector<1x1x16x128xf32>,
    %400 = vector.shape_cast %2 : vector<128xf32> to vector<1x128xf32>
    %401 = vector.broadcast %400 : vector<1x128xf32> to vector<16x128xf32>
    %402 = arith.addf %229, %401 : vector<16x128xf32>
    %cst_114 = arith.constant 5.000000e-01 : f32
    %403 = vector.broadcast %cst_114 : f32 to vector<16x128xf32>
    %404 = arith.mulf %403, %402 : vector<16x128xf32>
    %cst_115 = arith.constant 4.471500e-02 : f32
    %405 = vector.broadcast %cst_115 : f32 to vector<16x128xf32>
    %406 = arith.mulf %405, %402 : vector<16x128xf32>
    %407 = arith.mulf %406, %402 : vector<16x128xf32>
    %408 = arith.mulf %407, %402 : vector<16x128xf32>
    %409 = arith.addf %402, %408 : vector<16x128xf32>
    %cst_116 = arith.constant 0.797884583 : f32
    %410 = vector.broadcast %cst_116 : f32 to vector<16x128xf32>
    %411 = arith.mulf %410, %409 : vector<16x128xf32>
    %412 = math.tanh %411 : vector<16x128xf32>
    %cst_117 = arith.constant 1.000000e+00 : f32
    %413 = vector.broadcast %cst_117 : f32 to vector<16x128xf32>
    %414 = arith.addf %413, %412 : vector<16x128xf32>
    %415 = arith.mulf %404, %414 : vector<16x128xf32>
    %416 = vector.shape_cast %4 : vector<128xf32> to vector<1x128xf32>
    %417 = vector.broadcast %416 : vector<1x128xf32> to vector<16x128xf32>
    %418 = arith.mulf %415, %417 : vector<16x128xf32>
    %419 = vector.shape_cast %6 : vector<128xf32> to vector<1x128xf32>
    %420 = vector.broadcast %419 : vector<1x128xf32> to vector<16x128xf32>
    %421 = arith.addf %418, %420 : vector<16x128xf32>
    %c0_118 = arith.constant 0 : index
    %c3_119 = arith.constant 3 : index
    %c0_120 = arith.constant 0 : index
    %c0_121 = arith.constant 0 : index
    %422 = vector.load %arg2[%c0_118, %c3_119, %c0_120, %c0_121] : memref<1x16x16x128xf32, #tpu.memory_space<vmem>>, vector<1x1x16x128xf32>
    %423 = vector.shape_cast %422 : vector<1x1x16x128xf32> to vector<16x128xf32>
    %424 = arith.addf %421, %423 : vector<16x128xf32>
    %c0_122 = arith.constant 0 : index
    %c3_123 = arith.constant 3 : index
    %c0_124 = arith.constant 0 : index
    %c0_125 = arith.constant 0 : index
    %425 = vector.load %arg7[%c0_122, %c3_123, %c0_124, %c0_125] : memref<1x16x16x128xf32, #tpu.memory_space<vmem>>, vector<1x1x16x128xf32>
    %426 = vector.shape_cast %425 : vector<1x1x16x128xf32> to vector<16x128xf32>
    %427 = vector.shape_cast %424 : vector<16x128xf32> to vector<1x1x16x128xf32>
    tpu.vector_store %arg7[%c0_122, %c3_123, %c0_124, %c0_125], %427 {strides = array<i32>} : memref<1x16x16x128xf32, #tpu.memory_space<vmem>>, vector<1x1x16x128xf32>,
    %428 = vector.shape_cast %2 : vector<128xf32> to vector<1x128xf32>
    %429 = vector.broadcast %428 : vector<1x128xf32> to vector<16x128xf32>
    %430 = arith.addf %256, %429 : vector<16x128xf32>
    %cst_126 = arith.constant 5.000000e-01 : f32
    %431 = vector.broadcast %cst_126 : f32 to vector<16x128xf32>
    %432 = arith.mulf %431, %430 : vector<16x128xf32>
    %cst_127 = arith.constant 4.471500e-02 : f32
    %433 = vector.broadcast %cst_127 : f32 to vector<16x128xf32>
    %434 = arith.mulf %433, %430 : vector<16x128xf32>
    %435 = arith.mulf %434, %430 : vector<16x128xf32>
    %436 = arith.mulf %435, %430 : vector<16x128xf32>
    %437 = arith.addf %430, %436 : vector<16x128xf32>
    %cst_128 = arith.constant 0.797884583 : f32
    %438 = vector.broadcast %cst_128 : f32 to vector<16x128xf32>
    %439 = arith.mulf %438, %437 : vector<16x128xf32>
    %440 = math.tanh %439 : vector<16x128xf32>
    %cst_129 = arith.constant 1.000000e+00 : f32
    %441 = vector.broadcast %cst_129 : f32 to vector<16x128xf32>
    %442 = arith.addf %441, %440 : vector<16x128xf32>
    %443 = arith.mulf %432, %442 : vector<16x128xf32>
    %444 = vector.shape_cast %4 : vector<128xf32> to vector<1x128xf32>
    %445 = vector.broadcast %444 : vector<1x128xf32> to vector<16x128xf32>
    %446 = arith.mulf %443, %445 : vector<16x128xf32>
    %447 = vector.shape_cast %6 : vector<128xf32> to vector<1x128xf32>
    %448 = vector.broadcast %447 : vector<1x128xf32> to vector<16x128xf32>
    %449 = arith.addf %446, %448 : vector<16x128xf32>
    %c0_130 = arith.constant 0 : index
    %c4_131 = arith.constant 4 : index
    %c0_132 = arith.constant 0 : index
    %c0_133 = arith.constant 0 : index
    %450 = vector.load %arg2[%c0_130, %c4_131, %c0_132, %c0_133] : memref<1x16x16x128xf32, #tpu.memory_space<vmem>>, vector<1x1x16x128xf32>
    %451 = vector.shape_cast %450 : vector<1x1x16x128xf32> to vector<16x128xf32>
    %452 = arith.addf %449, %451 : vector<16x128xf32>
    %c0_134 = arith.constant 0 : index
    %c4_135 = arith.constant 4 : index
    %c0_136 = arith.constant 0 : index
    %c0_137 = arith.constant 0 : index
    %453 = vector.load %arg7[%c0_134, %c4_135, %c0_136, %c0_137] : memref<1x16x16x128xf32, #tpu.memory_space<vmem>>, vector<1x1x16x128xf32>
    %454 = vector.shape_cast %453 : vector<1x1x16x128xf32> to vector<16x128xf32>
    %455 = vector.shape_cast %452 : vector<16x128xf32> to vector<1x1x16x128xf32>
    tpu.vector_store %arg7[%c0_134, %c4_135, %c0_136, %c0_137], %455 {strides = array<i32>} : memref<1x16x16x128xf32, #tpu.memory_space<vmem>>, vector<1x1x16x128xf32>,
    %456 = vector.shape_cast %2 : vector<128xf32> to vector<1x128xf32>
    %457 = vector.broadcast %456 : vector<1x128xf32> to vector<16x128xf32>
    %458 = arith.addf %283, %457 : vector<16x128xf32>
    %cst_138 = arith.constant 5.000000e-01 : f32
    %459 = vector.broadcast %cst_138 : f32 to vector<16x128xf32>
    %460 = arith.mulf %459, %458 : vector<16x128xf32>
    %cst_139 = arith.constant 4.471500e-02 : f32
    %461 = vector.broadcast %cst_139 : f32 to vector<16x128xf32>
    %462 = arith.mulf %461, %458 : vector<16x128xf32>
    %463 = arith.mulf %462, %458 : vector<16x128xf32>
    %464 = arith.mulf %463, %458 : vector<16x128xf32>
    %465 = arith.addf %458, %464 : vector<16x128xf32>
    %cst_140 = arith.constant 0.797884583 : f32
    %466 = vector.broadcast %cst_140 : f32 to vector<16x128xf32>
    %467 = arith.mulf %466, %465 : vector<16x128xf32>
    %468 = math.tanh %467 : vector<16x128xf32>
    %cst_141 = arith.constant 1.000000e+00 : f32
    %469 = vector.broadcast %cst_141 : f32 to vector<16x128xf32>
    %470 = arith.addf %469, %468 : vector<16x128xf32>
    %471 = arith.mulf %460, %470 : vector<16x128xf32>
    %472 = vector.shape_cast %4 : vector<128xf32> to vector<1x128xf32>
    %473 = vector.broadcast %472 : vector<1x128xf32> to vector<16x128xf32>
    %474 = arith.mulf %471, %473 : vector<16x128xf32>
    %475 = vector.shape_cast %6 : vector<128xf32> to vector<1x128xf32>
    %476 = vector.broadcast %475 : vector<1x128xf32> to vector<16x128xf32>
    %477 = arith.addf %474, %476 : vector<16x128xf32>
    %c0_142 = arith.constant 0 : index
    %c5_143 = arith.constant 5 : index
    %c0_144 = arith.constant 0 : index
    %c0_145 = arith.constant 0 : index
    %478 = vector.load %arg2[%c0_142, %c5_143, %c0_144, %c0_145] : memref<1x16x16x128xf32, #tpu.memory_space<vmem>>, vector<1x1x16x128xf32>
    %479 = vector.shape_cast %478 : vector<1x1x16x128xf32> to vector<16x128xf32>
    %480 = arith.addf %477, %479 : vector<16x128xf32>
    %c0_146 = arith.constant 0 : index
    %c5_147 = arith.constant 5 : index
    %c0_148 = arith.constant 0 : index
    %c0_149 = arith.constant 0 : index
    %481 = vector.load %arg7[%c0_146, %c5_147, %c0_148, %c0_149] : memref<1x16x16x128xf32, #tpu.memory_space<vmem>>, vector<1x1x16x128xf32>
    %482 = vector.shape_cast %481 : vector<1x1x16x128xf32> to vector<16x128xf32>
    %483 = vector.shape_cast %480 : vector<16x128xf32> to vector<1x1x16x128xf32>
    tpu.vector_store %arg7[%c0_146, %c5_147, %c0_148, %c0_149], %483 {strides = array<i32>} : memref<1x16x16x128xf32, #tpu.memory_space<vmem>>, vector<1x1x16x128xf32>,
    %484 = vector.shape_cast %2 : vector<128xf32> to vector<1x128xf32>
    %485 = vector.broadcast %484 : vector<1x128xf32> to vector<16x128xf32>
    %486 = arith.addf %303, %485 : vector<16x128xf32>
    %cst_150 = arith.constant 5.000000e-01 : f32
    %487 = vector.broadcast %cst_150 : f32 to vector<16x128xf32>
    %488 = arith.mulf %487, %486 : vector<16x128xf32>
    %cst_151 = arith.constant 4.471500e-02 : f32
    %489 = vector.broadcast %cst_151 : f32 to vector<16x128xf32>
    %490 = arith.mulf %489, %486 : vector<16x128xf32>
    %491 = arith.mulf %490, %486 : vector<16x128xf32>
    %492 = arith.mulf %491, %486 : vector<16x128xf32>
    %493 = arith.addf %486, %492 : vector<16x128xf32>
    %cst_152 = arith.constant 0.797884583 : f32
    %494 = vector.broadcast %cst_152 : f32 to vector<16x128xf32>
    %495 = arith.mulf %494, %493 : vector<16x128xf32>
    %496 = math.tanh %495 : vector<16x128xf32>
    %cst_153 = arith.constant 1.000000e+00 : f32
    %497 = vector.broadcast %cst_153 : f32 to vector<16x128xf32>
    %498 = arith.addf %497, %496 : vector<16x128xf32>
    %499 = arith.mulf %488, %498 : vector<16x128xf32>
    %500 = vector.shape_cast %4 : vector<128xf32> to vector<1x128xf32>
    %501 = vector.broadcast %500 : vector<1x128xf32> to vector<16x128xf32>
    %502 = arith.mulf %499, %501 : vector<16x128xf32>
    %503 = vector.shape_cast %6 : vector<128xf32> to vector<1x128xf32>
    %504 = vector.broadcast %503 : vector<1x128xf32> to vector<16x128xf32>
    %505 = arith.addf %502, %504 : vector<16x128xf32>
    %c0_154 = arith.constant 0 : index
    %c6_155 = arith.constant 6 : index
    %c0_156 = arith.constant 0 : index
    %c0_157 = arith.constant 0 : index
    %506 = vector.load %arg2[%c0_154, %c6_155, %c0_156, %c0_157] : memref<1x16x16x128xf32, #tpu.memory_space<vmem>>, vector<1x1x16x128xf32>
    %507 = vector.shape_cast %506 : vector<1x1x16x128xf32> to vector<16x128xf32>
    %508 = arith.addf %505, %507 : vector<16x128xf32>
    %c0_158 = arith.constant 0 : index
    %c6_159 = arith.constant 6 : index
    %c0_160 = arith.constant 0 : index
    %c0_161 = arith.constant 0 : index
    %509 = vector.load %arg7[%c0_158, %c6_159, %c0_160, %c0_161] : memref<1x16x16x128xf32, #tpu.memory_space<vmem>>, vector<1x1x16x128xf32>
    %510 = vector.shape_cast %509 : vector<1x1x16x128xf32> to vector<16x128xf32>
    %511 = vector.shape_cast %508 : vector<16x128xf32> to vector<1x1x16x128xf32>
    tpu.vector_store %arg7[%c0_158, %c6_159, %c0_160, %c0_161], %511 {strides = array<i32>} : memref<1x16x16x128xf32, #tpu.memory_space<vmem>>, vector<1x1x16x128xf32>,
    %512 = vector.shape_cast %2 : vector<128xf32> to vector<1x128xf32>
    %513 = vector.broadcast %512 : vector<1x128xf32> to vector<16x128xf32>
    %514 = arith.addf %315, %513 : vector<16x128xf32>
    %cst_162 = arith.constant 5.000000e-01 : f32
    %515 = vector.broadcast %cst_162 : f32 to vector<16x128xf32>
    %516 = arith.mulf %515, %514 : vector<16x128xf32>
    %cst_163 = arith.constant 4.471500e-02 : f32
    %517 = vector.broadcast %cst_163 : f32 to vector<16x128xf32>
    %518 = arith.mulf %517, %514 : vector<16x128xf32>
    %519 = arith.mulf %518, %514 : vector<16x128xf32>
    %520 = arith.mulf %519, %514 : vector<16x128xf32>
    %521 = arith.addf %514, %520 : vector<16x128xf32>
    %cst_164 = arith.constant 0.797884583 : f32
    %522 = vector.broadcast %cst_164 : f32 to vector<16x128xf32>
    %523 = arith.mulf %522, %521 : vector<16x128xf32>
    %524 = math.tanh %523 : vector<16x128xf32>
    %cst_165 = arith.constant 1.000000e+00 : f32
    %525 = vector.broadcast %cst_165 : f32 to vector<16x128xf32>
    %526 = arith.addf %525, %524 : vector<16x128xf32>
    %527 = arith.mulf %516, %526 : vector<16x128xf32>
    %528 = vector.shape_cast %4 : vector<128xf32> to vector<1x128xf32>
    %529 = vector.broadcast %528 : vector<1x128xf32> to vector<16x128xf32>
    %530 = arith.mulf %527, %529 : vector<16x128xf32>
    %531 = vector.shape_cast %6 : vector<128xf32> to vector<1x128xf32>
    %532 = vector.broadcast %531 : vector<1x128xf32> to vector<16x128xf32>
    %533 = arith.addf %530, %532 : vector<16x128xf32>
    %c0_166 = arith.constant 0 : index
    %c7_167 = arith.constant 7 : index
    %c0_168 = arith.constant 0 : index
    %c0_169 = arith.constant 0 : index
    %534 = vector.load %arg2[%c0_166, %c7_167, %c0_168, %c0_169] : memref<1x16x16x128xf32, #tpu.memory_space<vmem>>, vector<1x1x16x128xf32>
    %535 = vector.shape_cast %534 : vector<1x1x16x128xf32> to vector<16x128xf32>
    %536 = arith.addf %533, %535 : vector<16x128xf32>
    %c0_170 = arith.constant 0 : index
    %c7_171 = arith.constant 7 : index
    %c0_172 = arith.constant 0 : index
    %c0_173 = arith.constant 0 : index
    %537 = vector.load %arg7[%c0_170, %c7_171, %c0_172, %c0_173] : memref<1x16x16x128xf32, #tpu.memory_space<vmem>>, vector<1x1x16x128xf32>
    %538 = vector.shape_cast %537 : vector<1x1x16x128xf32> to vector<16x128xf32>
    %539 = vector.shape_cast %536 : vector<16x128xf32> to vector<1x1x16x128xf32>
    tpu.vector_store %arg7[%c0_170, %c7_171, %c0_172, %c0_173], %539 {strides = array<i32>} : memref<1x16x16x128xf32, #tpu.memory_space<vmem>>, vector<1x1x16x128xf32>,
    %c0_174 = arith.constant 0 : index
    %c7_175 = arith.constant 7 : index
    %c0_176 = arith.constant 0 : index
    %c0_177 = arith.constant 0 : index
    %540 = vector.load %arg2[%c0_174, %c7_175, %c0_176, %c0_177] : memref<1x16x16x128xf32, #tpu.memory_space<vmem>>, vector<1x1x16x128xf32>
    %541 = vector.shape_cast %540 : vector<1x1x16x128xf32> to vector<16x128xf32>
    %c1_i32_178 = arith.constant 1 : i32
    %542 = tpu.dynamic_rotate %541 by %c1_i32_178 dim 0 : vector<16x128xf32>, i32 -> vector<16x128xf32>
    %543 = arith.mulf %542, %22 : vector<16x128xf32>
    %544 = vector.shape_cast %24 : vector<128xf32> to vector<1x128xf32>
    %545 = vector.broadcast %544 : vector<1x128xf32> to vector<16x128xf32>
    %546 = arith.mulf %541, %545 : vector<16x128xf32>
    %547 = arith.addf %543, %546 : vector<16x128xf32>
    %c15_i32_179 = arith.constant 15 : i32
    %548 = tpu.dynamic_rotate %541 by %c15_i32_179 dim 0 : vector<16x128xf32>, i32 -> vector<16x128xf32>
    %549 = arith.mulf %548, %39 : vector<16x128xf32>
    %550 = arith.addf %547, %549 : vector<16x128xf32>
    %c0_180 = arith.constant 0 : index
    %c8_181 = arith.constant 8 : index
    %c0_182 = arith.constant 0 : index
    %c0_183 = arith.constant 0 : index
    %551 = vector.load %arg2[%c0_180, %c8_181, %c0_182, %c0_183] : memref<1x16x16x128xf32, #tpu.memory_space<vmem>>, vector<1x1x16x128xf32>
    %552 = vector.shape_cast %551 : vector<1x1x16x128xf32> to vector<16x128xf32>
    %c1_i32_184 = arith.constant 1 : i32
    %553 = tpu.dynamic_rotate %552 by %c1_i32_184 dim 0 : vector<16x128xf32>, i32 -> vector<16x128xf32>
    %554 = arith.mulf %553, %22 : vector<16x128xf32>
    %555 = arith.mulf %553, %54 : vector<16x128xf32>
    %556 = arith.addf %550, %555 : vector<16x128xf32>
    %557 = vector.shape_cast %24 : vector<128xf32> to vector<1x128xf32>
    %558 = vector.broadcast %557 : vector<1x128xf32> to vector<16x128xf32>
    %559 = arith.mulf %552, %558 : vector<16x128xf32>
    %560 = arith.addf %554, %559 : vector<16x128xf32>
    %561 = vector.shape_cast %56 : vector<128xf32> to vector<1x128xf32>
    %562 = vector.broadcast %561 : vector<1x128xf32> to vector<16x128xf32>
    %563 = arith.mulf %552, %562 : vector<16x128xf32>
    %564 = arith.addf %556, %563 : vector<16x128xf32>
    %c15_i32_185 = arith.constant 15 : i32
    %565 = tpu.dynamic_rotate %552 by %c15_i32_185 dim 0 : vector<16x128xf32>, i32 -> vector<16x128xf32>
    %566 = arith.mulf %565, %39 : vector<16x128xf32>
    %567 = arith.addf %560, %566 : vector<16x128xf32>
    %568 = arith.mulf %565, %71 : vector<16x128xf32>
    %569 = arith.addf %564, %568 : vector<16x128xf32>
    %c0_186 = arith.constant 0 : index
    %c9 = arith.constant 9 : index
    %c0_187 = arith.constant 0 : index
    %c0_188 = arith.constant 0 : index
    %570 = vector.load %arg2[%c0_186, %c9, %c0_187, %c0_188] : memref<1x16x16x128xf32, #tpu.memory_space<vmem>>, vector<1x1x16x128xf32>
    %571 = vector.shape_cast %570 : vector<1x1x16x128xf32> to vector<16x128xf32>
    %c1_i32_189 = arith.constant 1 : i32
    %572 = tpu.dynamic_rotate %571 by %c1_i32_189 dim 0 : vector<16x128xf32>, i32 -> vector<16x128xf32>
    %573 = arith.mulf %572, %22 : vector<16x128xf32>
    %574 = arith.mulf %572, %54 : vector<16x128xf32>
    %575 = arith.addf %567, %574 : vector<16x128xf32>
    %576 = arith.mulf %572, %86 : vector<16x128xf32>
    %577 = arith.addf %569, %576 : vector<16x128xf32>
    %578 = vector.shape_cast %24 : vector<128xf32> to vector<1x128xf32>
    %579 = vector.broadcast %578 : vector<1x128xf32> to vector<16x128xf32>
    %580 = arith.mulf %571, %579 : vector<16x128xf32>
    %581 = arith.addf %573, %580 : vector<16x128xf32>
    %582 = vector.shape_cast %56 : vector<128xf32> to vector<1x128xf32>
    %583 = vector.broadcast %582 : vector<1x128xf32> to vector<16x128xf32>
    %584 = arith.mulf %571, %583 : vector<16x128xf32>
    %585 = arith.addf %575, %584 : vector<16x128xf32>
    %586 = vector.shape_cast %88 : vector<128xf32> to vector<1x128xf32>
    %587 = vector.broadcast %586 : vector<1x128xf32> to vector<16x128xf32>
    %588 = arith.mulf %571, %587 : vector<16x128xf32>
    %589 = arith.addf %577, %588 : vector<16x128xf32>
    %c15_i32_190 = arith.constant 15 : i32
    %590 = tpu.dynamic_rotate %571 by %c15_i32_190 dim 0 : vector<16x128xf32>, i32 -> vector<16x128xf32>
    %591 = arith.mulf %590, %39 : vector<16x128xf32>
    %592 = arith.addf %581, %591 : vector<16x128xf32>
    %593 = arith.mulf %590, %71 : vector<16x128xf32>
    %594 = arith.addf %585, %593 : vector<16x128xf32>
    %595 = arith.mulf %590, %103 : vector<16x128xf32>
    %596 = arith.addf %589, %595 : vector<16x128xf32>
    %c0_191 = arith.constant 0 : index
    %c10 = arith.constant 10 : index
    %c0_192 = arith.constant 0 : index
    %c0_193 = arith.constant 0 : index
    %597 = vector.load %arg2[%c0_191, %c10, %c0_192, %c0_193] : memref<1x16x16x128xf32, #tpu.memory_space<vmem>>, vector<1x1x16x128xf32>
    %598 = vector.shape_cast %597 : vector<1x1x16x128xf32> to vector<16x128xf32>
    %c1_i32_194 = arith.constant 1 : i32
    %599 = tpu.dynamic_rotate %598 by %c1_i32_194 dim 0 : vector<16x128xf32>, i32 -> vector<16x128xf32>
    %600 = arith.mulf %599, %22 : vector<16x128xf32>
    %601 = arith.mulf %599, %54 : vector<16x128xf32>
    %602 = arith.addf %592, %601 : vector<16x128xf32>
    %603 = arith.mulf %599, %86 : vector<16x128xf32>
    %604 = arith.addf %594, %603 : vector<16x128xf32>
    %605 = vector.shape_cast %24 : vector<128xf32> to vector<1x128xf32>
    %606 = vector.broadcast %605 : vector<1x128xf32> to vector<16x128xf32>
    %607 = arith.mulf %598, %606 : vector<16x128xf32>
    %608 = arith.addf %600, %607 : vector<16x128xf32>
    %609 = vector.shape_cast %56 : vector<128xf32> to vector<1x128xf32>
    %610 = vector.broadcast %609 : vector<1x128xf32> to vector<16x128xf32>
    %611 = arith.mulf %598, %610 : vector<16x128xf32>
    %612 = arith.addf %602, %611 : vector<16x128xf32>
    %613 = vector.shape_cast %88 : vector<128xf32> to vector<1x128xf32>
    %614 = vector.broadcast %613 : vector<1x128xf32> to vector<16x128xf32>
    %615 = arith.mulf %598, %614 : vector<16x128xf32>
    %616 = arith.addf %604, %615 : vector<16x128xf32>
    %c15_i32_195 = arith.constant 15 : i32
    %617 = tpu.dynamic_rotate %598 by %c15_i32_195 dim 0 : vector<16x128xf32>, i32 -> vector<16x128xf32>
    %618 = arith.mulf %617, %39 : vector<16x128xf32>
    %619 = arith.addf %608, %618 : vector<16x128xf32>
    %620 = arith.mulf %617, %71 : vector<16x128xf32>
    %621 = arith.addf %612, %620 : vector<16x128xf32>
    %622 = arith.mulf %617, %103 : vector<16x128xf32>
    %623 = arith.addf %616, %622 : vector<16x128xf32>
    %c0_196 = arith.constant 0 : index
    %c11 = arith.constant 11 : index
    %c0_197 = arith.constant 0 : index
    %c0_198 = arith.constant 0 : index
    %624 = vector.load %arg2[%c0_196, %c11, %c0_197, %c0_198] : memref<1x16x16x128xf32, #tpu.memory_space<vmem>>, vector<1x1x16x128xf32>
    %625 = vector.shape_cast %624 : vector<1x1x16x128xf32> to vector<16x128xf32>
    %c1_i32_199 = arith.constant 1 : i32
    %626 = tpu.dynamic_rotate %625 by %c1_i32_199 dim 0 : vector<16x128xf32>, i32 -> vector<16x128xf32>
    %627 = arith.mulf %626, %22 : vector<16x128xf32>
    %628 = arith.mulf %626, %54 : vector<16x128xf32>
    %629 = arith.addf %619, %628 : vector<16x128xf32>
    %630 = arith.mulf %626, %86 : vector<16x128xf32>
    %631 = arith.addf %621, %630 : vector<16x128xf32>
    %632 = vector.shape_cast %24 : vector<128xf32> to vector<1x128xf32>
    %633 = vector.broadcast %632 : vector<1x128xf32> to vector<16x128xf32>
    %634 = arith.mulf %625, %633 : vector<16x128xf32>
    %635 = arith.addf %627, %634 : vector<16x128xf32>
    %636 = vector.shape_cast %56 : vector<128xf32> to vector<1x128xf32>
    %637 = vector.broadcast %636 : vector<1x128xf32> to vector<16x128xf32>
    %638 = arith.mulf %625, %637 : vector<16x128xf32>
    %639 = arith.addf %629, %638 : vector<16x128xf32>
    %640 = vector.shape_cast %88 : vector<128xf32> to vector<1x128xf32>
    %641 = vector.broadcast %640 : vector<1x128xf32> to vector<16x128xf32>
    %642 = arith.mulf %625, %641 : vector<16x128xf32>
    %643 = arith.addf %631, %642 : vector<16x128xf32>
    %c15_i32_200 = arith.constant 15 : i32
    %644 = tpu.dynamic_rotate %625 by %c15_i32_200 dim 0 : vector<16x128xf32>, i32 -> vector<16x128xf32>
    %645 = arith.mulf %644, %39 : vector<16x128xf32>
    %646 = arith.addf %635, %645 : vector<16x128xf32>
    %647 = arith.mulf %644, %71 : vector<16x128xf32>
    %648 = arith.addf %639, %647 : vector<16x128xf32>
    %649 = arith.mulf %644, %103 : vector<16x128xf32>
    %650 = arith.addf %643, %649 : vector<16x128xf32>
    %c0_201 = arith.constant 0 : index
    %c12 = arith.constant 12 : index
    %c0_202 = arith.constant 0 : index
    %c0_203 = arith.constant 0 : index
    %651 = vector.load %arg2[%c0_201, %c12, %c0_202, %c0_203] : memref<1x16x16x128xf32, #tpu.memory_space<vmem>>, vector<1x1x16x128xf32>
    %652 = vector.shape_cast %651 : vector<1x1x16x128xf32> to vector<16x128xf32>
    %c1_i32_204 = arith.constant 1 : i32
    %653 = tpu.dynamic_rotate %652 by %c1_i32_204 dim 0 : vector<16x128xf32>, i32 -> vector<16x128xf32>
    %654 = arith.mulf %653, %22 : vector<16x128xf32>
    %655 = arith.mulf %653, %54 : vector<16x128xf32>
    %656 = arith.addf %646, %655 : vector<16x128xf32>
    %657 = arith.mulf %653, %86 : vector<16x128xf32>
    %658 = arith.addf %648, %657 : vector<16x128xf32>
    %659 = vector.shape_cast %24 : vector<128xf32> to vector<1x128xf32>
    %660 = vector.broadcast %659 : vector<1x128xf32> to vector<16x128xf32>
    %661 = arith.mulf %652, %660 : vector<16x128xf32>
    %662 = arith.addf %654, %661 : vector<16x128xf32>
    %663 = vector.shape_cast %56 : vector<128xf32> to vector<1x128xf32>
    %664 = vector.broadcast %663 : vector<1x128xf32> to vector<16x128xf32>
    %665 = arith.mulf %652, %664 : vector<16x128xf32>
    %666 = arith.addf %656, %665 : vector<16x128xf32>
    %667 = vector.shape_cast %88 : vector<128xf32> to vector<1x128xf32>
    %668 = vector.broadcast %667 : vector<1x128xf32> to vector<16x128xf32>
    %669 = arith.mulf %652, %668 : vector<16x128xf32>
    %670 = arith.addf %658, %669 : vector<16x128xf32>
    %c15_i32_205 = arith.constant 15 : i32
    %671 = tpu.dynamic_rotate %652 by %c15_i32_205 dim 0 : vector<16x128xf32>, i32 -> vector<16x128xf32>
    %672 = arith.mulf %671, %39 : vector<16x128xf32>
    %673 = arith.addf %662, %672 : vector<16x128xf32>
    %674 = arith.mulf %671, %71 : vector<16x128xf32>
    %675 = arith.addf %666, %674 : vector<16x128xf32>
    %676 = arith.mulf %671, %103 : vector<16x128xf32>
    %677 = arith.addf %670, %676 : vector<16x128xf32>
    %c0_206 = arith.constant 0 : index
    %c13 = arith.constant 13 : index
    %c0_207 = arith.constant 0 : index
    %c0_208 = arith.constant 0 : index
    %678 = vector.load %arg2[%c0_206, %c13, %c0_207, %c0_208] : memref<1x16x16x128xf32, #tpu.memory_space<vmem>>, vector<1x1x16x128xf32>
    %679 = vector.shape_cast %678 : vector<1x1x16x128xf32> to vector<16x128xf32>
    %c1_i32_209 = arith.constant 1 : i32
    %680 = tpu.dynamic_rotate %679 by %c1_i32_209 dim 0 : vector<16x128xf32>, i32 -> vector<16x128xf32>
    %681 = arith.mulf %680, %22 : vector<16x128xf32>
    %682 = arith.mulf %680, %54 : vector<16x128xf32>
    %683 = arith.addf %673, %682 : vector<16x128xf32>
    %684 = arith.mulf %680, %86 : vector<16x128xf32>
    %685 = arith.addf %675, %684 : vector<16x128xf32>
    %686 = vector.shape_cast %24 : vector<128xf32> to vector<1x128xf32>
    %687 = vector.broadcast %686 : vector<1x128xf32> to vector<16x128xf32>
    %688 = arith.mulf %679, %687 : vector<16x128xf32>
    %689 = arith.addf %681, %688 : vector<16x128xf32>
    %690 = vector.shape_cast %56 : vector<128xf32> to vector<1x128xf32>
    %691 = vector.broadcast %690 : vector<1x128xf32> to vector<16x128xf32>
    %692 = arith.mulf %679, %691 : vector<16x128xf32>
    %693 = arith.addf %683, %692 : vector<16x128xf32>
    %694 = vector.shape_cast %88 : vector<128xf32> to vector<1x128xf32>
    %695 = vector.broadcast %694 : vector<1x128xf32> to vector<16x128xf32>
    %696 = arith.mulf %679, %695 : vector<16x128xf32>
    %697 = arith.addf %685, %696 : vector<16x128xf32>
    %c15_i32_210 = arith.constant 15 : i32
    %698 = tpu.dynamic_rotate %679 by %c15_i32_210 dim 0 : vector<16x128xf32>, i32 -> vector<16x128xf32>
    %699 = arith.mulf %698, %39 : vector<16x128xf32>
    %700 = arith.addf %689, %699 : vector<16x128xf32>
    %701 = arith.mulf %698, %71 : vector<16x128xf32>
    %702 = arith.addf %693, %701 : vector<16x128xf32>
    %703 = arith.mulf %698, %103 : vector<16x128xf32>
    %704 = arith.addf %697, %703 : vector<16x128xf32>
    %c0_211 = arith.constant 0 : index
    %c14 = arith.constant 14 : index
    %c0_212 = arith.constant 0 : index
    %c0_213 = arith.constant 0 : index
    %705 = vector.load %arg2[%c0_211, %c14, %c0_212, %c0_213] : memref<1x16x16x128xf32, #tpu.memory_space<vmem>>, vector<1x1x16x128xf32>
    %706 = vector.shape_cast %705 : vector<1x1x16x128xf32> to vector<16x128xf32>
    %c1_i32_214 = arith.constant 1 : i32
    %707 = tpu.dynamic_rotate %706 by %c1_i32_214 dim 0 : vector<16x128xf32>, i32 -> vector<16x128xf32>
    %708 = arith.mulf %707, %22 : vector<16x128xf32>
    %709 = arith.mulf %707, %54 : vector<16x128xf32>
    %710 = arith.addf %700, %709 : vector<16x128xf32>
    %711 = arith.mulf %707, %86 : vector<16x128xf32>
    %712 = arith.addf %702, %711 : vector<16x128xf32>
    %713 = vector.shape_cast %24 : vector<128xf32> to vector<1x128xf32>
    %714 = vector.broadcast %713 : vector<1x128xf32> to vector<16x128xf32>
    %715 = arith.mulf %706, %714 : vector<16x128xf32>
    %716 = arith.addf %708, %715 : vector<16x128xf32>
    %717 = vector.shape_cast %56 : vector<128xf32> to vector<1x128xf32>
    %718 = vector.broadcast %717 : vector<1x128xf32> to vector<16x128xf32>
    %719 = arith.mulf %706, %718 : vector<16x128xf32>
    %720 = arith.addf %710, %719 : vector<16x128xf32>
    %721 = vector.shape_cast %88 : vector<128xf32> to vector<1x128xf32>
    %722 = vector.broadcast %721 : vector<1x128xf32> to vector<16x128xf32>
    %723 = arith.mulf %706, %722 : vector<16x128xf32>
    %724 = arith.addf %712, %723 : vector<16x128xf32>
    %c15_i32_215 = arith.constant 15 : i32
    %725 = tpu.dynamic_rotate %706 by %c15_i32_215 dim 0 : vector<16x128xf32>, i32 -> vector<16x128xf32>
    %726 = arith.mulf %725, %39 : vector<16x128xf32>
    %727 = arith.addf %716, %726 : vector<16x128xf32>
    %728 = arith.mulf %725, %71 : vector<16x128xf32>
    %729 = arith.addf %720, %728 : vector<16x128xf32>
    %730 = arith.mulf %725, %103 : vector<16x128xf32>
    %731 = arith.addf %724, %730 : vector<16x128xf32>
    %c0_216 = arith.constant 0 : index
    %c15 = arith.constant 15 : index
    %c0_217 = arith.constant 0 : index
    %c0_218 = arith.constant 0 : index
    %732 = vector.load %arg2[%c0_216, %c15, %c0_217, %c0_218] : memref<1x16x16x128xf32, #tpu.memory_space<vmem>>, vector<1x1x16x128xf32>
    %733 = vector.shape_cast %732 : vector<1x1x16x128xf32> to vector<16x128xf32>
    %c1_i32_219 = arith.constant 1 : i32
    %734 = tpu.dynamic_rotate %733 by %c1_i32_219 dim 0 : vector<16x128xf32>, i32 -> vector<16x128xf32>
    %735 = arith.mulf %734, %54 : vector<16x128xf32>
    %736 = arith.addf %727, %735 : vector<16x128xf32>
    %737 = arith.mulf %734, %86 : vector<16x128xf32>
    %738 = arith.addf %729, %737 : vector<16x128xf32>
    %739 = vector.shape_cast %56 : vector<128xf32> to vector<1x128xf32>
    %740 = vector.broadcast %739 : vector<1x128xf32> to vector<16x128xf32>
    %741 = arith.mulf %733, %740 : vector<16x128xf32>
    %742 = arith.addf %736, %741 : vector<16x128xf32>
    %743 = vector.shape_cast %88 : vector<128xf32> to vector<1x128xf32>
    %744 = vector.broadcast %743 : vector<1x128xf32> to vector<16x128xf32>
    %745 = arith.mulf %733, %744 : vector<16x128xf32>
    %746 = arith.addf %738, %745 : vector<16x128xf32>
    %c15_i32_220 = arith.constant 15 : i32
    %747 = tpu.dynamic_rotate %733 by %c15_i32_220 dim 0 : vector<16x128xf32>, i32 -> vector<16x128xf32>
    %748 = arith.mulf %747, %71 : vector<16x128xf32>
    %749 = arith.addf %742, %748 : vector<16x128xf32>
    %750 = arith.mulf %747, %103 : vector<16x128xf32>
    %751 = arith.addf %746, %750 : vector<16x128xf32>
    %752 = vector.shape_cast %2 : vector<128xf32> to vector<1x128xf32>
    %753 = vector.broadcast %752 : vector<1x128xf32> to vector<16x128xf32>
    %754 = arith.addf %596, %753 : vector<16x128xf32>
    %cst_221 = arith.constant 5.000000e-01 : f32
    %755 = vector.broadcast %cst_221 : f32 to vector<16x128xf32>
    %756 = arith.mulf %755, %754 : vector<16x128xf32>
    %cst_222 = arith.constant 4.471500e-02 : f32
    %757 = vector.broadcast %cst_222 : f32 to vector<16x128xf32>
    %758 = arith.mulf %757, %754 : vector<16x128xf32>
    %759 = arith.mulf %758, %754 : vector<16x128xf32>
    %760 = arith.mulf %759, %754 : vector<16x128xf32>
    %761 = arith.addf %754, %760 : vector<16x128xf32>
    %cst_223 = arith.constant 0.797884583 : f32
    %762 = vector.broadcast %cst_223 : f32 to vector<16x128xf32>
    %763 = arith.mulf %762, %761 : vector<16x128xf32>
    %764 = math.tanh %763 : vector<16x128xf32>
    %cst_224 = arith.constant 1.000000e+00 : f32
    %765 = vector.broadcast %cst_224 : f32 to vector<16x128xf32>
    %766 = arith.addf %765, %764 : vector<16x128xf32>
    %767 = arith.mulf %756, %766 : vector<16x128xf32>
    %768 = vector.shape_cast %4 : vector<128xf32> to vector<1x128xf32>
    %769 = vector.broadcast %768 : vector<1x128xf32> to vector<16x128xf32>
    %770 = arith.mulf %767, %769 : vector<16x128xf32>
    %771 = vector.shape_cast %6 : vector<128xf32> to vector<1x128xf32>
    %772 = vector.broadcast %771 : vector<1x128xf32> to vector<16x128xf32>
    %773 = arith.addf %770, %772 : vector<16x128xf32>
    %c0_225 = arith.constant 0 : index
    %c8_226 = arith.constant 8 : index
    %c0_227 = arith.constant 0 : index
    %c0_228 = arith.constant 0 : index
    %774 = vector.load %arg2[%c0_225, %c8_226, %c0_227, %c0_228] : memref<1x16x16x128xf32, #tpu.memory_space<vmem>>, vector<1x1x16x128xf32>
    %775 = vector.shape_cast %774 : vector<1x1x16x128xf32> to vector<16x128xf32>
    %776 = arith.addf %773, %775 : vector<16x128xf32>
    %c0_229 = arith.constant 0 : index
    %c8_230 = arith.constant 8 : index
    %c0_231 = arith.constant 0 : index
    %c0_232 = arith.constant 0 : index
    %777 = vector.load %arg7[%c0_229, %c8_230, %c0_231, %c0_232] : memref<1x16x16x128xf32, #tpu.memory_space<vmem>>, vector<1x1x16x128xf32>
    %778 = vector.shape_cast %777 : vector<1x1x16x128xf32> to vector<16x128xf32>
    %779 = vector.shape_cast %776 : vector<16x128xf32> to vector<1x1x16x128xf32>
    tpu.vector_store %arg7[%c0_229, %c8_230, %c0_231, %c0_232], %779 {strides = array<i32>} : memref<1x16x16x128xf32, #tpu.memory_space<vmem>>, vector<1x1x16x128xf32>,
    %780 = vector.shape_cast %2 : vector<128xf32> to vector<1x128xf32>
    %781 = vector.broadcast %780 : vector<1x128xf32> to vector<16x128xf32>
    %782 = arith.addf %623, %781 : vector<16x128xf32>
    %cst_233 = arith.constant 5.000000e-01 : f32
    %783 = vector.broadcast %cst_233 : f32 to vector<16x128xf32>
    %784 = arith.mulf %783, %782 : vector<16x128xf32>
    %cst_234 = arith.constant 4.471500e-02 : f32
    %785 = vector.broadcast %cst_234 : f32 to vector<16x128xf32>
    %786 = arith.mulf %785, %782 : vector<16x128xf32>
    %787 = arith.mulf %786, %782 : vector<16x128xf32>
    %788 = arith.mulf %787, %782 : vector<16x128xf32>
    %789 = arith.addf %782, %788 : vector<16x128xf32>
    %cst_235 = arith.constant 0.797884583 : f32
    %790 = vector.broadcast %cst_235 : f32 to vector<16x128xf32>
    %791 = arith.mulf %790, %789 : vector<16x128xf32>
    %792 = math.tanh %791 : vector<16x128xf32>
    %cst_236 = arith.constant 1.000000e+00 : f32
    %793 = vector.broadcast %cst_236 : f32 to vector<16x128xf32>
    %794 = arith.addf %793, %792 : vector<16x128xf32>
    %795 = arith.mulf %784, %794 : vector<16x128xf32>
    %796 = vector.shape_cast %4 : vector<128xf32> to vector<1x128xf32>
    %797 = vector.broadcast %796 : vector<1x128xf32> to vector<16x128xf32>
    %798 = arith.mulf %795, %797 : vector<16x128xf32>
    %799 = vector.shape_cast %6 : vector<128xf32> to vector<1x128xf32>
    %800 = vector.broadcast %799 : vector<1x128xf32> to vector<16x128xf32>
    %801 = arith.addf %798, %800 : vector<16x128xf32>
    %c0_237 = arith.constant 0 : index
    %c9_238 = arith.constant 9 : index
    %c0_239 = arith.constant 0 : index
    %c0_240 = arith.constant 0 : index
    %802 = vector.load %arg2[%c0_237, %c9_238, %c0_239, %c0_240] : memref<1x16x16x128xf32, #tpu.memory_space<vmem>>, vector<1x1x16x128xf32>
    %803 = vector.shape_cast %802 : vector<1x1x16x128xf32> to vector<16x128xf32>
    %804 = arith.addf %801, %803 : vector<16x128xf32>
    %c0_241 = arith.constant 0 : index
    %c9_242 = arith.constant 9 : index
    %c0_243 = arith.constant 0 : index
    %c0_244 = arith.constant 0 : index
    %805 = vector.load %arg7[%c0_241, %c9_242, %c0_243, %c0_244] : memref<1x16x16x128xf32, #tpu.memory_space<vmem>>, vector<1x1x16x128xf32>
    %806 = vector.shape_cast %805 : vector<1x1x16x128xf32> to vector<16x128xf32>
    %807 = vector.shape_cast %804 : vector<16x128xf32> to vector<1x1x16x128xf32>
    tpu.vector_store %arg7[%c0_241, %c9_242, %c0_243, %c0_244], %807 {strides = array<i32>} : memref<1x16x16x128xf32, #tpu.memory_space<vmem>>, vector<1x1x16x128xf32>,
    %808 = vector.shape_cast %2 : vector<128xf32> to vector<1x128xf32>
    %809 = vector.broadcast %808 : vector<1x128xf32> to vector<16x128xf32>
    %810 = arith.addf %650, %809 : vector<16x128xf32>
    %cst_245 = arith.constant 5.000000e-01 : f32
    %811 = vector.broadcast %cst_245 : f32 to vector<16x128xf32>
    %812 = arith.mulf %811, %810 : vector<16x128xf32>
    %cst_246 = arith.constant 4.471500e-02 : f32
    %813 = vector.broadcast %cst_246 : f32 to vector<16x128xf32>
    %814 = arith.mulf %813, %810 : vector<16x128xf32>
    %815 = arith.mulf %814, %810 : vector<16x128xf32>
    %816 = arith.mulf %815, %810 : vector<16x128xf32>
    %817 = arith.addf %810, %816 : vector<16x128xf32>
    %cst_247 = arith.constant 0.797884583 : f32
    %818 = vector.broadcast %cst_247 : f32 to vector<16x128xf32>
    %819 = arith.mulf %818, %817 : vector<16x128xf32>
    %820 = math.tanh %819 : vector<16x128xf32>
    %cst_248 = arith.constant 1.000000e+00 : f32
    %821 = vector.broadcast %cst_248 : f32 to vector<16x128xf32>
    %822 = arith.addf %821, %820 : vector<16x128xf32>
    %823 = arith.mulf %812, %822 : vector<16x128xf32>
    %824 = vector.shape_cast %4 : vector<128xf32> to vector<1x128xf32>
    %825 = vector.broadcast %824 : vector<1x128xf32> to vector<16x128xf32>
    %826 = arith.mulf %823, %825 : vector<16x128xf32>
    %827 = vector.shape_cast %6 : vector<128xf32> to vector<1x128xf32>
    %828 = vector.broadcast %827 : vector<1x128xf32> to vector<16x128xf32>
    %829 = arith.addf %826, %828 : vector<16x128xf32>
    %c0_249 = arith.constant 0 : index
    %c10_250 = arith.constant 10 : index
    %c0_251 = arith.constant 0 : index
    %c0_252 = arith.constant 0 : index
    %830 = vector.load %arg2[%c0_249, %c10_250, %c0_251, %c0_252] : memref<1x16x16x128xf32, #tpu.memory_space<vmem>>, vector<1x1x16x128xf32>
    %831 = vector.shape_cast %830 : vector<1x1x16x128xf32> to vector<16x128xf32>
    %832 = arith.addf %829, %831 : vector<16x128xf32>
    %c0_253 = arith.constant 0 : index
    %c10_254 = arith.constant 10 : index
    %c0_255 = arith.constant 0 : index
    %c0_256 = arith.constant 0 : index
    %833 = vector.load %arg7[%c0_253, %c10_254, %c0_255, %c0_256] : memref<1x16x16x128xf32, #tpu.memory_space<vmem>>, vector<1x1x16x128xf32>
    %834 = vector.shape_cast %833 : vector<1x1x16x128xf32> to vector<16x128xf32>
    %835 = vector.shape_cast %832 : vector<16x128xf32> to vector<1x1x16x128xf32>
    tpu.vector_store %arg7[%c0_253, %c10_254, %c0_255, %c0_256], %835 {strides = array<i32>} : memref<1x16x16x128xf32, #tpu.memory_space<vmem>>, vector<1x1x16x128xf32>,
    %836 = vector.shape_cast %2 : vector<128xf32> to vector<1x128xf32>
    %837 = vector.broadcast %836 : vector<1x128xf32> to vector<16x128xf32>
    %838 = arith.addf %677, %837 : vector<16x128xf32>
    %cst_257 = arith.constant 5.000000e-01 : f32
    %839 = vector.broadcast %cst_257 : f32 to vector<16x128xf32>
    %840 = arith.mulf %839, %838 : vector<16x128xf32>
    %cst_258 = arith.constant 4.471500e-02 : f32
    %841 = vector.broadcast %cst_258 : f32 to vector<16x128xf32>
    %842 = arith.mulf %841, %838 : vector<16x128xf32>
    %843 = arith.mulf %842, %838 : vector<16x128xf32>
    %844 = arith.mulf %843, %838 : vector<16x128xf32>
    %845 = arith.addf %838, %844 : vector<16x128xf32>
    %cst_259 = arith.constant 0.797884583 : f32
    %846 = vector.broadcast %cst_259 : f32 to vector<16x128xf32>
    %847 = arith.mulf %846, %845 : vector<16x128xf32>
    %848 = math.tanh %847 : vector<16x128xf32>
    %cst_260 = arith.constant 1.000000e+00 : f32
    %849 = vector.broadcast %cst_260 : f32 to vector<16x128xf32>
    %850 = arith.addf %849, %848 : vector<16x128xf32>
    %851 = arith.mulf %840, %850 : vector<16x128xf32>
    %852 = vector.shape_cast %4 : vector<128xf32> to vector<1x128xf32>
    %853 = vector.broadcast %852 : vector<1x128xf32> to vector<16x128xf32>
    %854 = arith.mulf %851, %853 : vector<16x128xf32>
    %855 = vector.shape_cast %6 : vector<128xf32> to vector<1x128xf32>
    %856 = vector.broadcast %855 : vector<1x128xf32> to vector<16x128xf32>
    %857 = arith.addf %854, %856 : vector<16x128xf32>
    %c0_261 = arith.constant 0 : index
    %c11_262 = arith.constant 11 : index
    %c0_263 = arith.constant 0 : index
    %c0_264 = arith.constant 0 : index
    %858 = vector.load %arg2[%c0_261, %c11_262, %c0_263, %c0_264] : memref<1x16x16x128xf32, #tpu.memory_space<vmem>>, vector<1x1x16x128xf32>
    %859 = vector.shape_cast %858 : vector<1x1x16x128xf32> to vector<16x128xf32>
    %860 = arith.addf %857, %859 : vector<16x128xf32>
    %c0_265 = arith.constant 0 : index
    %c11_266 = arith.constant 11 : index
    %c0_267 = arith.constant 0 : index
    %c0_268 = arith.constant 0 : index
    %861 = vector.load %arg7[%c0_265, %c11_266, %c0_267, %c0_268] : memref<1x16x16x128xf32, #tpu.memory_space<vmem>>, vector<1x1x16x128xf32>
    %862 = vector.shape_cast %861 : vector<1x1x16x128xf32> to vector<16x128xf32>
    %863 = vector.shape_cast %860 : vector<16x128xf32> to vector<1x1x16x128xf32>
    tpu.vector_store %arg7[%c0_265, %c11_266, %c0_267, %c0_268], %863 {strides = array<i32>} : memref<1x16x16x128xf32, #tpu.memory_space<vmem>>, vector<1x1x16x128xf32>,
    %864 = vector.shape_cast %2 : vector<128xf32> to vector<1x128xf32>
    %865 = vector.broadcast %864 : vector<1x128xf32> to vector<16x128xf32>
    %866 = arith.addf %704, %865 : vector<16x128xf32>
    %cst_269 = arith.constant 5.000000e-01 : f32
    %867 = vector.broadcast %cst_269 : f32 to vector<16x128xf32>
    %868 = arith.mulf %867, %866 : vector<16x128xf32>
    %cst_270 = arith.constant 4.471500e-02 : f32
    %869 = vector.broadcast %cst_270 : f32 to vector<16x128xf32>
    %870 = arith.mulf %869, %866 : vector<16x128xf32>
    %871 = arith.mulf %870, %866 : vector<16x128xf32>
    %872 = arith.mulf %871, %866 : vector<16x128xf32>
    %873 = arith.addf %866, %872 : vector<16x128xf32>
    %cst_271 = arith.constant 0.797884583 : f32
    %874 = vector.broadcast %cst_271 : f32 to vector<16x128xf32>
    %875 = arith.mulf %874, %873 : vector<16x128xf32>
    %876 = math.tanh %875 : vector<16x128xf32>
    %cst_272 = arith.constant 1.000000e+00 : f32
    %877 = vector.broadcast %cst_272 : f32 to vector<16x128xf32>
    %878 = arith.addf %877, %876 : vector<16x128xf32>
    %879 = arith.mulf %868, %878 : vector<16x128xf32>
    %880 = vector.shape_cast %4 : vector<128xf32> to vector<1x128xf32>
    %881 = vector.broadcast %880 : vector<1x128xf32> to vector<16x128xf32>
    %882 = arith.mulf %879, %881 : vector<16x128xf32>
    %883 = vector.shape_cast %6 : vector<128xf32> to vector<1x128xf32>
    %884 = vector.broadcast %883 : vector<1x128xf32> to vector<16x128xf32>
    %885 = arith.addf %882, %884 : vector<16x128xf32>
    %c0_273 = arith.constant 0 : index
    %c12_274 = arith.constant 12 : index
    %c0_275 = arith.constant 0 : index
    %c0_276 = arith.constant 0 : index
    %886 = vector.load %arg2[%c0_273, %c12_274, %c0_275, %c0_276] : memref<1x16x16x128xf32, #tpu.memory_space<vmem>>, vector<1x1x16x128xf32>
    %887 = vector.shape_cast %886 : vector<1x1x16x128xf32> to vector<16x128xf32>
    %888 = arith.addf %885, %887 : vector<16x128xf32>
    %c0_277 = arith.constant 0 : index
    %c12_278 = arith.constant 12 : index
    %c0_279 = arith.constant 0 : index
    %c0_280 = arith.constant 0 : index
    %889 = vector.load %arg7[%c0_277, %c12_278, %c0_279, %c0_280] : memref<1x16x16x128xf32, #tpu.memory_space<vmem>>, vector<1x1x16x128xf32>
    %890 = vector.shape_cast %889 : vector<1x1x16x128xf32> to vector<16x128xf32>
    %891 = vector.shape_cast %888 : vector<16x128xf32> to vector<1x1x16x128xf32>
    tpu.vector_store %arg7[%c0_277, %c12_278, %c0_279, %c0_280], %891 {strides = array<i32>} : memref<1x16x16x128xf32, #tpu.memory_space<vmem>>, vector<1x1x16x128xf32>,
    %892 = vector.shape_cast %2 : vector<128xf32> to vector<1x128xf32>
    %893 = vector.broadcast %892 : vector<1x128xf32> to vector<16x128xf32>
    %894 = arith.addf %731, %893 : vector<16x128xf32>
    %cst_281 = arith.constant 5.000000e-01 : f32
    %895 = vector.broadcast %cst_281 : f32 to vector<16x128xf32>
    %896 = arith.mulf %895, %894 : vector<16x128xf32>
    %cst_282 = arith.constant 4.471500e-02 : f32
    %897 = vector.broadcast %cst_282 : f32 to vector<16x128xf32>
    %898 = arith.mulf %897, %894 : vector<16x128xf32>
    %899 = arith.mulf %898, %894 : vector<16x128xf32>
    %900 = arith.mulf %899, %894 : vector<16x128xf32>
    %901 = arith.addf %894, %900 : vector<16x128xf32>
    %cst_283 = arith.constant 0.797884583 : f32
    %902 = vector.broadcast %cst_283 : f32 to vector<16x128xf32>
    %903 = arith.mulf %902, %901 : vector<16x128xf32>
    %904 = math.tanh %903 : vector<16x128xf32>
    %cst_284 = arith.constant 1.000000e+00 : f32
    %905 = vector.broadcast %cst_284 : f32 to vector<16x128xf32>
    %906 = arith.addf %905, %904 : vector<16x128xf32>
    %907 = arith.mulf %896, %906 : vector<16x128xf32>
    %908 = vector.shape_cast %4 : vector<128xf32> to vector<1x128xf32>
    %909 = vector.broadcast %908 : vector<1x128xf32> to vector<16x128xf32>
    %910 = arith.mulf %907, %909 : vector<16x128xf32>
    %911 = vector.shape_cast %6 : vector<128xf32> to vector<1x128xf32>
    %912 = vector.broadcast %911 : vector<1x128xf32> to vector<16x128xf32>
    %913 = arith.addf %910, %912 : vector<16x128xf32>
    %c0_285 = arith.constant 0 : index
    %c13_286 = arith.constant 13 : index
    %c0_287 = arith.constant 0 : index
    %c0_288 = arith.constant 0 : index
    %914 = vector.load %arg2[%c0_285, %c13_286, %c0_287, %c0_288] : memref<1x16x16x128xf32, #tpu.memory_space<vmem>>, vector<1x1x16x128xf32>
    %915 = vector.shape_cast %914 : vector<1x1x16x128xf32> to vector<16x128xf32>
    %916 = arith.addf %913, %915 : vector<16x128xf32>
    %c0_289 = arith.constant 0 : index
    %c13_290 = arith.constant 13 : index
    %c0_291 = arith.constant 0 : index
    %c0_292 = arith.constant 0 : index
    %917 = vector.load %arg7[%c0_289, %c13_290, %c0_291, %c0_292] : memref<1x16x16x128xf32, #tpu.memory_space<vmem>>, vector<1x1x16x128xf32>
    %918 = vector.shape_cast %917 : vector<1x1x16x128xf32> to vector<16x128xf32>
    %919 = vector.shape_cast %916 : vector<16x128xf32> to vector<1x1x16x128xf32>
    tpu.vector_store %arg7[%c0_289, %c13_290, %c0_291, %c0_292], %919 {strides = array<i32>} : memref<1x16x16x128xf32, #tpu.memory_space<vmem>>, vector<1x1x16x128xf32>,
    %920 = vector.shape_cast %2 : vector<128xf32> to vector<1x128xf32>
    %921 = vector.broadcast %920 : vector<1x128xf32> to vector<16x128xf32>
    %922 = arith.addf %751, %921 : vector<16x128xf32>
    %cst_293 = arith.constant 5.000000e-01 : f32
    %923 = vector.broadcast %cst_293 : f32 to vector<16x128xf32>
    %924 = arith.mulf %923, %922 : vector<16x128xf32>
    %cst_294 = arith.constant 4.471500e-02 : f32
    %925 = vector.broadcast %cst_294 : f32 to vector<16x128xf32>
    %926 = arith.mulf %925, %922 : vector<16x128xf32>
    %927 = arith.mulf %926, %922 : vector<16x128xf32>
    %928 = arith.mulf %927, %922 : vector<16x128xf32>
    %929 = arith.addf %922, %928 : vector<16x128xf32>
    %cst_295 = arith.constant 0.797884583 : f32
    %930 = vector.broadcast %cst_295 : f32 to vector<16x128xf32>
    %931 = arith.mulf %930, %929 : vector<16x128xf32>
    %932 = math.tanh %931 : vector<16x128xf32>
    %cst_296 = arith.constant 1.000000e+00 : f32
    %933 = vector.broadcast %cst_296 : f32 to vector<16x128xf32>
    %934 = arith.addf %933, %932 : vector<16x128xf32>
    %935 = arith.mulf %924, %934 : vector<16x128xf32>
    %936 = vector.shape_cast %4 : vector<128xf32> to vector<1x128xf32>
    %937 = vector.broadcast %936 : vector<1x128xf32> to vector<16x128xf32>
    %938 = arith.mulf %935, %937 : vector<16x128xf32>
    %939 = vector.shape_cast %6 : vector<128xf32> to vector<1x128xf32>
    %940 = vector.broadcast %939 : vector<1x128xf32> to vector<16x128xf32>
    %941 = arith.addf %938, %940 : vector<16x128xf32>
    %c0_297 = arith.constant 0 : index
    %c14_298 = arith.constant 14 : index
    %c0_299 = arith.constant 0 : index
    %c0_300 = arith.constant 0 : index
    %942 = vector.load %arg2[%c0_297, %c14_298, %c0_299, %c0_300] : memref<1x16x16x128xf32, #tpu.memory_space<vmem>>, vector<1x1x16x128xf32>
    %943 = vector.shape_cast %942 : vector<1x1x16x128xf32> to vector<16x128xf32>
    %944 = arith.addf %941, %943 : vector<16x128xf32>
    %c0_301 = arith.constant 0 : index
    %c14_302 = arith.constant 14 : index
    %c0_303 = arith.constant 0 : index
    %c0_304 = arith.constant 0 : index
    %945 = vector.load %arg7[%c0_301, %c14_302, %c0_303, %c0_304] : memref<1x16x16x128xf32, #tpu.memory_space<vmem>>, vector<1x1x16x128xf32>
    %946 = vector.shape_cast %945 : vector<1x1x16x128xf32> to vector<16x128xf32>
    %947 = vector.shape_cast %944 : vector<16x128xf32> to vector<1x1x16x128xf32>
    tpu.vector_store %arg7[%c0_301, %c14_302, %c0_303, %c0_304], %947 {strides = array<i32>} : memref<1x16x16x128xf32, #tpu.memory_space<vmem>>, vector<1x1x16x128xf32>,
    %948 = vector.shape_cast %2 : vector<128xf32> to vector<1x128xf32>
    %949 = vector.broadcast %948 : vector<1x128xf32> to vector<16x128xf32>
    %950 = arith.addf %749, %949 : vector<16x128xf32>
    %cst_305 = arith.constant 5.000000e-01 : f32
    %951 = vector.broadcast %cst_305 : f32 to vector<16x128xf32>
    %952 = arith.mulf %951, %950 : vector<16x128xf32>
    %cst_306 = arith.constant 4.471500e-02 : f32
    %953 = vector.broadcast %cst_306 : f32 to vector<16x128xf32>
    %954 = arith.mulf %953, %950 : vector<16x128xf32>
    %955 = arith.mulf %954, %950 : vector<16x128xf32>
    %956 = arith.mulf %955, %950 : vector<16x128xf32>
    %957 = arith.addf %950, %956 : vector<16x128xf32>
    %cst_307 = arith.constant 0.797884583 : f32
    %958 = vector.broadcast %cst_307 : f32 to vector<16x128xf32>
    %959 = arith.mulf %958, %957 : vector<16x128xf32>
    %960 = math.tanh %959 : vector<16x128xf32>
    %cst_308 = arith.constant 1.000000e+00 : f32
    %961 = vector.broadcast %cst_308 : f32 to vector<16x128xf32>
    %962 = arith.addf %961, %960 : vector<16x128xf32>
    %963 = arith.mulf %952, %962 : vector<16x128xf32>
    %964 = vector.shape_cast %4 : vector<128xf32> to vector<1x128xf32>
    %965 = vector.broadcast %964 : vector<1x128xf32> to vector<16x128xf32>
    %966 = arith.mulf %963, %965 : vector<16x128xf32>
    %967 = vector.shape_cast %6 : vector<128xf32> to vector<1x128xf32>
    %968 = vector.broadcast %967 : vector<1x128xf32> to vector<16x128xf32>
    %969 = arith.addf %966, %968 : vector<16x128xf32>
    %c0_309 = arith.constant 0 : index
    %c15_310 = arith.constant 15 : index
    %c0_311 = arith.constant 0 : index
    %c0_312 = arith.constant 0 : index
    %970 = vector.load %arg2[%c0_309, %c15_310, %c0_311, %c0_312] : memref<1x16x16x128xf32, #tpu.memory_space<vmem>>, vector<1x1x16x128xf32>
    %971 = vector.shape_cast %970 : vector<1x1x16x128xf32> to vector<16x128xf32>
    %972 = arith.addf %969, %971 : vector<16x128xf32>
    %c0_313 = arith.constant 0 : index
    %c15_314 = arith.constant 15 : index
    %c0_315 = arith.constant 0 : index
    %c0_316 = arith.constant 0 : index
    %973 = vector.load %arg7[%c0_313, %c15_314, %c0_315, %c0_316] : memref<1x16x16x128xf32, #tpu.memory_space<vmem>>, vector<1x1x16x128xf32>
    %974 = vector.shape_cast %973 : vector<1x1x16x128xf32> to vector<16x128xf32>
    %975 = vector.shape_cast %972 : vector<16x128xf32> to vector<1x1x16x128xf32>
    tpu.vector_store %arg7[%c0_313, %c15_314, %c0_315, %c0_316], %975 {strides = array<i32>} : memref<1x16x16x128xf32, #tpu.memory_space<vmem>>, vector<1x1x16x128xf32>,
    return
  }
  func.func @transform_0(%arg0: i32, %arg1: i32) -> (i32, i32, i32, i32) {
    %c0_i32 = arith.constant 0 : i32
    %c0_i32_0 = arith.constant 0 : i32
    %c0_i32_1 = arith.constant 0 : i32
    return %arg0, %c0_i32, %c0_i32_0, %arg1 : i32, i32, i32, i32
  }
  func.func @transform_1(%arg0: i32, %arg1: i32) -> (i32, i32, i32) {
    %c0_i32 = arith.constant 0 : i32
    %c0_i32_0 = arith.constant 0 : i32
    %c0_i32_1 = arith.constant 0 : i32
    return %c0_i32, %c0_i32_0, %arg1 : i32, i32, i32
  }
  func.func @transform_2(%arg0: i32, %arg1: i32) -> (i32, i32) {
    %c0_i32 = arith.constant 0 : i32
    %c0_i32_0 = arith.constant 0 : i32
    return %c0_i32, %arg1 : i32, i32
  }
  func.func @transform_3(%arg0: i32, %arg1: i32) -> (i32, i32) {
    %c0_i32 = arith.constant 0 : i32
    %c0_i32_0 = arith.constant 0 : i32
    return %c0_i32, %arg1 : i32, i32
  }
  func.func @transform_4(%arg0: i32, %arg1: i32) -> (i32, i32) {
    %c0_i32 = arith.constant 0 : i32
    %c0_i32_0 = arith.constant 0 : i32
    return %c0_i32, %arg1 : i32, i32
  }
  func.func @transform_5(%arg0: i32, %arg1: i32) -> (i32, i32, i32, i32) {
    %c0_i32 = arith.constant 0 : i32
    %c0_i32_0 = arith.constant 0 : i32
    %c0_i32_1 = arith.constant 0 : i32
    return %arg0, %c0_i32, %c0_i32_0, %arg1 : i32, i32, i32, i32
  }
}

</mosaic_0001>

<llo_original>
// kernel: tpu_custom_call.1
$region0: #{tpu_custom_call.1}
  #allocation0 [shape = 'u32[]', space=smem, size = 0x4, offset = 0x4, fixed_abs, tag = 'smem constant byte address 0x4 - core index']
  #allocation1 [shape = 'u32[72,128]{1,0:T(1,128)}', space=vmem, size = 0x9000, scoped, tag = 'internal scratch']
  %s0 = inlined_call_operand.hbm [shape: f32[2,16,16,128], index: 0, kind: input, shape index: {}]
  %s1 = inlined_call_operand.hbm [shape: f32[3,3,128], index: 1, kind: input, shape index: {}]
  %s2 = inlined_call_operand.vmem [shape: f32[1,128], index: 2, kind: input, shape index: {}]
  %s3 = inlined_call_operand.vmem [shape: f32[1,128], index: 3, kind: input, shape index: {}]
  %s4 = inlined_call_operand.vmem [shape: f32[1,128], index: 4, kind: input, shape index: {}]
  %s5 = inlined_call_operand.hbm [shape: f32[2,16,16,128], index: 5, kind: output, shape index: {}]
  %s6 = sld [smem:[#allocation0]]
  $region61: #{tpu_custom_call.1} parent=0
    _
  %s8 = ssub.s32 1, %s6
  %s9 = scalar_select 0, %s8, %s6
  $region1: #{tpu_custom_call.1} parent=0
    #allocation2 [shape = 'u8[262144]{0}', space=vmem, size = 0x40000, scoped, tag = 'input window, operand 0']
    #allocation3 [shape = 's32[2]{0}', space=sflag, size = 0x8, scoped, tag = 'scoped memory for tpu_custom_call.1']
    #allocation4 [shape = 's32[2]{0}', space=sflag, size = 0x8, scoped, tag = 'scoped memory for tpu_custom_call.1']
    #allocation5 [shape = 'u8[6144]{0}', space=vmem, size = 0x1800, scoped, tag = 'input window, operand 1, single buffered']
    #allocation6 [shape = 's32[1]{0}', space=sflag, size = 0x4, scoped, tag = 'scoped memory for tpu_custom_call.1']
    #allocation7 [shape = 'u8[262144]{0}', space=vmem, size = 0x40000, scoped, tag = 'output window, operand 0']
    %10 = vsyncpa [#allocation3], 0
    %s11 = scalar_lea.sflag [#allocation3], 1
    %12 = vsyncpa %s11, 0
    %13 = vsyncpa [#allocation6], 0
    %14 = vsyncpa [#allocation4], 0
    %s15 = scalar_lea.sflag [#allocation4], 1
    %16 = vsyncpa %s15, 0
    loop: start=0, step=1, limit=4
    $region2: #{tpu_custom_call.1} parent=1 // loop_pre_header
      _
    $region3: #{tpu_custom_call.1} parent=1 // loop_header
      %s18 = sphi 0, %s22
      %p19 = scmp.ge.s32.totalorder %s18, 4
      %s25 = sphi 0, %s37
      %s26 = sphi 0, %s33
      %s27 = sphi 0, %s25
      %s28 = sphi 0, %s26
      %s29 = sphi 0, %s27
      %s30 = sphi 0, %s28
      %s42 = sphi 0, %s44
      %s45 = sphi 0, %s42
      %s46 = sphi 0, %s45
      %s62 = sphi 0, %s46
      %s68 = sphi 0, %s70
      %s71 = sphi 0, %s68
      %s72 = sphi 0, %s71
      %s88 = sphi 0, %s72
      %s94 = sphi 0, %s96
      %s97 = sphi 0, %s94
      %s98 = sphi 0, %s97
      %s114 = sphi 0, %s98
      %s120 = sphi 0, %s122
      %s123 = sphi 0, %s120
      %s124 = sphi 0, %s123
      %s140 = sphi 0, %s124
      %s146 = sphi 0, %s148
      %s149 = sphi 0, %s146
      %s150 = sphi 0, %s149
      %s166 = sphi 0, %s150
      %s174 = sphi 0, %s176
      %s177 = sphi 0, %s174
      %s178 = sphi 0, %s177
      %s194 = sphi 0, %s178
    $region4: #{tpu_custom_call.1} parent=1 // loop_header_branch
      %21 = sbr.rel (%p19) target = $region8
    $region5: #{tpu_custom_call.1} parent=1 // loop_body
      %s23 = ssub.s32 %s18, 1
      %s24 = ssub.s32 %s18, 2
      %s31 = sadd.s32 1, %s26
      %p32 = scmp.ge.s32.totalorder %s31, 1
      %s33 = scalar_select %p32, 0, %s31
      %s34 = sadd.s32 1, %s25
      %s35 = scalar_select %p32, %s34, %s25
      %p36 = scmp.ge.s32.totalorder %s35, 2
      %s37 = scalar_select %p36, 0, %s35
      %s38 = ssub.s32 %s25, %s37
      %s39 = ssub.s32 %s26, %s33
      %s40 = sor.u32 %s38, %s39
      %p41 = scmp.eq.s32.totalorder %s40, 0
      %s43 = sadd.s32 %s42, 1
      %s44 = scalar_select %p41, %s42, %s43
      %p47 = pneg %p41
      %p48 = scmp.eq.s32.totalorder %s18, 1
      %p49 = por %p47, %p48
      %p50 = scmp.ne.s32.totalorder %s42, %s45
      %p51 = scmp.eq.s32.totalorder %s18, 0
      %p52 = por %p50, %p51
      %p53 = scmp.ne.s32.totalorder %s42, %s45
      %p54 = scmp.eq.s32.totalorder %s23, 1
      %p55 = por %p53, %p54
      %p56 = scmp.ne.s32.totalorder %s45, %s46
      %p57 = scmp.eq.s32.totalorder %s23, 0
      %p58 = por %p56, %p57
      %p59 = scmp.ne.s32.totalorder %s45, %s46
      %p60 = scmp.eq.s32.totalorder %s24, 1
      %p61 = por %p59, %p60
      %p63 = scmp.ne.s32.totalorder %s46, %s62
      %p64 = scmp.eq.s32.totalorder %s24, 0
      %p65 = por %p63, %p64
      %s66 = ssub.s32 %s26, %s33
      %p67 = scmp.eq.s32.totalorder %s66, 0
      %s69 = sadd.s32 %s68, 1
      %s70 = scalar_select %p67, %s68, %s69
      %p73 = pneg %p67
      %p74 = scmp.eq.s32.totalorder %s18, 1
      %p75 = por %p73, %p74
      %p76 = scmp.ne.s32.totalorder %s68, %s71
      %p77 = scmp.eq.s32.totalorder %s18, 0
      %p78 = por %p76, %p77
      %p79 = scmp.ne.s32.totalorder %s68, %s71
      %p80 = scmp.eq.s32.totalorder %s23, 1
      %p81 = por %p79, %p80
      %p82 = scmp.ne.s32.totalorder %s71, %s72
      %p83 = scmp.eq.s32.totalorder %s23, 0
      %p84 = por %p82, %p83
      %p85 = scmp.ne.s32.totalorder %s71, %s72
      %p86 = scmp.eq.s32.totalorder %s24, 1
      %p87 = por %p85, %p86
      %p89 = scmp.ne.s32.totalorder %s72, %s88
      %p90 = scmp.eq.s32.totalorder %s24, 0
      %p91 = por %p89, %p90
      %s92 = ssub.s32 %s26, %s33
      %p93 = scmp.eq.s32.totalorder %s92, 0
      %s95 = sadd.s32 %s94, 1
      %s96 = scalar_select %p93, %s94, %s95
      %p99 = pneg %p93
      %p100 = scmp.eq.s32.totalorder %s18, 1
      %p101 = por %p99, %p100
      %p102 = scmp.ne.s32.totalorder %s94, %s97
      %p103 = scmp.eq.s32.totalorder %s18, 0
      %p104 = por %p102, %p103
      %p105 = scmp.ne.s32.totalorder %s94, %s97
      %p106 = scmp.eq.s32.totalorder %s23, 1
      %p107 = por %p105, %p106
      %p108 = scmp.ne.s32.totalorder %s97, %s98
      %p109 = scmp.eq.s32.totalorder %s23, 0
      %p110 = por %p108, %p109
      %p111 = scmp.ne.s32.totalorder %s97, %s98
      %p112 = scmp.eq.s32.totalorder %s24, 1
      %p113 = por %p111, %p112
      %p115 = scmp.ne.s32.totalorder %s98, %s114
      %p116 = scmp.eq.s32.totalorder %s24, 0
      %p117 = por %p115, %p116
      %s118 = ssub.s32 %s26, %s33
      %p119 = scmp.eq.s32.totalorder %s118, 0
      %s121 = sadd.s32 %s120, 1
      %s122 = scalar_select %p119, %s120, %s121
      %p125 = pneg %p119
      %p126 = scmp.eq.s32.totalorder %s18, 1
      %p127 = por %p125, %p126
      %p128 = scmp.ne.s32.totalorder %s120, %s123
      %p129 = scmp.eq.s32.totalorder %s18, 0
      %p130 = por %p128, %p129
      %p131 = scmp.ne.s32.totalorder %s120, %s123
      %p132 = scmp.eq.s32.totalorder %s23, 1
      %p133 = por %p131, %p132
      %p134 = scmp.ne.s32.totalorder %s123, %s124
      %p135 = scmp.eq.s32.totalorder %s23, 0
      %p136 = por %p134, %p135
      %p137 = scmp.ne.s32.totalorder %s123, %s124
      %p138 = scmp.eq.s32.totalorder %s24, 1
      %p139 = por %p137, %p138
      %p141 = scmp.ne.s32.totalorder %s124, %s140
      %p142 = scmp.eq.s32.totalorder %s24, 0
      %p143 = por %p141, %p142
      %s144 = ssub.s32 %s26, %s33
      %p145 = scmp.eq.s32.totalorder %s144, 0
      %s147 = sadd.s32 %s146, 1
      %s148 = scalar_select %p145, %s146, %s147
      %p151 = pneg %p145
      %p152 = scmp.eq.s32.totalorder %s18, 1
      %p153 = por %p151, %p152
      %p154 = scmp.ne.s32.totalorder %s146, %s149
      %p155 = scmp.eq.s32.totalorder %s18, 0
      %p156 = por %p154, %p155
      %p157 = scmp.ne.s32.totalorder %s146, %s149
      %p158 = scmp.eq.s32.totalorder %s23, 1
      %p159 = por %p157, %p158
      %p160 = scmp.ne.s32.totalorder %s149, %s150
      %p161 = scmp.eq.s32.totalorder %s23, 0
      %p162 = por %p160, %p161
      %p163 = scmp.ne.s32.totalorder %s149, %s150
      %p164 = scmp.eq.s32.totalorder %s24, 1
      %p165 = por %p163, %p164
      %p167 = scmp.ne.s32.totalorder %s150, %s166
      %p168 = scmp.eq.s32.totalorder %s24, 0
      %p169 = por %p167, %p168
      %s170 = ssub.s32 %s25, %s37
      %s171 = ssub.s32 %s26, %s33
      %s172 = sor.u32 %s170, %s171
      %p173 = scmp.eq.s32.totalorder %s172, 0
      %s175 = sadd.s32 %s174, 1
      %s176 = scalar_select %p173, %s174, %s175
      %p179 = pneg %p173
      %p180 = scmp.eq.s32.totalorder %s18, 1
      %p181 = por %p179, %p180
      %p182 = scmp.ne.s32.totalorder %s174, %s177
      %p183 = scmp.eq.s32.totalorder %s18, 0
      %p184 = por %p182, %p183
      %p185 = scmp.ne.s32.totalorder %s174, %s177
      %p186 = scmp.eq.s32.totalorder %s23, 1
      %p187 = por %p185, %p186
      %p188 = scmp.ne.s32.totalorder %s177, %s178
      %p189 = scmp.eq.s32.totalorder %s23, 0
      %p190 = por %p188, %p189
      %p191 = scmp.ne.s32.totalorder %s177, %s178
      %p192 = scmp.eq.s32.totalorder %s24, 1
      %p193 = por %p191, %p192
      %p195 = scmp.ne.s32.totalorder %s178, %s194
      %p196 = scmp.eq.s32.totalorder %s24, 0
      %p197 = por %p195, %p196
      %p198 = scmp.le.s32.totalorder 1, %s18
      %p199 = scmp.lt.s32.totalorder %s18, 3
      %p200 = pnand %p198, %p199
      %p201 = pneg %p200
      // Predicated region
      $region9: #{tpu_custom_call.1} parent=5 // pred_check
        _
      $region10: #{tpu_custom_call.1} parent=5 // pred_check_branch
        %203 = sbr.rel (%p200) target = $region12
      $region11: #{tpu_custom_call.1} parent=5 // pred_region
        %s204 = ssub.s32 %s18, 1
        // Predicated region
        $region13: #{tpu_custom_call.1} parent=11 // pred_check
          %p205 = pneg %p84
        $region14: #{tpu_custom_call.1} parent=11 // pred_check_branch
          %207 = sbr.rel (%p205) target = $region16
        $region15: #{tpu_custom_call.1} parent=11 // pred_region
          %209 = vsyncadd [#allocation6], 0
          %s210 = smul.addr %s28, 4
          %s211 = scalar_lea.hbm %s1, %s210
          %s212 = sshll.u32 %s211, 4
          %s213 = int_to_ptr.hbm [resolvable:$true] %s212
          %s214 = sshll.u32 [#allocation5], 4
          %s215 = int_to_ptr.vmem [resolvable:$true] %s214
          %220 = dma.hbm_to_vmem [thread:$0]  %s213, 192, %s215, [#allocation6], 64, 64, 4
        $region16: #{tpu_custom_call.1} parent=11 // pred_fallthru
          _
        // Predicated region
        $region17: #{tpu_custom_call.1} parent=11 // pred_check
          %p221 = pneg %p110
        $region18: #{tpu_custom_call.1} parent=11 // pred_check_branch
          %223 = sbr.rel (%p221) target = $region20
        $region19: #{tpu_custom_call.1} parent=11 // pred_region
          %p224 = scmp.lt.s32.totalorder %s28, 0
          %s225 = scalar_select %p224, %s28, 0
          %s226 = scalar_lea.vmem %s2, %s225
        $region20: #{tpu_custom_call.1} parent=11 // pred_fallthru
          _
        // Predicated region
        $region21: #{tpu_custom_call.1} parent=11 // pred_check
          %p227 = pneg %p136
        $region22: #{tpu_custom_call.1} parent=11 // pred_check_branch
          %229 = sbr.rel (%p227) target = $region24
        $region23: #{tpu_custom_call.1} parent=11 // pred_region
          %p230 = scmp.lt.s32.totalorder %s28, 0
          %s231 = scalar_select %p230, %s28, 0
          %s232 = scalar_lea.vmem %s3, %s231
        $region24: #{tpu_custom_call.1} parent=11 // pred_fallthru
          _
        // Predicated region
        $region25: #{tpu_custom_call.1} parent=11 // pred_check
          %p233 = pneg %p162
        $region26: #{tpu_custom_call.1} parent=11 // pred_check_branch
          %235 = sbr.rel (%p233) target = $region28
        $region27: #{tpu_custom_call.1} parent=11 // pred_region
          %p236 = scmp.lt.s32.totalorder %s28, 0
          %s237 = scalar_select %p236, %s28, 0
          %s238 = scalar_lea.vmem %s4, %s237
        $region28: #{tpu_custom_call.1} parent=11 // pred_fallthru
          _
      $region12: #{tpu_custom_call.1} parent=5 // pred_fallthru
        _
      %p239 = scmp.lt.s32.totalorder %s18, 2
      // Predicated region
      $region29: #{tpu_custom_call.1} parent=5 // pred_check
        %p240 = pneg %p239
      $region30: #{tpu_custom_call.1} parent=5 // pred_check_branch
        %242 = sbr.rel (%p240) target = $region32
      $region31: #{tpu_custom_call.1} parent=5 // pred_region
        // Predicated region
        $region33: #{tpu_custom_call.1} parent=31 // pred_check
          %p243 = pneg %p52
        $region34: #{tpu_custom_call.1} parent=31 // pred_check_branch
          %245 = sbr.rel (%p243) target = $region36
        $region35: #{tpu_custom_call.1} parent=31 // pred_region
          %s246 = sand.u32 %s42, 1
          %s247 = scalar_lea.sflag [#allocation3], %s246
          %s248 = sand.u32 %s42, 1
          %s249 = smul.addr %s248, 256
          %s250 = scalar_lea.vmem [#allocation2], %s249
          %252 = vsyncadd %s247, 0
          %s253 = smul.addr %s25, 32
          %s254 = sadd.s32 %s26, %s253
          %s255 = smul.addr %s254, 8
          %s256 = scalar_lea.hbm %s0, %s255
          %s257 = sshll.u32 %s256, 4
          %s258 = int_to_ptr.hbm [resolvable:$true] %s257
          %s259 = sshll.u32 %s250, 4
          %s260 = int_to_ptr.vmem [resolvable:$true] %s259
          %265 = dma.hbm_to_vmem [thread:$0]  %s258, 4096, %s260, %s247, 128, 128, 8
        $region36: #{tpu_custom_call.1} parent=31 // pred_fallthru
          _
      $region32: #{tpu_custom_call.1} parent=5 // pred_fallthru
        _
      %p266 = scmp.le.s32.totalorder 1, %s18
      %p267 = scmp.lt.s32.totalorder %s18, 3
      %p268 = pnand %p266, %p267
      %p269 = pneg %p268
      // Predicated region
      $region37: #{tpu_custom_call.1} parent=5 // pred_check
        _
      $region38: #{tpu_custom_call.1} parent=5 // pred_check_branch
        %271 = sbr.rel (%p268) target = $region40
      $region39: #{tpu_custom_call.1} parent=5 // pred_region
        %s272 = ssub.s32 %s18, 1
        %s273 = sand.u32 %s45, 1
        %s274 = scalar_lea.sflag [#allocation3], %s273
        %s275 = sand.u32 %s45, 1
        %s276 = smul.addr %s275, 256
        %s277 = scalar_lea.vmem [#allocation2], %s276
        // Predicated region
        $region41: #{tpu_custom_call.1} parent=39 // pred_check
          %p278 = pneg %p58
        $region42: #{tpu_custom_call.1} parent=39 // pred_check_branch
          %280 = sbr.rel (%p278) target = $region44
        $region43: #{tpu_custom_call.1} parent=39 // pred_region
          %282 = dma.done %s274, 4096
        $region44: #{tpu_custom_call.1} parent=39 // pred_fallthru
          _
        // Predicated region
        $region45: #{tpu_custom_call.1} parent=39 // pred_check
          %p283 = pneg %p84
        $region46: #{tpu_custom_call.1} parent=39 // pred_check_branch
          %285 = sbr.rel (%p283) target = $region48
        $region47: #{tpu_custom_call.1} parent=39 // pred_region
          %287 = dma.done [#allocation6], 192
        $region48: #{tpu_custom_call.1} parent=39 // pred_fallthru
          _
        %s288 = sand.u32 %s45, 1
        %s289 = scalar_lea.sflag [#allocation3], %s288
        %s290 = sand.u32 %s45, 1
        %s291 = smul.addr %s290, 256
        %s292 = scalar_lea.vmem [#allocation2], %s291
        %p293 = pneg %p58
        %p294 = pneg %p55
        %p295 = pneg %p84
        %p296 = pneg %p81
        %p297 = scmp.lt.s32.totalorder %s28, 0
        %s298 = scalar_select %p297, %s28, 0
        %s299 = scalar_lea.vmem %s2, %s298
        %p300 = pneg %p110
        %p301 = pneg %p107
        %p302 = scmp.lt.s32.totalorder %s28, 0
        %s303 = scalar_select %p302, %s28, 0
        %s304 = scalar_lea.vmem %s3, %s303
        %p305 = pneg %p136
        %p306 = pneg %p133
        %p307 = scmp.lt.s32.totalorder %s28, 0
        %s308 = scalar_select %p307, %s28, 0
        %s309 = scalar_lea.vmem %s4, %s308
        %p310 = pneg %p162
        %p311 = pneg %p159
        %p312 = pneg %p190
        %p313 = pneg %p187
        %s314 = sand.u32 %s177, 1
        %s315 = scalar_lea.sflag [#allocation4], %s314
        %s316 = sand.u32 %s177, 1
        %s317 = smul.addr %s316, 256
        %s318 = scalar_lea.vmem [#allocation7], %s317
        %p319 = scmp.lt.s32.totalorder %s28, 0
        %s320 = scalar_select %p319, %s28, 0
        %s321 = scalar_lea.vmem %s2, %s320
        %p322 = scmp.lt.s32.totalorder %s28, 0
        %s323 = scalar_select %p322, %s28, 0
        %s324 = scalar_lea.vmem %s3, %s323
        %p325 = scmp.lt.s32.totalorder %s28, 0
        %s326 = scalar_select %p325, %s28, 0
        %s327 = scalar_lea.vmem %s4, %s326
        %v328 = vld [vmem:[#allocation5] sm:$0x7]
        %v329 = vld [vmem:[#allocation5 + $0x4] sm:$0x7]
        %v330 = vld [vmem:[#allocation5 + $0x8] sm:$0x7]
        %v331 = vld [vmem:[%s321] sm:$0x1]
        %v332 = vld [vmem:[%s324] sm:$0x1]
        %v333 = vld [vmem:[%s327] sm:$0x1]
        %v334 = vlaneseq
        %v335 = vshrl.u32 %v334, 7
        %v336 = vadd.s32 %v335, 8
        %v337 = vadd.s32 %v335, 4294967295
        %v338 = vadd.s32 %v336, 4294967295
        %vm339 = vcmp.ge.s32.totalorder %v337, 0
        %vm340 = vcmp.ge.s32.totalorder %v338, 0
        %vm341 = vcmp.lt.s32.totalorder %v337, 16
        %vm342 = vcmp.lt.s32.totalorder %v338, 16
        %vm343 = vmand %vm339, %vm341
        %vm344 = vmand %vm340, %vm342
        %v345 = vperm.slane %v328, 0
        %v346 = vsel %vm343, %v345, 0.0
        %v347 = vsel %vm344, %v345, 0.0
        %v348 = vadd.s32 %v335, 1
        %v349 = vadd.s32 %v336, 1
        %vm350 = vcmp.ge.s32.totalorder %v348, 0
        %vm351 = vcmp.ge.s32.totalorder %v349, 0
        %vm352 = vcmp.lt.s32.totalorder %v348, 16
        %vm353 = vcmp.lt.s32.totalorder %v349, 16
        %vm354 = vmand %vm350, %vm352
        %vm355 = vmand %vm351, %vm353
        %v356 = vperm.slane %v328, 2
        %v357 = vsel %vm354, %v356, 0.0
        %v358 = vsel %vm355, %v356, 0.0
        %v359 = vperm.slane %v329, 0
        %v360 = vsel %vm343, %v359, 0.0
        %v361 = vsel %vm344, %v359, 0.0
        %v362 = vperm.slane %v329, 2
        %v363 = vsel %vm354, %v362, 0.0
        %v364 = vsel %vm355, %v362, 0.0
        %v365 = vperm.slane %v330, 0
        %v366 = vsel %vm343, %v365, 0.0
        %v367 = vsel %vm344, %v365, 0.0
        %v368 = vperm.slane %v330, 2
        %v369 = vsel %vm354, %v368, 0.0
        %v370 = vsel %vm355, %v368, 0.0
        %v371 = vld [vmem:[%s277] sm:$0xff]
        %v372 = vld [vmem:[%s277 + $0x8] sm:$0xff]
        %v373 = vrot.slane %v371, 7
        %v374 = vrot.slane %v372, 7
        %vm375 = vcmp.lt.s32.totalorder %v335, 1
        %v376 = vsel %vm375, %v373, %v374
        %v377 = vsel %vm375, %v374, %v373
        %v378 = vmul.f32 %v377, %v346
        %v379 = vmul.f32 %v376, %v347
        %v380 = vmul.f32 %v377, %v360
        %v381 = vmul.f32 %v376, %v361
        %v382 = vperm.slane %v328, 1
        %v383 = vmul.f32 %v371, %v382
        %v384 = vmul.f32 %v372, %v382
        %v385 = vadd.f32 %v378, %v383
        %v386 = vadd.f32 %v379, %v384
        %v387 = vperm.slane %v329, 1
        %v388 = vmul.f32 %v371, %v387
        %v389 = vmul.f32 %v372, %v387
        %v390 = vadd.f32 %v380, %v388
        %v391 = vadd.f32 %v381, %v389
        %v392 = vrot.slane %v371, 1
        %v393 = vrot.slane %v372, 1
        %vm394 = vcmp.lt.s32.totalorder %v335, 7
        %v395 = vsel %vm394, %v392, %v393
        %v396 = vsel %vm394, %v393, %v392
        %v397 = vmul.f32 %v395, %v357
        %v398 = vmul.f32 %v396, %v358
        %v399 = vadd.f32 %v385, %v397
        %v400 = vadd.f32 %v386, %v398
        %v401 = vmul.f32 %v395, %v363
        %v402 = vmul.f32 %v396, %v364
        %v403 = vadd.f32 %v390, %v401
        %v404 = vadd.f32 %v391, %v402
        %s405 = scalar_lea.vmem %s277, 16 [#allocation2]
        %v406 = vld [vmem:[%s405] sm:$0xff]
        %v407 = vld [vmem:[%s405 + $0x8] sm:$0xff]
        %v408 = vrot.slane %v406, 7
        %v409 = vrot.slane %v407, 7
        %v410 = vsel %vm375, %v408, %v409
        %v411 = vsel %vm375, %v409, %v408
        %v412 = vmul.f32 %v411, %v346
        %v413 = vmul.f32 %v410, %v347
        %v414 = vmul.f32 %v411, %v360
        %v415 = vmul.f32 %v410, %v361
        %v416 = vadd.f32 %v399, %v414
        %v417 = vadd.f32 %v400, %v415
        %v418 = vmul.f32 %v411, %v366
        %v419 = vmul.f32 %v410, %v367
        %v420 = vadd.f32 %v403, %v418
        %v421 = vadd.f32 %v404, %v419
        %v422 = vmul.f32 %v406, %v382
        %v423 = vmul.f32 %v407, %v382
        %v424 = vadd.f32 %v412, %v422
        %v425 = vadd.f32 %v413, %v423
        %v426 = vmul.f32 %v406, %v387
        %v427 = vmul.f32 %v407, %v387
        %v428 = vadd.f32 %v416, %v426
        %v429 = vadd.f32 %v417, %v427
        %v430 = vperm.slane %v330, 1
        %v431 = vmul.f32 %v406, %v430
        %v432 = vmul.f32 %v407, %v430
        %v433 = vadd.f32 %v420, %v431
        %v434 = vadd.f32 %v421, %v432
        %v435 = vrot.slane %v406, 1
        %v436 = vrot.slane %v407, 1
        %v437 = vsel %vm394, %v435, %v436
        %v438 = vsel %vm394, %v436, %v435
        %v439 = vmul.f32 %v437, %v357
        %v440 = vmul.f32 %v438, %v358
        %v441 = vadd.f32 %v424, %v439
        %v442 = vadd.f32 %v425, %v440
        %v443 = vmul.f32 %v437, %v363
        %v444 = vmul.f32 %v438, %v364
        %v445 = vadd.f32 %v428, %v443
        %v446 = vadd.f32 %v429, %v444
        %v447 = vmul.f32 %v437, %v369
        %v448 = vmul.f32 %v438, %v370
        %v449 = vadd.f32 %v433, %v447
        %v450 = vadd.f32 %v434, %v448
        %s451 = scalar_lea.vmem %s277, 32 [#allocation2]
        %v452 = vld [vmem:[%s451] sm:$0xff]
        %v453 = vld [vmem:[%s451 + $0x8] sm:$0xff]
        %v454 = vrot.slane %v452, 7
        %v455 = vrot.slane %v453, 7
        %v456 = vsel %vm375, %v454, %v455
        %v457 = vsel %vm375, %v455, %v454
        %v458 = vmul.f32 %v457, %v346
        %v459 = vmul.f32 %v456, %v347
        %v460 = vmul.f32 %v457, %v360
        %v461 = vmul.f32 %v456, %v361
        %v462 = vadd.f32 %v441, %v460
        %v463 = vadd.f32 %v442, %v461
        %v464 = vmul.f32 %v457, %v366
        %v465 = vmul.f32 %v456, %v367
        %v466 = vadd.f32 %v445, %v464
        %v467 = vadd.f32 %v446, %v465
        %v468 = vmul.f32 %v452, %v382
        %v469 = vmul.f32 %v453, %v382
        %v470 = vadd.f32 %v458, %v468
        %v471 = vadd.f32 %v459, %v469
        %v472 = vmul.f32 %v452, %v387
        %v473 = vmul.f32 %v453, %v387
        %v474 = vadd.f32 %v462, %v472
        %v475 = vadd.f32 %v463, %v473
        %v476 = vmul.f32 %v452, %v430
        %v477 = vmul.f32 %v453, %v430
        %v478 = vadd.f32 %v466, %v476
        %v479 = vadd.f32 %v467, %v477
        %v480 = vrot.slane %v452, 1
        %v481 = vrot.slane %v453, 1
        %v482 = vsel %vm394, %v480, %v481
        %v483 = vsel %vm394, %v481, %v480
        %v484 = vmul.f32 %v482, %v357
        %v485 = vmul.f32 %v483, %v358
        %v486 = vadd.f32 %v470, %v484
        %v487 = vadd.f32 %v471, %v485
        %v488 = vmul.f32 %v482, %v363
        %v489 = vmul.f32 %v483, %v364
        %v490 = vadd.f32 %v474, %v488
        %v491 = vadd.f32 %v475, %v489
        %v492 = vmul.f32 %v482, %v369
        %v493 = vmul.f32 %v483, %v370
        %v494 = vadd.f32 %v478, %v492
        %v495 = vadd.f32 %v479, %v493
        %s496 = scalar_lea.vmem %s277, 48 [#allocation2]
        %v497 = vld [vmem:[%s496] sm:$0xff]
        %v498 = vld [vmem:[%s496 + $0x8] sm:$0xff]
        %v499 = vrot.slane %v497, 7
        %v500 = vrot.slane %v498, 7
        %v501 = vsel %vm375, %v499, %v500
        %v502 = vsel %vm375, %v500, %v499
        %v503 = vmul.f32 %v502, %v346
        %v504 = vmul.f32 %v501, %v347
        %v505 = vmul.f32 %v502, %v360
        %v506 = vmul.f32 %v501, %v361
        %v507 = vadd.f32 %v486, %v505
        %v508 = vadd.f32 %v487, %v506
        %v509 = vmul.f32 %v502, %v366
        %v510 = vmul.f32 %v501, %v367
        %v511 = vadd.f32 %v490, %v509
        %v512 = vadd.f32 %v491, %v510
        %v513 = vmul.f32 %v497, %v382
        %v514 = vmul.f32 %v498, %v382
        %v515 = vadd.f32 %v503, %v513
        %v516 = vadd.f32 %v504, %v514
        %v517 = vmul.f32 %v497, %v387
        %v518 = vmul.f32 %v498, %v387
        %v519 = vadd.f32 %v507, %v517
        %v520 = vadd.f32 %v508, %v518
        %v521 = vmul.f32 %v497, %v430
        %v522 = vmul.f32 %v498, %v430
        %v523 = vadd.f32 %v511, %v521
        %v524 = vadd.f32 %v512, %v522
        %v525 = vrot.slane %v497, 1
        %v526 = vrot.slane %v498, 1
        %v527 = vsel %vm394, %v525, %v526
        %v528 = vsel %vm394, %v526, %v525
        %v529 = vmul.f32 %v527, %v357
        %v530 = vmul.f32 %v528, %v358
        %v531 = vadd.f32 %v515, %v529
        %v532 = vadd.f32 %v516, %v530
        %v533 = vmul.f32 %v527, %v363
        %v534 = vmul.f32 %v528, %v364
        %v535 = vadd.f32 %v519, %v533
        %v536 = vadd.f32 %v520, %v534
        %v537 = vmul.f32 %v527, %v369
        %v538 = vmul.f32 %v528, %v370
        %v539 = vadd.f32 %v523, %v537
        %v540 = vadd.f32 %v524, %v538
        %s541 = scalar_lea.vmem %s277, 64 [#allocation2]
        %v542 = vld [vmem:[%s541] sm:$0xff]
        %v543 = vld [vmem:[%s541 + $0x8] sm:$0xff]
        %v544 = vrot.slane %v542, 7
        %v545 = vrot.slane %v543, 7
        %v546 = vsel %vm375, %v544, %v545
        %v547 = vsel %vm375, %v545, %v544
        %v548 = vmul.f32 %v547, %v346
        %v549 = vmul.f32 %v546, %v347
        %v550 = vmul.f32 %v547, %v360
        %v551 = vmul.f32 %v546, %v361
        %v552 = vadd.f32 %v531, %v550
        %v553 = vadd.f32 %v532, %v551
        %v554 = vmul.f32 %v547, %v366
        %v555 = vmul.f32 %v546, %v367
        %v556 = vadd.f32 %v535, %v554
        %v557 = vadd.f32 %v536, %v555
        %v558 = vmul.f32 %v542, %v382
        %v559 = vmul.f32 %v543, %v382
        %v560 = vadd.f32 %v548, %v558
        %v561 = vadd.f32 %v549, %v559
        %v562 = vmul.f32 %v542, %v387
        %v563 = vmul.f32 %v543, %v387
        %v564 = vadd.f32 %v552, %v562
        %v565 = vadd.f32 %v553, %v563
        %v566 = vmul.f32 %v542, %v430
        %v567 = vmul.f32 %v543, %v430
        %v568 = vadd.f32 %v556, %v566
        %v569 = vadd.f32 %v557, %v567
        %v570 = vrot.slane %v542, 1
        %v571 = vrot.slane %v543, 1
        %v572 = vsel %vm394, %v570, %v571
        %v573 = vsel %vm394, %v571, %v570
        %v574 = vmul.f32 %v572, %v357
        %v575 = vmul.f32 %v573, %v358
        %v576 = vadd.f32 %v560, %v574
        %v577 = vadd.f32 %v561, %v575
        %v578 = vmul.f32 %v572, %v363
        %v579 = vmul.f32 %v573, %v364
        %v580 = vadd.f32 %v564, %v578
        %v581 = vadd.f32 %v565, %v579
        %v582 = vmul.f32 %v572, %v369
        %v583 = vmul.f32 %v573, %v370
        %v584 = vadd.f32 %v568, %v582
        %v585 = vadd.f32 %v569, %v583
        %s586 = scalar_lea.vmem %s277, 80 [#allocation2]
        %v587 = vld [vmem:[%s586] sm:$0xff]
        %v588 = vld [vmem:[%s586 + $0x8] sm:$0xff]
        %v589 = vrot.slane %v587, 7
        %v590 = vrot.slane %v588, 7
        %v591 = vsel %vm375, %v589, %v590
        %v592 = vsel %vm375, %v590, %v589
        %v593 = vmul.f32 %v592, %v346
        %v594 = vmul.f32 %v591, %v347
        %v595 = vmul.f32 %v592, %v360
        %v596 = vmul.f32 %v591, %v361
        %v597 = vadd.f32 %v576, %v595
        %v598 = vadd.f32 %v577, %v596
        %v599 = vmul.f32 %v592, %v366
        %v600 = vmul.f32 %v591, %v367
        %v601 = vadd.f32 %v580, %v599
        %v602 = vadd.f32 %v581, %v600
        %v603 = vmul.f32 %v587, %v382
        %v604 = vmul.f32 %v588, %v382
        %v605 = vadd.f32 %v593, %v603
        %v606 = vadd.f32 %v594, %v604
        %v607 = vmul.f32 %v587, %v387
        %v608 = vmul.f32 %v588, %v387
        %v609 = vadd.f32 %v597, %v607
        %v610 = vadd.f32 %v598, %v608
        %v611 = vmul.f32 %v587, %v430
        %v612 = vmul.f32 %v588, %v430
        %v613 = vadd.f32 %v601, %v611
        %v614 = vadd.f32 %v602, %v612
        %v615 = vrot.slane %v587, 1
        %v616 = vrot.slane %v588, 1
        %v617 = vsel %vm394, %v615, %v616
        %v618 = vsel %vm394, %v616, %v615
        %v619 = vmul.f32 %v617, %v357
        %v620 = vmul.f32 %v618, %v358
        %v621 = vadd.f32 %v605, %v619
        %v622 = vadd.f32 %v606, %v620
        %v623 = vmul.f32 %v617, %v363
        %v624 = vmul.f32 %v618, %v364
        %v625 = vadd.f32 %v609, %v623
        %v626 = vadd.f32 %v610, %v624
        %v627 = vmul.f32 %v617, %v369
        %v628 = vmul.f32 %v618, %v370
        %v629 = vadd.f32 %v613, %v627
        %v630 = vadd.f32 %v614, %v628
        %s631 = scalar_lea.vmem %s277, 96 [#allocation2]
        %v632 = vld [vmem:[%s631] sm:$0xff]
        %v633 = vld [vmem:[%s631 + $0x8] sm:$0xff]
        %v634 = vrot.slane %v632, 7
        %v635 = vrot.slane %v633, 7
        %v636 = vsel %vm375, %v634, %v635
        %v637 = vsel %vm375, %v635, %v634
        %v638 = vmul.f32 %v637, %v346
        %v639 = vmul.f32 %v636, %v347
        %v640 = vmul.f32 %v637, %v360
        %v641 = vmul.f32 %v636, %v361
        %v642 = vadd.f32 %v621, %v640
        %v643 = vadd.f32 %v622, %v641
        %v644 = vmul.f32 %v637, %v366
        %v645 = vmul.f32 %v636, %v367
        %v646 = vadd.f32 %v625, %v644
        %v647 = vadd.f32 %v626, %v645
        %v648 = vmul.f32 %v632, %v382
        %v649 = vmul.f32 %v633, %v382
        %v650 = vadd.f32 %v638, %v648
        %v651 = vadd.f32 %v639, %v649
        %v652 = vmul.f32 %v632, %v387
        %v653 = vmul.f32 %v633, %v387
        %v654 = vadd.f32 %v642, %v652
        %v655 = vadd.f32 %v643, %v653
        %v656 = vmul.f32 %v632, %v430
        %v657 = vmul.f32 %v633, %v430
        %v658 = vadd.f32 %v646, %v656
        %v659 = vadd.f32 %v647, %v657
        %v660 = vrot.slane %v632, 1
        %v661 = vrot.slane %v633, 1
        %v662 = vsel %vm394, %v660, %v661
        %v663 = vsel %vm394, %v661, %v660
        %v664 = vmul.f32 %v662, %v357
        %v665 = vmul.f32 %v663, %v358
        %v666 = vadd.f32 %v650, %v664
        %v667 = vadd.f32 %v651, %v665
        %v668 = vmul.f32 %v662, %v363
        %v669 = vmul.f32 %v663, %v364
        %v670 = vadd.f32 %v654, %v668
        %v671 = vadd.f32 %v655, %v669
        %v672 = vmul.f32 %v662, %v369
        %v673 = vmul.f32 %v663, %v370
        %v674 = vadd.f32 %v658, %v672
        %v675 = vadd.f32 %v659, %v673
        %s676 = scalar_lea.vmem %s277, 112 [#allocation2]
        %v677 = vld [vmem:[%s676] sm:$0xff]
        %v678 = vld [vmem:[%s676 + $0x8] sm:$0xff]
        %v679 = vrot.slane %v677, 7
        %v680 = vrot.slane %v678, 7
        %v681 = vsel %vm375, %v679, %v680
        %v682 = vsel %vm375, %v680, %v679
        %v683 = vmul.f32 %v682, %v360
        %v684 = vmul.f32 %v681, %v361
        %v685 = vadd.f32 %v666, %v683
        %v686 = vadd.f32 %v667, %v684
        %v687 = vmul.f32 %v682, %v366
        %v688 = vmul.f32 %v681, %v367
        %v689 = vadd.f32 %v670, %v687
        %v690 = vadd.f32 %v671, %v688
        %v691 = vmul.f32 %v677, %v387
        %v692 = vmul.f32 %v678, %v387
        %v693 = vadd.f32 %v685, %v691
        %v694 = vadd.f32 %v686, %v692
        %v695 = vmul.f32 %v677, %v430
        %v696 = vmul.f32 %v678, %v430
        %v697 = vadd.f32 %v689, %v695
        %v698 = vadd.f32 %v690, %v696
        %v699 = vrot.slane %v677, 1
        %v700 = vrot.slane %v678, 1
        %v701 = vsel %vm394, %v699, %v700
        %v702 = vsel %vm394, %v700, %v699
        %v703 = vmul.f32 %v701, %v363
        %v704 = vmul.f32 %v702, %v364
        %v705 = vadd.f32 %v693, %v703
        %v706 = vadd.f32 %v694, %v704
        %v707 = vmul.f32 %v701, %v369
        %v708 = vmul.f32 %v702, %v370
        %v709 = vadd.f32 %v697, %v707
        %v710 = vadd.f32 %v698, %v708
        %s711 = scalar_lea.vmem %s277, 128 [#allocation2]
        %v712 = vld [vmem:[%s711] sm:$0xff]
        %v713 = vld [vmem:[%s711 + $0x8] sm:$0xff]
        %v714 = vrot.slane %v712, 7
        %v715 = vrot.slane %v713, 7
        %v716 = vsel %vm375, %v714, %v715
        %v717 = vsel %vm375, %v715, %v714
        %v718 = vmul.f32 %v717, %v366
        %v719 = vmul.f32 %v716, %v367
        %v720 = vadd.f32 %v705, %v718
        %v721 = vadd.f32 %v706, %v719
        %v722 = vmul.f32 %v712, %v430
        %v723 = vmul.f32 %v713, %v430
        %v724 = vadd.f32 %v720, %v722
        %v725 = vadd.f32 %v721, %v723
        %v726 = vrot.slane %v712, 1
        %v727 = vrot.slane %v713, 1
        %v728 = vsel %vm394, %v726, %v727
        %v729 = vsel %vm394, %v727, %v726
        %v730 = vmul.f32 %v728, %v369
        %v731 = vmul.f32 %v729, %v370
        %v732 = vadd.f32 %v724, %v730
        %v733 = vadd.f32 %v725, %v731
        %v735 = vperm.slane %v331, 0
        %v737 = vadd.f32 %v449, %v735
        %v738 = vadd.f32 %v450, %v735
        %v739 = vmul.f32 %v737, 0.5
        %v740 = vmul.f32 %v738, 0.5
        %v741 = vmul.f32 %v737, 0.044715
        %v742 = vmul.f32 %v738, 0.044715
        %v743 = vmul.f32 %v741, %v737
        %v744 = vmul.f32 %v742, %v738
        %v745 = vmul.f32 %v743, %v737
        %v746 = vmul.f32 %v744, %v738
        %v747 = vadd.f32 %v737, %v745
        %v748 = vadd.f32 %v738, %v746
        %v749 = vmul.f32 %v747, 0.7978846
        %v750 = vmul.f32 %v748, 0.7978846
        %v751 = vtanh.pop %v749
        %v752 = vtanh.pop %v750
        %v753 = vadd.f32 %v751, 1.0
        %v754 = vadd.f32 %v752, 1.0
        %v755 = vmul.f32 %v739, %v753
        %v756 = vmul.f32 %v740, %v754
        %v758 = vperm.slane %v332, 0
        %v760 = vmul.f32 %v755, %v758
        %v761 = vmul.f32 %v756, %v758
        %v763 = vperm.slane %v333, 0
        %v765 = vadd.f32 %v760, %v763
        %v766 = vadd.f32 %v761, %v763
        %v767 = vadd.f32 %v765, %v371
        %v768 = vadd.f32 %v766, %v372
        %769 = vst [vmem:[%s318] sm:$0xff] %v767
        %770 = vst [vmem:[%s318 + $0x8] sm:$0xff] %v768
        %v771 = vadd.f32 %v494, %v735
        %v772 = vadd.f32 %v495, %v735
        %v773 = vmul.f32 %v771, 0.5
        %v774 = vmul.f32 %v772, 0.5
        %v775 = vmul.f32 %v771, 0.044715
        %v776 = vmul.f32 %v772, 0.044715
        %v777 = vmul.f32 %v775, %v771
        %v778 = vmul.f32 %v776, %v772
        %v779 = vmul.f32 %v777, %v771
        %v780 = vmul.f32 %v778, %v772
        %v781 = vadd.f32 %v771, %v779
        %v782 = vadd.f32 %v772, %v780
        %v783 = vmul.f32 %v781, 0.7978846
        %v784 = vmul.f32 %v782, 0.7978846
        %v785 = vtanh.pop %v783
        %v786 = vtanh.pop %v784
        %v787 = vadd.f32 %v785, 1.0
        %v788 = vadd.f32 %v786, 1.0
        %v789 = vmul.f32 %v773, %v787
        %v790 = vmul.f32 %v774, %v788
        %v791 = vmul.f32 %v789, %v758
        %v792 = vmul.f32 %v790, %v758
        %v793 = vadd.f32 %v791, %v763
        %v794 = vadd.f32 %v792, %v763
        %v795 = vld [vmem:[%s405] sm:$0xff]
        %v796 = vld [vmem:[%s405 + $0x8] sm:$0xff]
        %v797 = vadd.f32 %v793, %v795
        %v798 = vadd.f32 %v794, %v796
        %s799 = scalar_lea.vmem %s318, 16 [#allocation7]
        %800 = vst [vmem:[%s799] sm:$0xff] %v797
        %801 = vst [vmem:[%s799 + $0x8] sm:$0xff] %v798
        %v802 = vadd.f32 %v539, %v735
        %v803 = vadd.f32 %v540, %v735
        %v804 = vmul.f32 %v802, 0.5
        %v805 = vmul.f32 %v803, 0.5
        %v806 = vmul.f32 %v802, 0.044715
        %v807 = vmul.f32 %v803, 0.044715
        %v808 = vmul.f32 %v806, %v802
        %v809 = vmul.f32 %v807, %v803
        %v810 = vmul.f32 %v808, %v802
        %v811 = vmul.f32 %v809, %v803
        %v812 = vadd.f32 %v802, %v810
        %v813 = vadd.f32 %v803, %v811
        %v814 = vmul.f32 %v812, 0.7978846
        %v815 = vmul.f32 %v813, 0.7978846
        %v816 = vtanh.pop %v814
        %v817 = vtanh.pop %v815
        %v818 = vadd.f32 %v816, 1.0
        %v819 = vadd.f32 %v817, 1.0
        %v820 = vmul.f32 %v804, %v818
        %v821 = vmul.f32 %v805, %v819
        %v822 = vmul.f32 %v820, %v758
        %v823 = vmul.f32 %v821, %v758
        %v824 = vadd.f32 %v822, %v763
        %v825 = vadd.f32 %v823, %v763
        %v826 = vld [vmem:[%s451] sm:$0xff]
        %v827 = vld [vmem:[%s451 + $0x8] sm:$0xff]
        %v828 = vadd.f32 %v824, %v826
        %v829 = vadd.f32 %v825, %v827
        %s830 = scalar_lea.vmem %s318, 32 [#allocation7]
        %831 = vst [vmem:[%s830] sm:$0xff] %v828
        %832 = vst [vmem:[%s830 + $0x8] sm:$0xff] %v829
        %v833 = vadd.f32 %v584, %v735
        %v834 = vadd.f32 %v585, %v735
        %v835 = vmul.f32 %v833, 0.5
        %v836 = vmul.f32 %v834, 0.5
        %v837 = vmul.f32 %v833, 0.044715
        %v838 = vmul.f32 %v834, 0.044715
        %v839 = vmul.f32 %v837, %v833
        %v840 = vmul.f32 %v838, %v834
        %v841 = vmul.f32 %v839, %v833
        %v842 = vmul.f32 %v840, %v834
        %v843 = vadd.f32 %v833, %v841
        %v844 = vadd.f32 %v834, %v842
        %v845 = vmul.f32 %v843, 0.7978846
        %v846 = vmul.f32 %v844, 0.7978846
        %v847 = vtanh.pop %v845
        %v848 = vtanh.pop %v846
        %v849 = vadd.f32 %v847, 1.0
        %v850 = vadd.f32 %v848, 1.0
        %v851 = vmul.f32 %v835, %v849
        %v852 = vmul.f32 %v836, %v850
        %v853 = vmul.f32 %v851, %v758
        %v854 = vmul.f32 %v852, %v758
        %v855 = vadd.f32 %v853, %v763
        %v856 = vadd.f32 %v854, %v763
        %v857 = vld [vmem:[%s496] sm:$0xff]
        %v858 = vld [vmem:[%s496 + $0x8] sm:$0xff]
        %v859 = vadd.f32 %v855, %v857
        %v860 = vadd.f32 %v856, %v858
        %s861 = scalar_lea.vmem %s318, 48 [#allocation7]
        %862 = vst [vmem:[%s861] sm:$0xff] %v859
        %863 = vst [vmem:[%s861 + $0x8] sm:$0xff] %v860
        %v864 = vadd.f32 %v629, %v735
        %v865 = vadd.f32 %v630, %v735
        %v866 = vmul.f32 %v864, 0.5
        %v867 = vmul.f32 %v865, 0.5
        %v868 = vmul.f32 %v864, 0.044715
        %v869 = vmul.f32 %v865, 0.044715
        %v870 = vmul.f32 %v868, %v864
        %v871 = vmul.f32 %v869, %v865
        %v872 = vmul.f32 %v870, %v864
        %v873 = vmul.f32 %v871, %v865
        %v874 = vadd.f32 %v864, %v872
        %v875 = vadd.f32 %v865, %v873
        %v876 = vmul.f32 %v874, 0.7978846
        %v877 = vmul.f32 %v875, 0.7978846
        %v878 = vtanh.pop %v876
        %v879 = vtanh.pop %v877
        %v880 = vadd.f32 %v878, 1.0
        %v881 = vadd.f32 %v879, 1.0
        %v882 = vmul.f32 %v866, %v880
        %v883 = vmul.f32 %v867, %v881
        %v884 = vmul.f32 %v882, %v758
        %v885 = vmul.f32 %v883, %v758
        %v886 = vadd.f32 %v884, %v763
        %v887 = vadd.f32 %v885, %v763
        %v888 = vld [vmem:[%s541] sm:$0xff]
        %v889 = vld [vmem:[%s541 + $0x8] sm:$0xff]
        %v890 = vadd.f32 %v886, %v888
        %v891 = vadd.f32 %v887, %v889
        %s892 = scalar_lea.vmem %s318, 64 [#allocation7]
        %893 = vst [vmem:[%s892] sm:$0xff] %v890
        %894 = vst [vmem:[%s892 + $0x8] sm:$0xff] %v891
        %v895 = vadd.f32 %v674, %v735
        %v896 = vadd.f32 %v675, %v735
        %v897 = vmul.f32 %v895, 0.5
        %v898 = vmul.f32 %v896, 0.5
        %v899 = vmul.f32 %v895, 0.044715
        %v900 = vmul.f32 %v896, 0.044715
        %v901 = vmul.f32 %v899, %v895
        %v902 = vmul.f32 %v900, %v896
        %v903 = vmul.f32 %v901, %v895
        %v904 = vmul.f32 %v902, %v896
        %v905 = vadd.f32 %v895, %v903
        %v906 = vadd.f32 %v896, %v904
        %v907 = vmul.f32 %v905, 0.7978846
        %v908 = vmul.f32 %v906, 0.7978846
        %v909 = vtanh.pop %v907
        %v910 = vtanh.pop %v908
        %v911 = vadd.f32 %v909, 1.0
        %v912 = vadd.f32 %v910, 1.0
        %v913 = vmul.f32 %v897, %v911
        %v914 = vmul.f32 %v898, %v912
        %v915 = vmul.f32 %v913, %v758
        %v916 = vmul.f32 %v914, %v758
        %v917 = vadd.f32 %v915, %v763
        %v918 = vadd.f32 %v916, %v763
        %v919 = vld [vmem:[%s586] sm:$0xff]
        %v920 = vld [vmem:[%s586 + $0x8] sm:$0xff]
        %v921 = vadd.f32 %v917, %v919
        %v922 = vadd.f32 %v918, %v920
        %s923 = scalar_lea.vmem %s318, 80 [#allocation7]
        %924 = vst [vmem:[%s923] sm:$0xff] %v921
        %925 = vst [vmem:[%s923 + $0x8] sm:$0xff] %v922
        %v926 = vadd.f32 %v709, %v735
        %v927 = vadd.f32 %v710, %v735
        %v928 = vmul.f32 %v926, 0.5
        %v929 = vmul.f32 %v927, 0.5
        %v930 = vmul.f32 %v926, 0.044715
        %v931 = vmul.f32 %v927, 0.044715
        %v932 = vmul.f32 %v930, %v926
        %v933 = vmul.f32 %v931, %v927
        %v934 = vmul.f32 %v932, %v926
        %v935 = vmul.f32 %v933, %v927
        %v936 = vadd.f32 %v926, %v934
        %v937 = vadd.f32 %v927, %v935
        %v938 = vmul.f32 %v936, 0.7978846
        %v939 = vmul.f32 %v937, 0.7978846
        %v940 = vtanh.pop %v938
        %v941 = vtanh.pop %v939
        %v942 = vadd.f32 %v940, 1.0
        %v943 = vadd.f32 %v941, 1.0
        %v944 = vmul.f32 %v928, %v942
        %v945 = vmul.f32 %v929, %v943
        %v946 = vmul.f32 %v944, %v758
        %v947 = vmul.f32 %v945, %v758
        %v948 = vadd.f32 %v946, %v763
        %v949 = vadd.f32 %v947, %v763
        %v950 = vld [vmem:[%s631] sm:$0xff]
        %v951 = vld [vmem:[%s631 + $0x8] sm:$0xff]
        %v952 = vadd.f32 %v948, %v950
        %v953 = vadd.f32 %v949, %v951
        %s954 = scalar_lea.vmem %s318, 96 [#allocation7]
        %955 = vst [vmem:[%s954] sm:$0xff] %v952
        %956 = vst [vmem:[%s954 + $0x8] sm:$0xff] %v953
        %v957 = vadd.f32 %v732, %v735
        %v958 = vadd.f32 %v733, %v735
        %v959 = vmul.f32 %v957, 0.5
        %v960 = vmul.f32 %v958, 0.5
        %v961 = vmul.f32 %v957, 0.044715
        %v962 = vmul.f32 %v958, 0.044715
        %v963 = vmul.f32 %v961, %v957
        %v964 = vmul.f32 %v962, %v958
        %v965 = vmul.f32 %v963, %v957
        %v966 = vmul.f32 %v964, %v958
        %v967 = vadd.f32 %v957, %v965
        %v968 = vadd.f32 %v958, %v966
        %v969 = vmul.f32 %v967, 0.7978846
        %v970 = vmul.f32 %v968, 0.7978846
        %v971 = vtanh.pop %v969
        %v972 = vtanh.pop %v970
        %v973 = vadd.f32 %v971, 1.0
        %v974 = vadd.f32 %v972, 1.0
        %v975 = vmul.f32 %v959, %v973
        %v976 = vmul.f32 %v960, %v974
        %v977 = vmul.f32 %v975, %v758
        %v978 = vmul.f32 %v976, %v758
        %v979 = vadd.f32 %v977, %v763
        %v980 = vadd.f32 %v978, %v763
        %v981 = vld [vmem:[%s676] sm:$0xff]
        %v982 = vld [vmem:[%s676 + $0x8] sm:$0xff]
        %v983 = vadd.f32 %v979, %v981
        %v984 = vadd.f32 %v980, %v982
        %s985 = scalar_lea.vmem %s318, 112 [#allocation7]
        %986 = vst [vmem:[%s985] sm:$0xff] %v983
        %987 = vst [vmem:[%s985 + $0x8] sm:$0xff] %v984
        %v988 = vld [vmem:[%s676] sm:$0xff]
        %v989 = vld [vmem:[%s676 + $0x8] sm:$0xff]
        %v990 = vrot.slane %v988, 7
        %v991 = vrot.slane %v989, 7
        %v992 = vsel %vm375, %v990, %v991
        %v993 = vsel %vm375, %v991, %v990
        %v994 = vmul.f32 %v993, %v346
        %v995 = vmul.f32 %v992, %v347
        %v996 = vmul.f32 %v988, %v382
        %v997 = vmul.f32 %v989, %v382
        %v998 = vadd.f32 %v994, %v996
        %v999 = vadd.f32 %v995, %v997
        %v1000 = vrot.slane %v988, 1
        %v1001 = vrot.slane %v989, 1
        %v1002 = vsel %vm394, %v1000, %v1001
        %v1003 = vsel %vm394, %v1001, %v1000
        %v1004 = vmul.f32 %v1002, %v357
        %v1005 = vmul.f32 %v1003, %v358
        %v1006 = vadd.f32 %v998, %v1004
        %v1007 = vadd.f32 %v999, %v1005
        %v1008 = vld [vmem:[%s711] sm:$0xff]
        %v1009 = vld [vmem:[%s711 + $0x8] sm:$0xff]
        %v1010 = vrot.slane %v1008, 7
        %v1011 = vrot.slane %v1009, 7
        %v1012 = vsel %vm375, %v1010, %v1011
        %v1013 = vsel %vm375, %v1011, %v1010
        %v1014 = vmul.f32 %v1013, %v346
        %v1015 = vmul.f32 %v1012, %v347
        %v1016 = vmul.f32 %v1013, %v360
        %v1017 = vmul.f32 %v1012, %v361
        %v1018 = vadd.f32 %v1006, %v1016
        %v1019 = vadd.f32 %v1007, %v1017
        %v1020 = vmul.f32 %v1008, %v382
        %v1021 = vmul.f32 %v1009, %v382
        %v1022 = vadd.f32 %v1014, %v1020
        %v1023 = vadd.f32 %v1015, %v1021
        %v1024 = vmul.f32 %v1008, %v387
        %v1025 = vmul.f32 %v1009, %v387
        %v1026 = vadd.f32 %v1018, %v1024
        %v1027 = vadd.f32 %v1019, %v1025
        %v1028 = vrot.slane %v1008, 1
        %v1029 = vrot.slane %v1009, 1
        %v1030 = vsel %vm394, %v1028, %v1029
        %v1031 = vsel %vm394, %v1029, %v1028
        %v1032 = vmul.f32 %v1030, %v357
        %v1033 = vmul.f32 %v1031, %v358
        %v1034 = vadd.f32 %v1022, %v1032
        %v1035 = vadd.f32 %v1023, %v1033
        %v1036 = vmul.f32 %v1030, %v363
        %v1037 = vmul.f32 %v1031, %v364
        %v1038 = vadd.f32 %v1026, %v1036
        %v1039 = vadd.f32 %v1027, %v1037
        %s1040 = scalar_lea.vmem %s277, 144 [#allocation2]
        %v1041 = vld [vmem:[%s1040] sm:$0xff]
        %v1042 = vld [vmem:[%s1040 + $0x8] sm:$0xff]
        %v1043 = vrot.slane %v1041, 7
        %v1044 = vrot.slane %v1042, 7
        %v1045 = vsel %vm375, %v1043, %v1044
        %v1046 = vsel %vm375, %v1044, %v1043
        %v1047 = vmul.f32 %v1046, %v346
        %v1048 = vmul.f32 %v1045, %v347
        %v1049 = vmul.f32 %v1046, %v360
        %v1050 = vmul.f32 %v1045, %v361
        %v1051 = vadd.f32 %v1034, %v1049
        %v1052 = vadd.f32 %v1035, %v1050
        %v1053 = vmul.f32 %v1046, %v366
        %v1054 = vmul.f32 %v1045, %v367
        %v1055 = vadd.f32 %v1038, %v1053
        %v1056 = vadd.f32 %v1039, %v1054
        %v1057 = vmul.f32 %v1041, %v382
        %v1058 = vmul.f32 %v1042, %v382
        %v1059 = vadd.f32 %v1047, %v1057
        %v1060 = vadd.f32 %v1048, %v1058
        %v1061 = vmul.f32 %v1041, %v387
        %v1062 = vmul.f32 %v1042, %v387
        %v1063 = vadd.f32 %v1051, %v1061
        %v1064 = vadd.f32 %v1052, %v1062
        %v1065 = vmul.f32 %v1041, %v430
        %v1066 = vmul.f32 %v1042, %v430
        %v1067 = vadd.f32 %v1055, %v1065
        %v1068 = vadd.f32 %v1056, %v1066
        %v1069 = vrot.slane %v1041, 1
        %v1070 = vrot.slane %v1042, 1
        %v1071 = vsel %vm394, %v1069, %v1070
        %v1072 = vsel %vm394, %v1070, %v1069
        %v1073 = vmul.f32 %v1071, %v357
        %v1074 = vmul.f32 %v1072, %v358
        %v1075 = vadd.f32 %v1059, %v1073
        %v1076 = vadd.f32 %v1060, %v1074
        %v1077 = vmul.f32 %v1071, %v363
        %v1078 = vmul.f32 %v1072, %v364
        %v1079 = vadd.f32 %v1063, %v1077
        %v1080 = vadd.f32 %v1064, %v1078
        %v1081 = vmul.f32 %v1071, %v369
        %v1082 = vmul.f32 %v1072, %v370
        %v1083 = vadd.f32 %v1067, %v1081
        %v1084 = vadd.f32 %v1068, %v1082
        %s1085 = scalar_lea.vmem %s277, 160 [#allocation2]
        %v1086 = vld [vmem:[%s1085] sm:$0xff]
        %v1087 = vld [vmem:[%s1085 + $0x8] sm:$0xff]
        %v1088 = vrot.slane %v1086, 7
        %v1089 = vrot.slane %v1087, 7
        %v1090 = vsel %vm375, %v1088, %v1089
        %v1091 = vsel %vm375, %v1089, %v1088
        %v1092 = vmul.f32 %v1091, %v346
        %v1093 = vmul.f32 %v1090, %v347
        %v1094 = vmul.f32 %v1091, %v360
        %v1095 = vmul.f32 %v1090, %v361
        %v1096 = vadd.f32 %v1075, %v1094
        %v1097 = vadd.f32 %v1076, %v1095
        %v1098 = vmul.f32 %v1091, %v366
        %v1099 = vmul.f32 %v1090, %v367
        %v1100 = vadd.f32 %v1079, %v1098
        %v1101 = vadd.f32 %v1080, %v1099
        %v1102 = vmul.f32 %v1086, %v382
        %v1103 = vmul.f32 %v1087, %v382
        %v1104 = vadd.f32 %v1092, %v1102
        %v1105 = vadd.f32 %v1093, %v1103
        %v1106 = vmul.f32 %v1086, %v387
        %v1107 = vmul.f32 %v1087, %v387
        %v1108 = vadd.f32 %v1096, %v1106
        %v1109 = vadd.f32 %v1097, %v1107
        %v1110 = vmul.f32 %v1086, %v430
        %v1111 = vmul.f32 %v1087, %v430
        %v1112 = vadd.f32 %v1100, %v1110
        %v1113 = vadd.f32 %v1101, %v1111
        %v1114 = vrot.slane %v1086, 1
        %v1115 = vrot.slane %v1087, 1
        %v1116 = vsel %vm394, %v1114, %v1115
        %v1117 = vsel %vm394, %v1115, %v1114
        %v1118 = vmul.f32 %v1116, %v357
        %v1119 = vmul.f32 %v1117, %v358
        %v1120 = vadd.f32 %v1104, %v1118
        %v1121 = vadd.f32 %v1105, %v1119
        %v1122 = vmul.f32 %v1116, %v363
        %v1123 = vmul.f32 %v1117, %v364
        %v1124 = vadd.f32 %v1108, %v1122
        %v1125 = vadd.f32 %v1109, %v1123
        %v1126 = vmul.f32 %v1116, %v369
        %v1127 = vmul.f32 %v1117, %v370
        %v1128 = vadd.f32 %v1112, %v1126
        %v1129 = vadd.f32 %v1113, %v1127
        %s1130 = scalar_lea.vmem %s277, 176 [#allocation2]
        %v1131 = vld [vmem:[%s1130] sm:$0xff]
        %v1132 = vld [vmem:[%s1130 + $0x8] sm:$0xff]
        %v1133 = vrot.slane %v1131, 7
        %v1134 = vrot.slane %v1132, 7
        %v1135 = vsel %vm375, %v1133, %v1134
        %v1136 = vsel %vm375, %v1134, %v1133
        %v1137 = vmul.f32 %v1136, %v346
        %v1138 = vmul.f32 %v1135, %v347
        %v1139 = vmul.f32 %v1136, %v360
        %v1140 = vmul.f32 %v1135, %v361
        %v1141 = vadd.f32 %v1120, %v1139
        %v1142 = vadd.f32 %v1121, %v1140
        %v1143 = vmul.f32 %v1136, %v366
        %v1144 = vmul.f32 %v1135, %v367
        %v1145 = vadd.f32 %v1124, %v1143
        %v1146 = vadd.f32 %v1125, %v1144
        %v1147 = vmul.f32 %v1131, %v382
        %v1148 = vmul.f32 %v1132, %v382
        %v1149 = vadd.f32 %v1137, %v1147
        %v1150 = vadd.f32 %v1138, %v1148
        %v1151 = vmul.f32 %v1131, %v387
        %v1152 = vmul.f32 %v1132, %v387
        %v1153 = vadd.f32 %v1141, %v1151
        %v1154 = vadd.f32 %v1142, %v1152
        %v1155 = vmul.f32 %v1131, %v430
        %v1156 = vmul.f32 %v1132, %v430
        %v1157 = vadd.f32 %v1145, %v1155
        %v1158 = vadd.f32 %v1146, %v1156
        %v1159 = vrot.slane %v1131, 1
        %v1160 = vrot.slane %v1132, 1
        %v1161 = vsel %vm394, %v1159, %v1160
        %v1162 = vsel %vm394, %v1160, %v1159
        %v1163 = vmul.f32 %v1161, %v357
        %v1164 = vmul.f32 %v1162, %v358
        %v1165 = vadd.f32 %v1149, %v1163
        %v1166 = vadd.f32 %v1150, %v1164
        %v1167 = vmul.f32 %v1161, %v363
        %v1168 = vmul.f32 %v1162, %v364
        %v1169 = vadd.f32 %v1153, %v1167
        %v1170 = vadd.f32 %v1154, %v1168
        %v1171 = vmul.f32 %v1161, %v369
        %v1172 = vmul.f32 %v1162, %v370
        %v1173 = vadd.f32 %v1157, %v1171
        %v1174 = vadd.f32 %v1158, %v1172
        %s1175 = scalar_lea.vmem %s277, 192 [#allocation2]
        %v1176 = vld [vmem:[%s1175] sm:$0xff]
        %v1177 = vld [vmem:[%s1175 + $0x8] sm:$0xff]
        %v1178 = vrot.slane %v1176, 7
        %v1179 = vrot.slane %v1177, 7
        %v1180 = vsel %vm375, %v1178, %v1179
        %v1181 = vsel %vm375, %v1179, %v1178
        %v1182 = vmul.f32 %v1181, %v346
        %v1183 = vmul.f32 %v1180, %v347
        %v1184 = vmul.f32 %v1181, %v360
        %v1185 = vmul.f32 %v1180, %v361
        %v1186 = vadd.f32 %v1165, %v1184
        %v1187 = vadd.f32 %v1166, %v1185
        %v1188 = vmul.f32 %v1181, %v366
        %v1189 = vmul.f32 %v1180, %v367
        %v1190 = vadd.f32 %v1169, %v1188
        %v1191 = vadd.f32 %v1170, %v1189
        %v1192 = vmul.f32 %v1176, %v382
        %v1193 = vmul.f32 %v1177, %v382
        %v1194 = vadd.f32 %v1182, %v1192
        %v1195 = vadd.f32 %v1183, %v1193
        %v1196 = vmul.f32 %v1176, %v387
        %v1197 = vmul.f32 %v1177, %v387
        %v1198 = vadd.f32 %v1186, %v1196
        %v1199 = vadd.f32 %v1187, %v1197
        %v1200 = vmul.f32 %v1176, %v430
        %v1201 = vmul.f32 %v1177, %v430
        %v1202 = vadd.f32 %v1190, %v1200
        %v1203 = vadd.f32 %v1191, %v1201
        %v1204 = vrot.slane %v1176, 1
        %v1205 = vrot.slane %v1177, 1
        %v1206 = vsel %vm394, %v1204, %v1205
        %v1207 = vsel %vm394, %v1205, %v1204
        %v1208 = vmul.f32 %v1206, %v357
        %v1209 = vmul.f32 %v1207, %v358
        %v1210 = vadd.f32 %v1194, %v1208
        %v1211 = vadd.f32 %v1195, %v1209
        %v1212 = vmul.f32 %v1206, %v363
        %v1213 = vmul.f32 %v1207, %v364
        %v1214 = vadd.f32 %v1198, %v1212
        %v1215 = vadd.f32 %v1199, %v1213
        %v1216 = vmul.f32 %v1206, %v369
        %v1217 = vmul.f32 %v1207, %v370
        %v1218 = vadd.f32 %v1202, %v1216
        %v1219 = vadd.f32 %v1203, %v1217
        %s1220 = scalar_lea.vmem %s277, 208 [#allocation2]
        %v1221 = vld [vmem:[%s1220] sm:$0xff]
        %v1222 = vld [vmem:[%s1220 + $0x8] sm:$0xff]
        %v1223 = vrot.slane %v1221, 7
        %v1224 = vrot.slane %v1222, 7
        %v1225 = vsel %vm375, %v1223, %v1224
        %v1226 = vsel %vm375, %v1224, %v1223
        %v1227 = vmul.f32 %v1226, %v346
        %v1228 = vmul.f32 %v1225, %v347
        %v1229 = vmul.f32 %v1226, %v360
        %v1230 = vmul.f32 %v1225, %v361
        %v1231 = vadd.f32 %v1210, %v1229
        %v1232 = vadd.f32 %v1211, %v1230
        %v1233 = vmul.f32 %v1226, %v366
        %v1234 = vmul.f32 %v1225, %v367
        %v1235 = vadd.f32 %v1214, %v1233
        %v1236 = vadd.f32 %v1215, %v1234
        %v1237 = vmul.f32 %v1221, %v382
        %v1238 = vmul.f32 %v1222, %v382
        %v1239 = vadd.f32 %v1227, %v1237
        %v1240 = vadd.f32 %v1228, %v1238
        %v1241 = vmul.f32 %v1221, %v387
        %v1242 = vmul.f32 %v1222, %v387
        %v1243 = vadd.f32 %v1231, %v1241
        %v1244 = vadd.f32 %v1232, %v1242
        %v1245 = vmul.f32 %v1221, %v430
        %v1246 = vmul.f32 %v1222, %v430
        %v1247 = vadd.f32 %v1235, %v1245
        %v1248 = vadd.f32 %v1236, %v1246
        %v1249 = vrot.slane %v1221, 1
        %v1250 = vrot.slane %v1222, 1
        %v1251 = vsel %vm394, %v1249, %v1250
        %v1252 = vsel %vm394, %v1250, %v1249
        %v1253 = vmul.f32 %v1251, %v357
        %v1254 = vmul.f32 %v1252, %v358
        %v1255 = vadd.f32 %v1239, %v1253
        %v1256 = vadd.f32 %v1240, %v1254
        %v1257 = vmul.f32 %v1251, %v363
        %v1258 = vmul.f32 %v1252, %v364
        %v1259 = vadd.f32 %v1243, %v1257
        %v1260 = vadd.f32 %v1244, %v1258
        %v1261 = vmul.f32 %v1251, %v369
        %v1262 = vmul.f32 %v1252, %v370
        %v1263 = vadd.f32 %v1247, %v1261
        %v1264 = vadd.f32 %v1248, %v1262
        %s1265 = scalar_lea.vmem %s277, 224 [#allocation2]
        %v1266 = vld [vmem:[%s1265] sm:$0xff]
        %v1267 = vld [vmem:[%s1265 + $0x8] sm:$0xff]
        %v1268 = vrot.slane %v1266, 7
        %v1269 = vrot.slane %v1267, 7
        %v1270 = vsel %vm375, %v1268, %v1269
        %v1271 = vsel %vm375, %v1269, %v1268
        %v1272 = vmul.f32 %v1271, %v346
        %v1273 = vmul.f32 %v1270, %v347
        %v1274 = vmul.f32 %v1271, %v360
        %v1275 = vmul.f32 %v1270, %v361
        %v1276 = vadd.f32 %v1255, %v1274
        %v1277 = vadd.f32 %v1256, %v1275
        %v1278 = vmul.f32 %v1271, %v366
        %v1279 = vmul.f32 %v1270, %v367
        %v1280 = vadd.f32 %v1259, %v1278
        %v1281 = vadd.f32 %v1260, %v1279
        %v1282 = vmul.f32 %v1266, %v382
        %v1283 = vmul.f32 %v1267, %v382
        %v1284 = vadd.f32 %v1272, %v1282
        %v1285 = vadd.f32 %v1273, %v1283
        %v1286 = vmul.f32 %v1266, %v387
        %v1287 = vmul.f32 %v1267, %v387
        %v1288 = vadd.f32 %v1276, %v1286
        %v1289 = vadd.f32 %v1277, %v1287
        %v1290 = vmul.f32 %v1266, %v430
        %v1291 = vmul.f32 %v1267, %v430
        %v1292 = vadd.f32 %v1280, %v1290
        %v1293 = vadd.f32 %v1281, %v1291
        %v1294 = vrot.slane %v1266, 1
        %v1295 = vrot.slane %v1267, 1
        %v1296 = vsel %vm394, %v1294, %v1295
        %v1297 = vsel %vm394, %v1295, %v1294
        %v1298 = vmul.f32 %v1296, %v357
        %v1299 = vmul.f32 %v1297, %v358
        %v1300 = vadd.f32 %v1284, %v1298
        %v1301 = vadd.f32 %v1285, %v1299
        %v1302 = vmul.f32 %v1296, %v363
        %v1303 = vmul.f32 %v1297, %v364
        %v1304 = vadd.f32 %v1288, %v1302
        %v1305 = vadd.f32 %v1289, %v1303
        %v1306 = vmul.f32 %v1296, %v369
        %v1307 = vmul.f32 %v1297, %v370
        %v1308 = vadd.f32 %v1292, %v1306
        %v1309 = vadd.f32 %v1293, %v1307
        %s1310 = scalar_lea.vmem %s277, 240 [#allocation2]
        %v1311 = vld [vmem:[%s1310] sm:$0xff]
        %v1312 = vld [vmem:[%s1310 + $0x8] sm:$0xff]
        %v1313 = vrot.slane %v1311, 7
        %v1314 = vrot.slane %v1312, 7
        %v1315 = vsel %vm375, %v1313, %v1314
        %v1316 = vsel %vm375, %v1314, %v1313
        %v1317 = vmul.f32 %v1316, %v360
        %v1318 = vmul.f32 %v1315, %v361
        %v1319 = vadd.f32 %v1300, %v1317
        %v1320 = vadd.f32 %v1301, %v1318
        %v1321 = vmul.f32 %v1316, %v366
        %v1322 = vmul.f32 %v1315, %v367
        %v1323 = vadd.f32 %v1304, %v1321
        %v1324 = vadd.f32 %v1305, %v1322
        %v1325 = vmul.f32 %v1311, %v387
        %v1326 = vmul.f32 %v1312, %v387
        %v1327 = vadd.f32 %v1319, %v1325
        %v1328 = vadd.f32 %v1320, %v1326
        %v1329 = vmul.f32 %v1311, %v430
        %v1330 = vmul.f32 %v1312, %v430
        %v1331 = vadd.f32 %v1323, %v1329
        %v1332 = vadd.f32 %v1324, %v1330
        %v1333 = vrot.slane %v1311, 1
        %v1334 = vrot.slane %v1312, 1
        %v1335 = vsel %vm394, %v1333, %v1334
        %v1336 = vsel %vm394, %v1334, %v1333
        %v1337 = vmul.f32 %v1335, %v363
        %v1338 = vmul.f32 %v1336, %v364
        %v1339 = vadd.f32 %v1327, %v1337
        %v1340 = vadd.f32 %v1328, %v1338
        %v1341 = vmul.f32 %v1335, %v369
        %v1342 = vmul.f32 %v1336, %v370
        %v1343 = vadd.f32 %v1331, %v1341
        %v1344 = vadd.f32 %v1332, %v1342
        %v1345 = vadd.f32 %v1083, %v735
        %v1346 = vadd.f32 %v1084, %v735
        %v1347 = vmul.f32 %v1345, 0.5
        %v1348 = vmul.f32 %v1346, 0.5
        %v1349 = vmul.f32 %v1345, 0.044715
        %v1350 = vmul.f32 %v1346, 0.044715
        %v1351 = vmul.f32 %v1349, %v1345
        %v1352 = vmul.f32 %v1350, %v1346
        %v1353 = vmul.f32 %v1351, %v1345
        %v1354 = vmul.f32 %v1352, %v1346
        %v1355 = vadd.f32 %v1345, %v1353
        %v1356 = vadd.f32 %v1346, %v1354
        %v1357 = vmul.f32 %v1355, 0.7978846
        %v1358 = vmul.f32 %v1356, 0.7978846
        %v1359 = vtanh.pop %v1357
        %v1360 = vtanh.pop %v1358
        %v1361 = vadd.f32 %v1359, 1.0
        %v1362 = vadd.f32 %v1360, 1.0
        %v1363 = vmul.f32 %v1347, %v1361
        %v1364 = vmul.f32 %v1348, %v1362
        %v1365 = vmul.f32 %v1363, %v758
        %v1366 = vmul.f32 %v1364, %v758
        %v1367 = vadd.f32 %v1365, %v763
        %v1368 = vadd.f32 %v1366, %v763
        %v1369 = vadd.f32 %v1367, %v1008
        %v1370 = vadd.f32 %v1368, %v1009
        %s1371 = scalar_lea.vmem %s318, 128 [#allocation7]
        %1372 = vst [vmem:[%s1371] sm:$0xff] %v1369
        %1373 = vst [vmem:[%s1371 + $0x8] sm:$0xff] %v1370
        %v1374 = vadd.f32 %v1128, %v735
        %v1375 = vadd.f32 %v1129, %v735
        %v1376 = vmul.f32 %v1374, 0.5
        %v1377 = vmul.f32 %v1375, 0.5
        %v1378 = vmul.f32 %v1374, 0.044715
        %v1379 = vmul.f32 %v1375, 0.044715
        %v1380 = vmul.f32 %v1378, %v1374
        %v1381 = vmul.f32 %v1379, %v1375
        %v1382 = vmul.f32 %v1380, %v1374
        %v1383 = vmul.f32 %v1381, %v1375
        %v1384 = vadd.f32 %v1374, %v1382
        %v1385 = vadd.f32 %v1375, %v1383
        %v1386 = vmul.f32 %v1384, 0.7978846
        %v1387 = vmul.f32 %v1385, 0.7978846
        %v1388 = vtanh.pop %v1386
        %v1389 = vtanh.pop %v1387
        %v1390 = vadd.f32 %v1388, 1.0
        %v1391 = vadd.f32 %v1389, 1.0
        %v1392 = vmul.f32 %v1376, %v1390
        %v1393 = vmul.f32 %v1377, %v1391
        %v1394 = vmul.f32 %v1392, %v758
        %v1395 = vmul.f32 %v1393, %v758
        %v1396 = vadd.f32 %v1394, %v763
        %v1397 = vadd.f32 %v1395, %v763
        %v1398 = vld [vmem:[%s1040] sm:$0xff]
        %v1399 = vld [vmem:[%s1040 + $0x8] sm:$0xff]
        %v1400 = vadd.f32 %v1396, %v1398
        %v1401 = vadd.f32 %v1397, %v1399
        %s1402 = scalar_lea.vmem %s318, 144 [#allocation7]
        %1403 = vst [vmem:[%s1402] sm:$0xff] %v1400
        %1404 = vst [vmem:[%s1402 + $0x8] sm:$0xff] %v1401
        %v1405 = vadd.f32 %v1173, %v735
        %v1406 = vadd.f32 %v1174, %v735
        %v1407 = vmul.f32 %v1405, 0.5
        %v1408 = vmul.f32 %v1406, 0.5
        %v1409 = vmul.f32 %v1405, 0.044715
        %v1410 = vmul.f32 %v1406, 0.044715
        %v1411 = vmul.f32 %v1409, %v1405
        %v1412 = vmul.f32 %v1410, %v1406
        %v1413 = vmul.f32 %v1411, %v1405
        %v1414 = vmul.f32 %v1412, %v1406
        %v1415 = vadd.f32 %v1405, %v1413
        %v1416 = vadd.f32 %v1406, %v1414
        %v1417 = vmul.f32 %v1415, 0.7978846
        %v1418 = vmul.f32 %v1416, 0.7978846
        %v1419 = vtanh.pop %v1417
        %v1420 = vtanh.pop %v1418
        %v1421 = vadd.f32 %v1419, 1.0
        %v1422 = vadd.f32 %v1420, 1.0
        %v1423 = vmul.f32 %v1407, %v1421
        %v1424 = vmul.f32 %v1408, %v1422
        %v1425 = vmul.f32 %v1423, %v758
        %v1426 = vmul.f32 %v1424, %v758
        %v1427 = vadd.f32 %v1425, %v763
        %v1428 = vadd.f32 %v1426, %v763
        %v1429 = vld [vmem:[%s1085] sm:$0xff]
        %v1430 = vld [vmem:[%s1085 + $0x8] sm:$0xff]
        %v1431 = vadd.f32 %v1427, %v1429
        %v1432 = vadd.f32 %v1428, %v1430
        %s1433 = scalar_lea.vmem %s318, 160 [#allocation7]
        %1434 = vst [vmem:[%s1433] sm:$0xff] %v1431
        %1435 = vst [vmem:[%s1433 + $0x8] sm:$0xff] %v1432
        %v1436 = vadd.f32 %v1218, %v735
        %v1437 = vadd.f32 %v1219, %v735
        %v1438 = vmul.f32 %v1436, 0.5
        %v1439 = vmul.f32 %v1437, 0.5
        %v1440 = vmul.f32 %v1436, 0.044715
        %v1441 = vmul.f32 %v1437, 0.044715
        %v1442 = vmul.f32 %v1440, %v1436
        %v1443 = vmul.f32 %v1441, %v1437
        %v1444 = vmul.f32 %v1442, %v1436
        %v1445 = vmul.f32 %v1443, %v1437
        %v1446 = vadd.f32 %v1436, %v1444
        %v1447 = vadd.f32 %v1437, %v1445
        %v1448 = vmul.f32 %v1446, 0.7978846
        %v1449 = vmul.f32 %v1447, 0.7978846
        %v1450 = vtanh.pop %v1448
        %v1451 = vtanh.pop %v1449
        %v1452 = vadd.f32 %v1450, 1.0
        %v1453 = vadd.f32 %v1451, 1.0
        %v1454 = vmul.f32 %v1438, %v1452
        %v1455 = vmul.f32 %v1439, %v1453
        %v1456 = vmul.f32 %v1454, %v758
        %v1457 = vmul.f32 %v1455, %v758
        %v1458 = vadd.f32 %v1456, %v763
        %v1459 = vadd.f32 %v1457, %v763
        %v1460 = vld [vmem:[%s1130] sm:$0xff]
        %v1461 = vld [vmem:[%s1130 + $0x8] sm:$0xff]
        %v1462 = vadd.f32 %v1458, %v1460
        %v1463 = vadd.f32 %v1459, %v1461
        %s1464 = scalar_lea.vmem %s318, 176 [#allocation7]
        %1465 = vst [vmem:[%s1464] sm:$0xff] %v1462
        %1466 = vst [vmem:[%s1464 + $0x8] sm:$0xff] %v1463
        %v1467 = vadd.f32 %v1263, %v735
        %v1468 = vadd.f32 %v1264, %v735
        %v1469 = vmul.f32 %v1467, 0.5
        %v1470 = vmul.f32 %v1468, 0.5
        %v1471 = vmul.f32 %v1467, 0.044715
        %v1472 = vmul.f32 %v1468, 0.044715
        %v1473 = vmul.f32 %v1471, %v1467
        %v1474 = vmul.f32 %v1472, %v1468
        %v1475 = vmul.f32 %v1473, %v1467
        %v1476 = vmul.f32 %v1474, %v1468
        %v1477 = vadd.f32 %v1467, %v1475
        %v1478 = vadd.f32 %v1468, %v1476
        %v1479 = vmul.f32 %v1477, 0.7978846
        %v1480 = vmul.f32 %v1478, 0.7978846
        %v1481 = vtanh.pop %v1479
        %v1482 = vtanh.pop %v1480
        %v1483 = vadd.f32 %v1481, 1.0
        %v1484 = vadd.f32 %v1482, 1.0
        %v1485 = vmul.f32 %v1469, %v1483
        %v1486 = vmul.f32 %v1470, %v1484
        %v1487 = vmul.f32 %v1485, %v758
        %v1488 = vmul.f32 %v1486, %v758
        %v1489 = vadd.f32 %v1487, %v763
        %v1490 = vadd.f32 %v1488, %v763
        %v1491 = vld [vmem:[%s1175] sm:$0xff]
        %v1492 = vld [vmem:[%s1175 + $0x8] sm:$0xff]
        %v1493 = vadd.f32 %v1489, %v1491
        %v1494 = vadd.f32 %v1490, %v1492
        %s1495 = scalar_lea.vmem %s318, 192 [#allocation7]
        %1496 = vst [vmem:[%s1495] sm:$0xff] %v1493
        %1497 = vst [vmem:[%s1495 + $0x8] sm:$0xff] %v1494
        %v1498 = vadd.f32 %v1308, %v735
        %v1499 = vadd.f32 %v1309, %v735
        %v1500 = vmul.f32 %v1498, 0.5
        %v1501 = vmul.f32 %v1499, 0.5
        %v1502 = vmul.f32 %v1498, 0.044715
        %v1503 = vmul.f32 %v1499, 0.044715
        %v1504 = vmul.f32 %v1502, %v1498
        %v1505 = vmul.f32 %v1503, %v1499
        %v1506 = vmul.f32 %v1504, %v1498
        %v1507 = vmul.f32 %v1505, %v1499
        %v1508 = vadd.f32 %v1498, %v1506
        %v1509 = vadd.f32 %v1499, %v1507
        %v1510 = vmul.f32 %v1508, 0.7978846
        %v1511 = vmul.f32 %v1509, 0.7978846
        %v1512 = vtanh.pop %v1510
        %v1513 = vtanh.pop %v1511
        %v1514 = vadd.f32 %v1512, 1.0
        %v1515 = vadd.f32 %v1513, 1.0
        %v1516 = vmul.f32 %v1500, %v1514
        %v1517 = vmul.f32 %v1501, %v1515
        %v1518 = vmul.f32 %v1516, %v758
        %v1519 = vmul.f32 %v1517, %v758
        %v1520 = vadd.f32 %v1518, %v763
        %v1521 = vadd.f32 %v1519, %v763
        %v1522 = vld [vmem:[%s1220] sm:$0xff]
        %v1523 = vld [vmem:[%s1220 + $0x8] sm:$0xff]
        %v1524 = vadd.f32 %v1520, %v1522
        %v1525 = vadd.f32 %v1521, %v1523
        %s1526 = scalar_lea.vmem %s318, 208 [#allocation7]
        %1527 = vst [vmem:[%s1526] sm:$0xff] %v1524
        %1528 = vst [vmem:[%s1526 + $0x8] sm:$0xff] %v1525
        %v1529 = vadd.f32 %v1343, %v735
        %v1530 = vadd.f32 %v1344, %v735
        %v1531 = vmul.f32 %v1529, 0.5
        %v1532 = vmul.f32 %v1530, 0.5
        %v1533 = vmul.f32 %v1529, 0.044715
        %v1534 = vmul.f32 %v1530, 0.044715
        %v1535 = vmul.f32 %v1533, %v1529
        %v1536 = vmul.f32 %v1534, %v1530
        %v1537 = vmul.f32 %v1535, %v1529
        %v1538 = vmul.f32 %v1536, %v1530
        %v1539 = vadd.f32 %v1529, %v1537
        %v1540 = vadd.f32 %v1530, %v1538
        %v1541 = vmul.f32 %v1539, 0.7978846
        %v1542 = vmul.f32 %v1540, 0.7978846
        %v1543 = vtanh.pop %v1541
        %v1544 = vtanh.pop %v1542
        %v1545 = vadd.f32 %v1543, 1.0
        %v1546 = vadd.f32 %v1544, 1.0
        %v1547 = vmul.f32 %v1531, %v1545
        %v1548 = vmul.f32 %v1532, %v1546
        %v1549 = vmul.f32 %v1547, %v758
        %v1550 = vmul.f32 %v1548, %v758
        %v1551 = vadd.f32 %v1549, %v763
        %v1552 = vadd.f32 %v1550, %v763
        %v1553 = vld [vmem:[%s1265] sm:$0xff]
        %v1554 = vld [vmem:[%s1265 + $0x8] sm:$0xff]
        %v1555 = vadd.f32 %v1551, %v1553
        %v1556 = vadd.f32 %v1552, %v1554
        %s1557 = scalar_lea.vmem %s318, 224 [#allocation7]
        %1558 = vst [vmem:[%s1557] sm:$0xff] %v1555
        %1559 = vst [vmem:[%s1557 + $0x8] sm:$0xff] %v1556
        %v1560 = vadd.f32 %v1339, %v735
        %v1561 = vadd.f32 %v1340, %v735
        %v1562 = vmul.f32 %v1560, 0.5
        %v1563 = vmul.f32 %v1561, 0.5
        %v1564 = vmul.f32 %v1560, 0.044715
        %v1565 = vmul.f32 %v1561, 0.044715
        %v1566 = vmul.f32 %v1564, %v1560
        %v1567 = vmul.f32 %v1565, %v1561
        %v1568 = vmul.f32 %v1566, %v1560
        %v1569 = vmul.f32 %v1567, %v1561
        %v1570 = vadd.f32 %v1560, %v1568
        %v1571 = vadd.f32 %v1561, %v1569
        %v1572 = vmul.f32 %v1570, 0.7978846
        %v1573 = vmul.f32 %v1571, 0.7978846
        %v1574 = vtanh.pop %v1572
        %v1575 = vtanh.pop %v1573
        %v1576 = vadd.f32 %v1574, 1.0
        %v1577 = vadd.f32 %v1575, 1.0
        %v1578 = vmul.f32 %v1562, %v1576
        %v1579 = vmul.f32 %v1563, %v1577
        %v1580 = vmul.f32 %v1578, %v758
        %v1581 = vmul.f32 %v1579, %v758
        %v1582 = vadd.f32 %v1580, %v763
        %v1583 = vadd.f32 %v1581, %v763
        %v1584 = vld [vmem:[%s1310] sm:$0xff]
        %v1585 = vld [vmem:[%s1310 + $0x8] sm:$0xff]
        %v1586 = vadd.f32 %v1582, %v1584
        %v1587 = vadd.f32 %v1583, %v1585
        %s1588 = scalar_lea.vmem %s318, 240 [#allocation7]
        %1589 = vst [vmem:[%s1588] sm:$0xff] %v1586
        %1590 = vst [vmem:[%s1588 + $0x8] sm:$0xff] %v1587
        %s1591 = sand.u32 %s177, 1
        %s1592 = scalar_lea.sflag [#allocation4], %s1591
        %s1593 = sand.u32 %s177, 1
        %s1594 = smul.addr %s1593, 256
        %s1595 = scalar_lea.vmem [#allocation7], %s1594
        // Predicated region
        $region49: #{tpu_custom_call.1} parent=39 // pred_check
          %p1596 = pneg %p187
        $region50: #{tpu_custom_call.1} parent=39 // pred_check_branch
          %1598 = sbr.rel (%p1596) target = $region52
        $region51: #{tpu_custom_call.1} parent=39 // pred_region
          %1600 = vsyncadd %s1592, 0
          %s1601 = smul.addr %s27, 32
          %s1602 = sadd.s32 %s28, %s1601
          %s1603 = smul.addr %s1602, 8
          %s1604 = scalar_lea.hbm %s5, %s1603
          %s1605 = sshll.u32 %s1595, 4
          %s1606 = int_to_ptr.vmem [resolvable:$true] %s1605
          %s1607 = sshll.u32 %s1604, 4
          %s1608 = int_to_ptr.hbm [resolvable:$true] %s1607
          %1613 = dma.vmem_to_hbm [thread:$0]  %s1606, 4096, %s1608, %s1592, 128, 128, 8
        $region52: #{tpu_custom_call.1} parent=39 // pred_fallthru
          _
      $region40: #{tpu_custom_call.1} parent=5 // pred_fallthru
        _
      %p1614 = scmp.le.s32.totalorder 2, %s18
      // Predicated region
      $region53: #{tpu_custom_call.1} parent=5 // pred_check
        %p1615 = pneg %p1614
      $region54: #{tpu_custom_call.1} parent=5 // pred_check_branch
        %1617 = sbr.rel (%p1615) target = $region56
      $region55: #{tpu_custom_call.1} parent=5 // pred_region
        %s1618 = ssub.s32 %s18, 2
        // Predicated region
        $region57: #{tpu_custom_call.1} parent=55 // pred_check
          %p1619 = pneg %p193
        $region58: #{tpu_custom_call.1} parent=55 // pred_check_branch
          %1621 = sbr.rel (%p1619) target = $region60
        $region59: #{tpu_custom_call.1} parent=55 // pred_region
          %s1622 = sand.u32 %s178, 1
          %s1623 = scalar_lea.sflag [#allocation4], %s1622
          %s1624 = sand.u32 %s178, 1
          %s1625 = smul.addr %s1624, 256
          %s1626 = scalar_lea.vmem [#allocation7], %s1625
          %1628 = dma.done %s1623, 4096
        $region60: #{tpu_custom_call.1} parent=55 // pred_fallthru
          _
      $region56: #{tpu_custom_call.1} parent=5 // pred_fallthru
        _
    $region6: #{tpu_custom_call.1} parent=1 // loop_footer
      %s22 = sadd.s32 1, %s18
    $region7: #{tpu_custom_call.1} parent=1 // loop_footer_branch
      %17 = sbr.rel target = $region3
    $region8: #{tpu_custom_call.1} parent=1 // loop_exit
      _
    %1629 = vsyncpa [#allocation3], 1
    %s1630 = scalar_lea.sflag [#allocation3], 1
    %1631 = vsyncpa %s1630, 1
    %1632 = vsyncpa [#allocation6], 1
    %1633 = vsyncpa [#allocation4], 1
    %s1634 = scalar_lea.sflag [#allocation4], 1
    %1635 = vsyncpa %s1634, 1

</llo_original>
